<compile_context>
chip_gen: v7x
topology: tpu7x:2x2x1
jax: 0.10.0
libtpu: 0.0.40
codegen_flags: <defaults>
</compile_context>

<pallas_src>
import functools

import jax
import jax.numpy as jnp
import numpy as np
from jax import lax
from jax.experimental import pallas as pl
from jax.experimental.pallas import tpu as pltpu


def _round_up(x, m):
    return ((x + m - 1) // m) * m


def _cdiv(a, b):
    return -(-a // b)


def _vmem_capacity_bytes():
    try:
        info = pltpu.get_tpu_info()
        cap = getattr(info, "vmem_capacity_bytes", None)
        if cap:
            return int(cap)
    except Exception:
        pass
    return 64 * 2**20  # conservative floor (v7x)


def _vmem_estimate(tile_m, tile_n, c, k):
    x_buf = 2 * tile_m * c * 4             # resident x tile (double-buffered)
    y_buf = 2 * c * tile_n * 4             # streamed yn^T tile (double-buffered)
    out_buf = 2 * 2 * k * tile_m * 4       # vals + idx output blocks
    scratch = 2 * tile_m * k * 4           # running top-k (vals f32 + idx i32)
    temps = 4 * tile_m * tile_n * 4        # sim / work / cand live copies
    return x_buf + y_buf + out_buf + scratch + temps


def _sparse_sim_kernel(xn_ref, ynt_ref, vals_ref, idx_ref, topv_ref, topi_ref,
                       *, tau, k, n_y, tile_n, mask_pad):
    # xn_ref : [tile_m, C]   pre-normalized feat_x rows (constant across j)
    # ynt_ref: [C, tile_n]   pre-normalized, pre-transposed feat_y slab
    # vals_ref/idx_ref: [1, k, tile_m] lane-dense output blocks (written once)
    # topv_ref/topi_ref: [tile_m, k] running top-k scratch (persists across j)
    j = pl.program_id(1)

    @pl.when(j == 0)
    def _():
        topv_ref[...] = jnp.full_like(topv_ref, -jnp.inf)
        topi_ref[...] = jnp.zeros_like(topi_ref)

    xn = xn_ref[...]
    ynt = ynt_ref[...]

    # [tile_m, tile_n] similarity tile; standard contraction -> no RHS transpose.
    sim = lax.dot_general(
        xn, ynt, (((1,), (0,)), ((), ())),
        preferred_element_type=jnp.float32) * (1.0 / tau)

    neg_inf = jnp.float32(-jnp.inf)
    big = jnp.int32(2147483647)

    # Global column ids for this Ny tile as a single [1, tile_n] row
    # (broadcast along sublanes inside the k-loop).
    col_ids = lax.broadcasted_iota(jnp.int32, (1, tile_n), 1) + j * tile_n

    if mask_pad:
        # Only the last Ny tile contains padded columns; the predicate is a
        # no-op for earlier tiles, so applying it unconditionally is cheap.
        sim = jnp.where(col_ids < n_y, sim, neg_inf)

    # --- local top-k of this Ny tile (k is small & static -> unrolled) ----
    work = sim
    loc_v = []
    loc_i = []
    for _ in range(k):
        m = jnp.max(work, axis=-1, keepdims=True)            # [tm, 1]
        cand = jnp.where(work == m, col_ids, big)             # [tm, tile_n]
        idx = jnp.min(cand, axis=-1, keepdims=True)           # [tm, 1] lowest-index tie-break
        loc_v.append(m)
        loc_i.append(idx)
        work = jnp.where(cand == idx, neg_inf, work)
    loc_v = jnp.concatenate(loc_v, axis=-1)                    # [tm, k]
    loc_i = jnp.concatenate(loc_i, axis=-1)

    # --- merge into the running top-k (2k-wide, cheap) --------------------
    comb_v = jnp.concatenate([topv_ref[...], loc_v], axis=-1)  # [tm, 2k]
    comb_i = jnp.concatenate([topi_ref[...], loc_i], axis=-1)
    work2 = comb_v
    new_v = []
    new_i = []
    for _ in range(k):
        m = jnp.max(work2, axis=-1, keepdims=True)
        cand = jnp.where(work2 == m, comb_i, big)
        idx = jnp.min(cand, axis=-1, keepdims=True)
        new_v.append(m)
        new_i.append(idx)
        work2 = jnp.where(cand == idx, neg_inf, work2)
    run_v = jnp.concatenate(new_v, axis=-1)                    # [tm, k]
    run_i = jnp.concatenate(new_i, axis=-1)
    topv_ref[...] = run_v
    topi_ref[...] = run_i

    # --- finalize: softmax over the k kept values + lane-dense store ------
    @pl.when(j == pl.num_programs(1) - 1)
    def _():
        ti = jnp.clip(run_i, 0, n_y - 1)                       # torch.clamp parity
        maxes = jnp.max(run_v, axis=-1, keepdims=True)
        e = jnp.exp(run_v - maxes)
        s = jnp.sum(e, axis=-1, keepdims=True)
        sm = e / s
        vals_ref[0] = sm.T                                     # [k, tile_m]
        idx_ref[0] = ti.T


def sparse_similarity(feat_x, feat_y, *, tau=0.05, k_neighbors=10,
                      tile_m=128, tile_n=512):
    """feat_x: [1, Nx, C], feat_y: [1, Ny, C].

    Returns (rows, cols, values): COO triplets of the sparse [Nx, Ny]
    similarity matrix, in coalesced (row-major, col-sorted) order.
    """
    assert feat_x.ndim == 3 and feat_x.shape[0] == 1
    assert feat_y.ndim == 3 and feat_y.shape[0] == 1
    x = feat_x[0].astype(jnp.float32)
    y = feat_y[0].astype(jnp.float32)
    n_x, c = x.shape
    n_y, c_y = y.shape
    assert c == c_y
    k = int(k_neighbors)
    assert k <= n_y, "k_neighbors must not exceed Ny"

    # F.normalize(p=2, dim=-1, eps=1e-12), hoisted out of the kernel and done
    # once in plain XLA (same formula as the reference to avoid rounding flips).
    xn = x / jnp.maximum(jnp.linalg.norm(x, axis=-1, keepdims=True), 1e-12)
    yn = y / jnp.maximum(jnp.linalg.norm(y, axis=-1, keepdims=True), 1e-12)
    yn_t = yn.T  # [C, Ny] — pre-transposed so the kernel never transposes RHS

    # ---------------- tile sizing ----------------
    tile_m = max(8, _round_up(min(max(tile_m, 8), _round_up(n_x, 8)), 8))
    # v7x: keep the "parallel" Nx axis >= 2 tiles so both TensorCores get work.
    if _cdiv(n_x, tile_m) < 2 and n_x > 8:
        tile_m = max(8, _round_up(_cdiv(n_x, 2), 8))
    tile_n = max(128, _round_up(min(max(tile_n, 128), _round_up(n_y, 128)), 128))

    vmem_cap = int(0.7 * _vmem_capacity_bytes())
    while tile_n > 128 and _vmem_estimate(tile_m, tile_n, c, k) > vmem_cap:
        tile_n //= 2
    while tile_m > 8 and _vmem_estimate(tile_m, tile_n, c, k) > vmem_cap:
        tile_m = max(8, _round_up(tile_m // 2, 8))
    assert k <= tile_n, "k_neighbors must not exceed the Ny tile size"

    grid_m = _cdiv(n_x, tile_m)
    grid_n = _cdiv(n_y, tile_n)
    n_x_pad = grid_m * tile_m
    n_y_pad = grid_n * tile_n

    if n_x_pad != n_x:
        xn = jnp.pad(xn, ((0, n_x_pad - n_x), (0, 0)))   # zero rows -> discarded later
    if n_y_pad != n_y:
        yn_t = jnp.pad(yn_t, ((0, 0), (0, n_y_pad - n_y)))  # masked to -inf in-kernel

    kernel = functools.partial(
        _sparse_sim_kernel, tau=tau, k=k, n_y=n_y, tile_n=tile_n,
        mask_pad=(n_y_pad != n_y))

    vmem_est = _vmem_estimate(tile_m, tile_n, c, k)
    vmem_limit = int(min(max(2 * vmem_est, 16 * 2**20), vmem_cap))

    vals_t, idx_t = pl.pallas_call(
        kernel,
        out_shape=(
            jax.ShapeDtypeStruct((grid_m, k, tile_m), jnp.float32),
            jax.ShapeDtypeStruct((grid_m, k, tile_m), jnp.int32),
        ),
        grid_spec=pltpu.PrefetchScalarGridSpec(
            num_scalar_prefetch=0,
            grid=(grid_m, grid_n),
            in_specs=[
                # chunk of normalized feat_x rows — constant across the Ny axis
                pl.BlockSpec((tile_m, c), lambda i, j: (i, 0)),
                # streamed [C, tile_n] slab of normalized, transposed feat_y
                pl.BlockSpec((c, tile_n), lambda i, j: (0, j)),
            ],
            out_specs=[
                pl.BlockSpec((1, k, tile_m), lambda i, j: (i, 0, 0)),
                pl.BlockSpec((1, k, tile_m), lambda i, j: (i, 0, 0)),
            ],
            scratch_shapes=[
                pltpu.VMEM((tile_m, k), jnp.float32),   # running top-k values
                pltpu.VMEM((tile_m, k), jnp.int32),     # running top-k indices
            ],
        ),
        compiler_params=pltpu.CompilerParams(
            dimension_semantics=("parallel", "arbitrary"),
            vmem_limit_bytes=vmem_limit),
    )(xn, yn_t)

    # Back to row-major [Nx, k] and drop padded rows.
    vals = jnp.transpose(vals_t, (0, 2, 1)).reshape(n_x_pad, k)[:n_x]
    idxs = jnp.transpose(idx_t, (0, 2, 1)).reshape(n_x_pad, k)[:n_x]

    # Glue: build COO triplets and "coalesce" (sort each row's entries by col;
    # top-k indices within a row are distinct so there is nothing to merge).
    order = jnp.argsort(idxs, axis=1)
    cols = jnp.take_along_axis(idxs, order, axis=1).reshape(-1)
    values = jnp.take_along_axis(vals, order, axis=1).reshape(-1)
    rows = jnp.repeat(jnp.arange(n_x, dtype=jnp.int32), k)
    # TODO(synk): hard=True path (_convert_to_hard_assignment / scatter_max
    # straight-through estimator) not implemented; default hard=False.
    return rows, cols, values


def _reference(feat_x, feat_y, tau, k):
    """Pure-JAX reference mirroring the PyTorch soft path."""
    x = feat_x[0]
    y = feat_y[0]
    xn = x / jnp.maximum(jnp.linalg.norm(x, axis=-1, keepdims=True), 1e-12)
    yn = y / jnp.maximum(jnp.linalg.norm(y, axis=-1, keepdims=True), 1e-12)
    sim = (xn @ yn.T) / tau
    tv, ti = jax.lax.top_k(sim, k)
    tv = jax.nn.softmax(tv, axis=-1)
    order = jnp.argsort(ti, axis=1)
    cols = jnp.take_along_axis(ti, order, axis=1).reshape(-1)
    vals = jnp.take_along_axis(tv, order, axis=1).reshape(-1)
    rows = jnp.repeat(jnp.arange(x.shape[0], dtype=jnp.int32), k)
    return rows, cols, vals


if __name__ == "__main__":
    key = jax.random.PRNGKey(0)
    kx, ky = jax.random.split(key)
    # Small but non-trivial: Nx tile splits in two (v7x 2-TC parallel axis),
    # Ny streams over multiple tiles with padding in the last one.
    NX, NY, C = 96, 320, 32
    K, TAU = 10, 0.05

    feat_x = jax.random.normal(kx, (1, NX, C), dtype=jnp.float32)
    feat_y = jax.random.normal(ky, (1, NY, C), dtype=jnp.float32)

    rows, cols, values = sparse_similarity(
        feat_x, feat_y, tau=TAU, k_neighbors=K, tile_m=128, tile_n=128)
    jax.block_until_ready((rows, cols, values))

    r_rows, r_cols, r_vals = _reference(feat_x, feat_y, TAU, K)
    np.testing.assert_array_equal(np.asarray(rows), np.asarray(r_rows))
    np.testing.assert_array_equal(np.asarray(cols), np.asarray(r_cols))
    np.testing.assert_allclose(np.asarray(values), np.asarray(r_vals),
                               rtol=1e-5, atol=1e-6)

    print("KERNEL_OK")
</pallas_src>

<mosaic_0001>
module attributes {stable_mosaic.version = 11 : i64} {
  func.func @_sparse_sim_kernel(%arg0: i32, %arg1: i32, %arg2: memref<48x32xf32, #tpu.memory_space<vmem>>, %arg3: memref<32x128xf32, #tpu.memory_space<vmem>>, %arg4: memref<1x10x48xf32, #tpu.memory_space<vmem>>, %arg5: memref<1x10x48xi32, #tpu.memory_space<vmem>>, %arg6: memref<48x10xf32, #tpu.memory_space<vmem>>, %arg7: memref<48x10xi32, #tpu.memory_space<vmem>>) attributes {dimension_semantics = [#tpu.dimension_semantics<parallel>, #tpu.dimension_semantics<arbitrary>], iteration_bounds = array<i64: 2, 3>, scalar_prefetch = 0 : i64, scratch_operands = 2 : i64, tpu.core_type = #tpu.core_type<tc>, window_params = [{transform_indices = @transform_0, window_bounds = array<i64: 48, 32>}, {transform_indices = @transform_1, window_bounds = array<i64: 32, 128>}, {transform_indices = @transform_2, window_bounds = array<i64: 1, 10, 48>}, {transform_indices = @transform_3, window_bounds = array<i64: 1, 10, 48>}]} {
    %c0_i32 = arith.constant 0 : i32
    %0 = arith.cmpi eq, %arg1, %c0_i32 : i32
    %1 = arith.extui %0 : i1 to i32
    %c0_i32_0 = arith.constant 0 : i32
    %2 = arith.cmpi ne, %1, %c0_i32_0 : i32
    scf.if %2 {
      %cst_92 = arith.constant 0xFF800000 : f32
      %283 = vector.broadcast %cst_92 : f32 to vector<48x10xf32>
      %c0_93 = arith.constant 0 : index
      %c0_94 = arith.constant 0 : index
      %284 = vector.load %arg6[%c0_93, %c0_94] : memref<48x10xf32, #tpu.memory_space<vmem>>, vector<48x10xf32>
      tpu.vector_store %arg6[%c0_93, %c0_94], %283 {strides = array<i32>} : memref<48x10xf32, #tpu.memory_space<vmem>>, vector<48x10xf32>,
      %c0_i32_95 = arith.constant 0 : i32
      %285 = vector.broadcast %c0_i32_95 : i32 to vector<48x10xi32>
      %c0_96 = arith.constant 0 : index
      %c0_97 = arith.constant 0 : index
      %286 = vector.load %arg7[%c0_96, %c0_97] : memref<48x10xi32, #tpu.memory_space<vmem>>, vector<48x10xi32>
      tpu.vector_store %arg7[%c0_96, %c0_97], %285 {strides = array<i32>} : memref<48x10xi32, #tpu.memory_space<vmem>>, vector<48x10xi32>,
    } else {
    }
    %c0 = arith.constant 0 : index
    %c0_1 = arith.constant 0 : index
    %3 = vector.load %arg2[%c0, %c0_1] : memref<48x32xf32, #tpu.memory_space<vmem>>, vector<48x32xf32>
    %c0_2 = arith.constant 0 : index
    %c0_3 = arith.constant 0 : index
    %4 = vector.load %arg3[%c0_2, %c0_3] : memref<32x128xf32, #tpu.memory_space<vmem>>, vector<32x128xf32>
    %cst = arith.constant dense<0.000000e+00> : vector<48x128xf32>
    %5 = tpu.matmul %3, %4, %cst {dimension_numbers = #tpu.dot_dimension_numbers<[1], [0], [0], [1], [0, 0, 1, 1], [], []>} : vector<48x32xf32>, vector<32x128xf32>, vector<48x128xf32> -> vector<48x128xf32>
    %cst_4 = arith.constant 2.000000e+01 : f32
    %6 = vector.broadcast %cst_4 : f32 to vector<48x128xf32>
    %7 = arith.mulf %5, %6 : vector<48x128xf32>
    %8 = tpu.iota {dimensions = array<i32: 1>} : vector<1x128xi32>
    %c128_i32 = arith.constant 128 : i32
    %9 = arith.muli %arg1, %c128_i32 : i32
    %10 = vector.broadcast %9 : i32 to vector<1x128xi32>
    %11 = arith.addi %8, %10 : vector<1x128xi32>
    %c320_i32 = arith.constant 320 : i32
    %12 = vector.broadcast %c320_i32 : i32 to vector<1x128xi32>
    %13 = arith.cmpi slt, %11, %12 : vector<1x128xi32>
    %cst_5 = arith.constant 0xFF800000 : f32
    %14 = vector.shape_cast %13 : vector<1x128xi1> to vector<1x128xi1>
    %15 = vector.broadcast %14 : vector<1x128xi1> to vector<48x128xi1>
    %16 = vector.broadcast %cst_5 : f32 to vector<48x128xf32>
    %17 = arith.select %15, %7, %16 : vector<48x128xi1>, vector<48x128xf32>
    %cst_6 = arith.constant dense<0xFF800000> : vector<48xf32>
    %18 = vector.multi_reduction <maximumf>, %17, %cst_6 [1] : vector<48x128xf32> to vector<48xf32>
    %19 = vector.shape_cast %18 : vector<48xf32> to vector<48x1xf32>
    %20 = vector.broadcast %19 : vector<48x1xf32> to vector<48x128xf32>
    %21 = arith.cmpf oeq, %17, %20 : vector<48x128xf32>
    %c2147483647_i32 = arith.constant 2147483647 : i32
    %22 = vector.shape_cast %11 : vector<1x128xi32> to vector<1x128xi32>
    %23 = vector.broadcast %22 : vector<1x128xi32> to vector<48x128xi32>
    %24 = vector.broadcast %c2147483647_i32 : i32 to vector<48x128xi32>
    %25 = arith.select %21, %23, %24 : vector<48x128xi1>, vector<48x128xi32>
    %cst_7 = arith.constant dense<2147483647> : vector<48xi32>
    %26 = vector.multi_reduction <minsi>, %25, %cst_7 [1] : vector<48x128xi32> to vector<48xi32>
    %27 = vector.shape_cast %26 : vector<48xi32> to vector<48x1xi32>
    %28 = vector.broadcast %27 : vector<48x1xi32> to vector<48x128xi32>
    %29 = arith.cmpi eq, %25, %28 : vector<48x128xi32>
    %cst_8 = arith.constant 0xFF800000 : f32
    %30 = vector.broadcast %cst_8 : f32 to vector<48x128xf32>
    %31 = arith.select %29, %30, %17 : vector<48x128xi1>, vector<48x128xf32>
    %cst_9 = arith.constant dense<0xFF800000> : vector<48xf32>
    %32 = vector.multi_reduction <maximumf>, %31, %cst_9 [1] : vector<48x128xf32> to vector<48xf32>
    %33 = vector.shape_cast %32 : vector<48xf32> to vector<48x1xf32>
    %34 = vector.broadcast %33 : vector<48x1xf32> to vector<48x128xf32>
    %35 = arith.cmpf oeq, %31, %34 : vector<48x128xf32>
    %c2147483647_i32_10 = arith.constant 2147483647 : i32
    %36 = vector.shape_cast %11 : vector<1x128xi32> to vector<1x128xi32>
    %37 = vector.broadcast %36 : vector<1x128xi32> to vector<48x128xi32>
    %38 = vector.broadcast %c2147483647_i32_10 : i32 to vector<48x128xi32>
    %39 = arith.select %35, %37, %38 : vector<48x128xi1>, vector<48x128xi32>
    %cst_11 = arith.constant dense<2147483647> : vector<48xi32>
    %40 = vector.multi_reduction <minsi>, %39, %cst_11 [1] : vector<48x128xi32> to vector<48xi32>
    %41 = vector.shape_cast %40 : vector<48xi32> to vector<48x1xi32>
    %42 = vector.broadcast %41 : vector<48x1xi32> to vector<48x128xi32>
    %43 = arith.cmpi eq, %39, %42 : vector<48x128xi32>
    %cst_12 = arith.constant 0xFF800000 : f32
    %44 = vector.broadcast %cst_12 : f32 to vector<48x128xf32>
    %45 = arith.select %43, %44, %31 : vector<48x128xi1>, vector<48x128xf32>
    %cst_13 = arith.constant dense<0xFF800000> : vector<48xf32>
    %46 = vector.multi_reduction <maximumf>, %45, %cst_13 [1] : vector<48x128xf32> to vector<48xf32>
    %47 = vector.shape_cast %46 : vector<48xf32> to vector<48x1xf32>
    %48 = vector.broadcast %47 : vector<48x1xf32> to vector<48x128xf32>
    %49 = arith.cmpf oeq, %45, %48 : vector<48x128xf32>
    %c2147483647_i32_14 = arith.constant 2147483647 : i32
    %50 = vector.shape_cast %11 : vector<1x128xi32> to vector<1x128xi32>
    %51 = vector.broadcast %50 : vector<1x128xi32> to vector<48x128xi32>
    %52 = vector.broadcast %c2147483647_i32_14 : i32 to vector<48x128xi32>
    %53 = arith.select %49, %51, %52 : vector<48x128xi1>, vector<48x128xi32>
    %cst_15 = arith.constant dense<2147483647> : vector<48xi32>
    %54 = vector.multi_reduction <minsi>, %53, %cst_15 [1] : vector<48x128xi32> to vector<48xi32>
    %55 = vector.shape_cast %54 : vector<48xi32> to vector<48x1xi32>
    %56 = vector.broadcast %55 : vector<48x1xi32> to vector<48x128xi32>
    %57 = arith.cmpi eq, %53, %56 : vector<48x128xi32>
    %cst_16 = arith.constant 0xFF800000 : f32
    %58 = vector.broadcast %cst_16 : f32 to vector<48x128xf32>
    %59 = arith.select %57, %58, %45 : vector<48x128xi1>, vector<48x128xf32>
    %cst_17 = arith.constant dense<0xFF800000> : vector<48xf32>
    %60 = vector.multi_reduction <maximumf>, %59, %cst_17 [1] : vector<48x128xf32> to vector<48xf32>
    %61 = vector.shape_cast %60 : vector<48xf32> to vector<48x1xf32>
    %62 = vector.broadcast %61 : vector<48x1xf32> to vector<48x128xf32>
    %63 = arith.cmpf oeq, %59, %62 : vector<48x128xf32>
    %c2147483647_i32_18 = arith.constant 2147483647 : i32
    %64 = vector.shape_cast %11 : vector<1x128xi32> to vector<1x128xi32>
    %65 = vector.broadcast %64 : vector<1x128xi32> to vector<48x128xi32>
    %66 = vector.broadcast %c2147483647_i32_18 : i32 to vector<48x128xi32>
    %67 = arith.select %63, %65, %66 : vector<48x128xi1>, vector<48x128xi32>
    %cst_19 = arith.constant dense<2147483647> : vector<48xi32>
    %68 = vector.multi_reduction <minsi>, %67, %cst_19 [1] : vector<48x128xi32> to vector<48xi32>
    %69 = vector.shape_cast %68 : vector<48xi32> to vector<48x1xi32>
    %70 = vector.broadcast %69 : vector<48x1xi32> to vector<48x128xi32>
    %71 = arith.cmpi eq, %67, %70 : vector<48x128xi32>
    %cst_20 = arith.constant 0xFF800000 : f32
    %72 = vector.broadcast %cst_20 : f32 to vector<48x128xf32>
    %73 = arith.select %71, %72, %59 : vector<48x128xi1>, vector<48x128xf32>
    %cst_21 = arith.constant dense<0xFF800000> : vector<48xf32>
    %74 = vector.multi_reduction <maximumf>, %73, %cst_21 [1] : vector<48x128xf32> to vector<48xf32>
    %75 = vector.shape_cast %74 : vector<48xf32> to vector<48x1xf32>
    %76 = vector.broadcast %75 : vector<48x1xf32> to vector<48x128xf32>
    %77 = arith.cmpf oeq, %73, %76 : vector<48x128xf32>
    %c2147483647_i32_22 = arith.constant 2147483647 : i32
    %78 = vector.shape_cast %11 : vector<1x128xi32> to vector<1x128xi32>
    %79 = vector.broadcast %78 : vector<1x128xi32> to vector<48x128xi32>
    %80 = vector.broadcast %c2147483647_i32_22 : i32 to vector<48x128xi32>
    %81 = arith.select %77, %79, %80 : vector<48x128xi1>, vector<48x128xi32>
    %cst_23 = arith.constant dense<2147483647> : vector<48xi32>
    %82 = vector.multi_reduction <minsi>, %81, %cst_23 [1] : vector<48x128xi32> to vector<48xi32>
    %83 = vector.shape_cast %82 : vector<48xi32> to vector<48x1xi32>
    %84 = vector.broadcast %83 : vector<48x1xi32> to vector<48x128xi32>
    %85 = arith.cmpi eq, %81, %84 : vector<48x128xi32>
    %cst_24 = arith.constant 0xFF800000 : f32
    %86 = vector.broadcast %cst_24 : f32 to vector<48x128xf32>
    %87 = arith.select %85, %86, %73 : vector<48x128xi1>, vector<48x128xf32>
    %cst_25 = arith.constant dense<0xFF800000> : vector<48xf32>
    %88 = vector.multi_reduction <maximumf>, %87, %cst_25 [1] : vector<48x128xf32> to vector<48xf32>
    %89 = vector.shape_cast %88 : vector<48xf32> to vector<48x1xf32>
    %90 = vector.broadcast %89 : vector<48x1xf32> to vector<48x128xf32>
    %91 = arith.cmpf oeq, %87, %90 : vector<48x128xf32>
    %c2147483647_i32_26 = arith.constant 2147483647 : i32
    %92 = vector.shape_cast %11 : vector<1x128xi32> to vector<1x128xi32>
    %93 = vector.broadcast %92 : vector<1x128xi32> to vector<48x128xi32>
    %94 = vector.broadcast %c2147483647_i32_26 : i32 to vector<48x128xi32>
    %95 = arith.select %91, %93, %94 : vector<48x128xi1>, vector<48x128xi32>
    %cst_27 = arith.constant dense<2147483647> : vector<48xi32>
    %96 = vector.multi_reduction <minsi>, %95, %cst_27 [1] : vector<48x128xi32> to vector<48xi32>
    %97 = vector.shape_cast %96 : vector<48xi32> to vector<48x1xi32>
    %98 = vector.broadcast %97 : vector<48x1xi32> to vector<48x128xi32>
    %99 = arith.cmpi eq, %95, %98 : vector<48x128xi32>
    %cst_28 = arith.constant 0xFF800000 : f32
    %100 = vector.broadcast %cst_28 : f32 to vector<48x128xf32>
    %101 = arith.select %99, %100, %87 : vector<48x128xi1>, vector<48x128xf32>
    %cst_29 = arith.constant dense<0xFF800000> : vector<48xf32>
    %102 = vector.multi_reduction <maximumf>, %101, %cst_29 [1] : vector<48x128xf32> to vector<48xf32>
    %103 = vector.shape_cast %102 : vector<48xf32> to vector<48x1xf32>
    %104 = vector.broadcast %103 : vector<48x1xf32> to vector<48x128xf32>
    %105 = arith.cmpf oeq, %101, %104 : vector<48x128xf32>
    %c2147483647_i32_30 = arith.constant 2147483647 : i32
    %106 = vector.shape_cast %11 : vector<1x128xi32> to vector<1x128xi32>
    %107 = vector.broadcast %106 : vector<1x128xi32> to vector<48x128xi32>
    %108 = vector.broadcast %c2147483647_i32_30 : i32 to vector<48x128xi32>
    %109 = arith.select %105, %107, %108 : vector<48x128xi1>, vector<48x128xi32>
    %cst_31 = arith.constant dense<2147483647> : vector<48xi32>
    %110 = vector.multi_reduction <minsi>, %109, %cst_31 [1] : vector<48x128xi32> to vector<48xi32>
    %111 = vector.shape_cast %110 : vector<48xi32> to vector<48x1xi32>
    %112 = vector.broadcast %111 : vector<48x1xi32> to vector<48x128xi32>
    %113 = arith.cmpi eq, %109, %112 : vector<48x128xi32>
    %cst_32 = arith.constant 0xFF800000 : f32
    %114 = vector.broadcast %cst_32 : f32 to vector<48x128xf32>
    %115 = arith.select %113, %114, %101 : vector<48x128xi1>, vector<48x128xf32>
    %cst_33 = arith.constant dense<0xFF800000> : vector<48xf32>
    %116 = vector.multi_reduction <maximumf>, %115, %cst_33 [1] : vector<48x128xf32> to vector<48xf32>
    %117 = vector.shape_cast %116 : vector<48xf32> to vector<48x1xf32>
    %118 = vector.broadcast %117 : vector<48x1xf32> to vector<48x128xf32>
    %119 = arith.cmpf oeq, %115, %118 : vector<48x128xf32>
    %c2147483647_i32_34 = arith.constant 2147483647 : i32
    %120 = vector.shape_cast %11 : vector<1x128xi32> to vector<1x128xi32>
    %121 = vector.broadcast %120 : vector<1x128xi32> to vector<48x128xi32>
    %122 = vector.broadcast %c2147483647_i32_34 : i32 to vector<48x128xi32>
    %123 = arith.select %119, %121, %122 : vector<48x128xi1>, vector<48x128xi32>
    %cst_35 = arith.constant dense<2147483647> : vector<48xi32>
    %124 = vector.multi_reduction <minsi>, %123, %cst_35 [1] : vector<48x128xi32> to vector<48xi32>
    %125 = vector.shape_cast %124 : vector<48xi32> to vector<48x1xi32>
    %126 = vector.broadcast %125 : vector<48x1xi32> to vector<48x128xi32>
    %127 = arith.cmpi eq, %123, %126 : vector<48x128xi32>
    %cst_36 = arith.constant 0xFF800000 : f32
    %128 = vector.broadcast %cst_36 : f32 to vector<48x128xf32>
    %129 = arith.select %127, %128, %115 : vector<48x128xi1>, vector<48x128xf32>
    %cst_37 = arith.constant dense<0xFF800000> : vector<48xf32>
    %130 = vector.multi_reduction <maximumf>, %129, %cst_37 [1] : vector<48x128xf32> to vector<48xf32>
    %131 = vector.shape_cast %130 : vector<48xf32> to vector<48x1xf32>
    %132 = vector.broadcast %131 : vector<48x1xf32> to vector<48x128xf32>
    %133 = arith.cmpf oeq, %129, %132 : vector<48x128xf32>
    %c2147483647_i32_38 = arith.constant 2147483647 : i32
    %134 = vector.shape_cast %11 : vector<1x128xi32> to vector<1x128xi32>
    %135 = vector.broadcast %134 : vector<1x128xi32> to vector<48x128xi32>
    %136 = vector.broadcast %c2147483647_i32_38 : i32 to vector<48x128xi32>
    %137 = arith.select %133, %135, %136 : vector<48x128xi1>, vector<48x128xi32>
    %cst_39 = arith.constant dense<2147483647> : vector<48xi32>
    %138 = vector.multi_reduction <minsi>, %137, %cst_39 [1] : vector<48x128xi32> to vector<48xi32>
    %139 = vector.shape_cast %138 : vector<48xi32> to vector<48x1xi32>
    %140 = vector.broadcast %139 : vector<48x1xi32> to vector<48x128xi32>
    %141 = arith.cmpi eq, %137, %140 : vector<48x128xi32>
    %cst_40 = arith.constant 0xFF800000 : f32
    %142 = vector.broadcast %cst_40 : f32 to vector<48x128xf32>
    %143 = arith.select %141, %142, %129 : vector<48x128xi1>, vector<48x128xf32>
    %cst_41 = arith.constant dense<0xFF800000> : vector<48xf32>
    %144 = vector.multi_reduction <maximumf>, %143, %cst_41 [1] : vector<48x128xf32> to vector<48xf32>
    %145 = vector.shape_cast %144 : vector<48xf32> to vector<48x1xf32>
    %146 = vector.broadcast %145 : vector<48x1xf32> to vector<48x128xf32>
    %147 = arith.cmpf oeq, %143, %146 : vector<48x128xf32>
    %c2147483647_i32_42 = arith.constant 2147483647 : i32
    %148 = vector.shape_cast %11 : vector<1x128xi32> to vector<1x128xi32>
    %149 = vector.broadcast %148 : vector<1x128xi32> to vector<48x128xi32>
    %150 = vector.broadcast %c2147483647_i32_42 : i32 to vector<48x128xi32>
    %151 = arith.select %147, %149, %150 : vector<48x128xi1>, vector<48x128xi32>
    %cst_43 = arith.constant dense<2147483647> : vector<48xi32>
    %152 = vector.multi_reduction <minsi>, %151, %cst_43 [1] : vector<48x128xi32> to vector<48xi32>
    %153 = vector.shape_cast %152 : vector<48xi32> to vector<48x1xi32>
    %154 = tpu.concatenate %19, %33, %47, %61, %75, %89, %103, %117, %131, %145 in 1 : vector<48x1xf32>, vector<48x1xf32>, vector<48x1xf32>, vector<48x1xf32>, vector<48x1xf32>, vector<48x1xf32>, vector<48x1xf32>, vector<48x1xf32>, vector<48x1xf32>, vector<48x1xf32> -> vector<48x10xf32>
    %155 = tpu.concatenate %27, %41, %55, %69, %83, %97, %111, %125, %139, %153 in 1 : vector<48x1xi32>, vector<48x1xi32>, vector<48x1xi32>, vector<48x1xi32>, vector<48x1xi32>, vector<48x1xi32>, vector<48x1xi32>, vector<48x1xi32>, vector<48x1xi32>, vector<48x1xi32> -> vector<48x10xi32>
    %c0_44 = arith.constant 0 : index
    %c0_45 = arith.constant 0 : index
    %156 = vector.load %arg6[%c0_44, %c0_45] : memref<48x10xf32, #tpu.memory_space<vmem>>, vector<48x10xf32>
    %157 = tpu.concatenate %156, %154 in 1 : vector<48x10xf32>, vector<48x10xf32> -> vector<48x20xf32>
    %c0_46 = arith.constant 0 : index
    %c0_47 = arith.constant 0 : index
    %158 = vector.load %arg7[%c0_46, %c0_47] : memref<48x10xi32, #tpu.memory_space<vmem>>, vector<48x10xi32>
    %159 = tpu.concatenate %158, %155 in 1 : vector<48x10xi32>, vector<48x10xi32> -> vector<48x20xi32>
    %cst_48 = arith.constant dense<0xFF800000> : vector<48xf32>
    %160 = vector.multi_reduction <maximumf>, %157, %cst_48 [1] : vector<48x20xf32> to vector<48xf32>
    %161 = vector.shape_cast %160 : vector<48xf32> to vector<48x1xf32>
    %162 = vector.broadcast %161 : vector<48x1xf32> to vector<48x20xf32>
    %163 = arith.cmpf oeq, %157, %162 : vector<48x20xf32>
    %c2147483647_i32_49 = arith.constant 2147483647 : i32
    %164 = vector.broadcast %c2147483647_i32_49 : i32 to vector<48x20xi32>
    %165 = arith.select %163, %159, %164 : vector<48x20xi1>, vector<48x20xi32>
    %cst_50 = arith.constant dense<2147483647> : vector<48xi32>
    %166 = vector.multi_reduction <minsi>, %165, %cst_50 [1] : vector<48x20xi32> to vector<48xi32>
    %167 = vector.shape_cast %166 : vector<48xi32> to vector<48x1xi32>
    %168 = vector.broadcast %167 : vector<48x1xi32> to vector<48x20xi32>
    %169 = arith.cmpi eq, %165, %168 : vector<48x20xi32>
    %cst_51 = arith.constant 0xFF800000 : f32
    %170 = vector.broadcast %cst_51 : f32 to vector<48x20xf32>
    %171 = arith.select %169, %170, %157 : vector<48x20xi1>, vector<48x20xf32>
    %cst_52 = arith.constant dense<0xFF800000> : vector<48xf32>
    %172 = vector.multi_reduction <maximumf>, %171, %cst_52 [1] : vector<48x20xf32> to vector<48xf32>
    %173 = vector.shape_cast %172 : vector<48xf32> to vector<48x1xf32>
    %174 = vector.broadcast %173 : vector<48x1xf32> to vector<48x20xf32>
    %175 = arith.cmpf oeq, %171, %174 : vector<48x20xf32>
    %c2147483647_i32_53 = arith.constant 2147483647 : i32
    %176 = vector.broadcast %c2147483647_i32_53 : i32 to vector<48x20xi32>
    %177 = arith.select %175, %159, %176 : vector<48x20xi1>, vector<48x20xi32>
    %cst_54 = arith.constant dense<2147483647> : vector<48xi32>
    %178 = vector.multi_reduction <minsi>, %177, %cst_54 [1] : vector<48x20xi32> to vector<48xi32>
    %179 = vector.shape_cast %178 : vector<48xi32> to vector<48x1xi32>
    %180 = vector.broadcast %179 : vector<48x1xi32> to vector<48x20xi32>
    %181 = arith.cmpi eq, %177, %180 : vector<48x20xi32>
    %cst_55 = arith.constant 0xFF800000 : f32
    %182 = vector.broadcast %cst_55 : f32 to vector<48x20xf32>
    %183 = arith.select %181, %182, %171 : vector<48x20xi1>, vector<48x20xf32>
    %cst_56 = arith.constant dense<0xFF800000> : vector<48xf32>
    %184 = vector.multi_reduction <maximumf>, %183, %cst_56 [1] : vector<48x20xf32> to vector<48xf32>
    %185 = vector.shape_cast %184 : vector<48xf32> to vector<48x1xf32>
    %186 = vector.broadcast %185 : vector<48x1xf32> to vector<48x20xf32>
    %187 = arith.cmpf oeq, %183, %186 : vector<48x20xf32>
    %c2147483647_i32_57 = arith.constant 2147483647 : i32
    %188 = vector.broadcast %c2147483647_i32_57 : i32 to vector<48x20xi32>
    %189 = arith.select %187, %159, %188 : vector<48x20xi1>, vector<48x20xi32>
    %cst_58 = arith.constant dense<2147483647> : vector<48xi32>
    %190 = vector.multi_reduction <minsi>, %189, %cst_58 [1] : vector<48x20xi32> to vector<48xi32>
    %191 = vector.shape_cast %190 : vector<48xi32> to vector<48x1xi32>
    %192 = vector.broadcast %191 : vector<48x1xi32> to vector<48x20xi32>
    %193 = arith.cmpi eq, %189, %192 : vector<48x20xi32>
    %cst_59 = arith.constant 0xFF800000 : f32
    %194 = vector.broadcast %cst_59 : f32 to vector<48x20xf32>
    %195 = arith.select %193, %194, %183 : vector<48x20xi1>, vector<48x20xf32>
    %cst_60 = arith.constant dense<0xFF800000> : vector<48xf32>
    %196 = vector.multi_reduction <maximumf>, %195, %cst_60 [1] : vector<48x20xf32> to vector<48xf32>
    %197 = vector.shape_cast %196 : vector<48xf32> to vector<48x1xf32>
    %198 = vector.broadcast %197 : vector<48x1xf32> to vector<48x20xf32>
    %199 = arith.cmpf oeq, %195, %198 : vector<48x20xf32>
    %c2147483647_i32_61 = arith.constant 2147483647 : i32
    %200 = vector.broadcast %c2147483647_i32_61 : i32 to vector<48x20xi32>
    %201 = arith.select %199, %159, %200 : vector<48x20xi1>, vector<48x20xi32>
    %cst_62 = arith.constant dense<2147483647> : vector<48xi32>
    %202 = vector.multi_reduction <minsi>, %201, %cst_62 [1] : vector<48x20xi32> to vector<48xi32>
    %203 = vector.shape_cast %202 : vector<48xi32> to vector<48x1xi32>
    %204 = vector.broadcast %203 : vector<48x1xi32> to vector<48x20xi32>
    %205 = arith.cmpi eq, %201, %204 : vector<48x20xi32>
    %cst_63 = arith.constant 0xFF800000 : f32
    %206 = vector.broadcast %cst_63 : f32 to vector<48x20xf32>
    %207 = arith.select %205, %206, %195 : vector<48x20xi1>, vector<48x20xf32>
    %cst_64 = arith.constant dense<0xFF800000> : vector<48xf32>
    %208 = vector.multi_reduction <maximumf>, %207, %cst_64 [1] : vector<48x20xf32> to vector<48xf32>
    %209 = vector.shape_cast %208 : vector<48xf32> to vector<48x1xf32>
    %210 = vector.broadcast %209 : vector<48x1xf32> to vector<48x20xf32>
    %211 = arith.cmpf oeq, %207, %210 : vector<48x20xf32>
    %c2147483647_i32_65 = arith.constant 2147483647 : i32
    %212 = vector.broadcast %c2147483647_i32_65 : i32 to vector<48x20xi32>
    %213 = arith.select %211, %159, %212 : vector<48x20xi1>, vector<48x20xi32>
    %cst_66 = arith.constant dense<2147483647> : vector<48xi32>
    %214 = vector.multi_reduction <minsi>, %213, %cst_66 [1] : vector<48x20xi32> to vector<48xi32>
    %215 = vector.shape_cast %214 : vector<48xi32> to vector<48x1xi32>
    %216 = vector.broadcast %215 : vector<48x1xi32> to vector<48x20xi32>
    %217 = arith.cmpi eq, %213, %216 : vector<48x20xi32>
    %cst_67 = arith.constant 0xFF800000 : f32
    %218 = vector.broadcast %cst_67 : f32 to vector<48x20xf32>
    %219 = arith.select %217, %218, %207 : vector<48x20xi1>, vector<48x20xf32>
    %cst_68 = arith.constant dense<0xFF800000> : vector<48xf32>
    %220 = vector.multi_reduction <maximumf>, %219, %cst_68 [1] : vector<48x20xf32> to vector<48xf32>
    %221 = vector.shape_cast %220 : vector<48xf32> to vector<48x1xf32>
    %222 = vector.broadcast %221 : vector<48x1xf32> to vector<48x20xf32>
    %223 = arith.cmpf oeq, %219, %222 : vector<48x20xf32>
    %c2147483647_i32_69 = arith.constant 2147483647 : i32
    %224 = vector.broadcast %c2147483647_i32_69 : i32 to vector<48x20xi32>
    %225 = arith.select %223, %159, %224 : vector<48x20xi1>, vector<48x20xi32>
    %cst_70 = arith.constant dense<2147483647> : vector<48xi32>
    %226 = vector.multi_reduction <minsi>, %225, %cst_70 [1] : vector<48x20xi32> to vector<48xi32>
    %227 = vector.shape_cast %226 : vector<48xi32> to vector<48x1xi32>
    %228 = vector.broadcast %227 : vector<48x1xi32> to vector<48x20xi32>
    %229 = arith.cmpi eq, %225, %228 : vector<48x20xi32>
    %cst_71 = arith.constant 0xFF800000 : f32
    %230 = vector.broadcast %cst_71 : f32 to vector<48x20xf32>
    %231 = arith.select %229, %230, %219 : vector<48x20xi1>, vector<48x20xf32>
    %cst_72 = arith.constant dense<0xFF800000> : vector<48xf32>
    %232 = vector.multi_reduction <maximumf>, %231, %cst_72 [1] : vector<48x20xf32> to vector<48xf32>
    %233 = vector.shape_cast %232 : vector<48xf32> to vector<48x1xf32>
    %234 = vector.broadcast %233 : vector<48x1xf32> to vector<48x20xf32>
    %235 = arith.cmpf oeq, %231, %234 : vector<48x20xf32>
    %c2147483647_i32_73 = arith.constant 2147483647 : i32
    %236 = vector.broadcast %c2147483647_i32_73 : i32 to vector<48x20xi32>
    %237 = arith.select %235, %159, %236 : vector<48x20xi1>, vector<48x20xi32>
    %cst_74 = arith.constant dense<2147483647> : vector<48xi32>
    %238 = vector.multi_reduction <minsi>, %237, %cst_74 [1] : vector<48x20xi32> to vector<48xi32>
    %239 = vector.shape_cast %238 : vector<48xi32> to vector<48x1xi32>
    %240 = vector.broadcast %239 : vector<48x1xi32> to vector<48x20xi32>
    %241 = arith.cmpi eq, %237, %240 : vector<48x20xi32>
    %cst_75 = arith.constant 0xFF800000 : f32
    %242 = vector.broadcast %cst_75 : f32 to vector<48x20xf32>
    %243 = arith.select %241, %242, %231 : vector<48x20xi1>, vector<48x20xf32>
    %cst_76 = arith.constant dense<0xFF800000> : vector<48xf32>
    %244 = vector.multi_reduction <maximumf>, %243, %cst_76 [1] : vector<48x20xf32> to vector<48xf32>
    %245 = vector.shape_cast %244 : vector<48xf32> to vector<48x1xf32>
    %246 = vector.broadcast %245 : vector<48x1xf32> to vector<48x20xf32>
    %247 = arith.cmpf oeq, %243, %246 : vector<48x20xf32>
    %c2147483647_i32_77 = arith.constant 2147483647 : i32
    %248 = vector.broadcast %c2147483647_i32_77 : i32 to vector<48x20xi32>
    %249 = arith.select %247, %159, %248 : vector<48x20xi1>, vector<48x20xi32>
    %cst_78 = arith.constant dense<2147483647> : vector<48xi32>
    %250 = vector.multi_reduction <minsi>, %249, %cst_78 [1] : vector<48x20xi32> to vector<48xi32>
    %251 = vector.shape_cast %250 : vector<48xi32> to vector<48x1xi32>
    %252 = vector.broadcast %251 : vector<48x1xi32> to vector<48x20xi32>
    %253 = arith.cmpi eq, %249, %252 : vector<48x20xi32>
    %cst_79 = arith.constant 0xFF800000 : f32
    %254 = vector.broadcast %cst_79 : f32 to vector<48x20xf32>
    %255 = arith.select %253, %254, %243 : vector<48x20xi1>, vector<48x20xf32>
    %cst_80 = arith.constant dense<0xFF800000> : vector<48xf32>
    %256 = vector.multi_reduction <maximumf>, %255, %cst_80 [1] : vector<48x20xf32> to vector<48xf32>
    %257 = vector.shape_cast %256 : vector<48xf32> to vector<48x1xf32>
    %258 = vector.broadcast %257 : vector<48x1xf32> to vector<48x20xf32>
    %259 = arith.cmpf oeq, %255, %258 : vector<48x20xf32>
    %c2147483647_i32_81 = arith.constant 2147483647 : i32
    %260 = vector.broadcast %c2147483647_i32_81 : i32 to vector<48x20xi32>
    %261 = arith.select %259, %159, %260 : vector<48x20xi1>, vector<48x20xi32>
    %cst_82 = arith.constant dense<2147483647> : vector<48xi32>
    %262 = vector.multi_reduction <minsi>, %261, %cst_82 [1] : vector<48x20xi32> to vector<48xi32>
    %263 = vector.shape_cast %262 : vector<48xi32> to vector<48x1xi32>
    %264 = vector.broadcast %263 : vector<48x1xi32> to vector<48x20xi32>
    %265 = arith.cmpi eq, %261, %264 : vector<48x20xi32>
    %cst_83 = arith.constant 0xFF800000 : f32
    %266 = vector.broadcast %cst_83 : f32 to vector<48x20xf32>
    %267 = arith.select %265, %266, %255 : vector<48x20xi1>, vector<48x20xf32>
    %cst_84 = arith.constant dense<0xFF800000> : vector<48xf32>
    %268 = vector.multi_reduction <maximumf>, %267, %cst_84 [1] : vector<48x20xf32> to vector<48xf32>
    %269 = vector.shape_cast %268 : vector<48xf32> to vector<48x1xf32>
    %270 = vector.broadcast %269 : vector<48x1xf32> to vector<48x20xf32>
    %271 = arith.cmpf oeq, %267, %270 : vector<48x20xf32>
    %c2147483647_i32_85 = arith.constant 2147483647 : i32
    %272 = vector.broadcast %c2147483647_i32_85 : i32 to vector<48x20xi32>
    %273 = arith.select %271, %159, %272 : vector<48x20xi1>, vector<48x20xi32>
    %cst_86 = arith.constant dense<2147483647> : vector<48xi32>
    %274 = vector.multi_reduction <minsi>, %273, %cst_86 [1] : vector<48x20xi32> to vector<48xi32>
    %275 = vector.shape_cast %274 : vector<48xi32> to vector<48x1xi32>
    %276 = tpu.concatenate %161, %173, %185, %197, %209, %221, %233, %245, %257, %269 in 1 : vector<48x1xf32>, vector<48x1xf32>, vector<48x1xf32>, vector<48x1xf32>, vector<48x1xf32>, vector<48x1xf32>, vector<48x1xf32>, vector<48x1xf32>, vector<48x1xf32>, vector<48x1xf32> -> vector<48x10xf32>
    %277 = tpu.concatenate %167, %179, %191, %203, %215, %227, %239, %251, %263, %275 in 1 : vector<48x1xi32>, vector<48x1xi32>, vector<48x1xi32>, vector<48x1xi32>, vector<48x1xi32>, vector<48x1xi32>, vector<48x1xi32>, vector<48x1xi32>, vector<48x1xi32>, vector<48x1xi32> -> vector<48x10xi32>
    %c0_87 = arith.constant 0 : index
    %c0_88 = arith.constant 0 : index
    %278 = vector.load %arg6[%c0_87, %c0_88] : memref<48x10xf32, #tpu.memory_space<vmem>>, vector<48x10xf32>
    tpu.vector_store %arg6[%c0_87, %c0_88], %276 {strides = array<i32>} : memref<48x10xf32, #tpu.memory_space<vmem>>, vector<48x10xf32>,
    %c0_89 = arith.constant 0 : index
    %c0_90 = arith.constant 0 : index
    %279 = vector.load %arg7[%c0_89, %c0_90] : memref<48x10xi32, #tpu.memory_space<vmem>>, vector<48x10xi32>
    tpu.vector_store %arg7[%c0_89, %c0_90], %277 {strides = array<i32>} : memref<48x10xi32, #tpu.memory_space<vmem>>, vector<48x10xi32>,
    %c2_i32 = arith.constant 2 : i32
    %280 = arith.cmpi eq, %arg1, %c2_i32 : i32
    %281 = arith.extui %280 : i1 to i32
    %c0_i32_91 = arith.constant 0 : i32
    %282 = arith.cmpi ne, %281, %c0_i32_91 : i32
    scf.if %282 {
      %c0_i32_92 = arith.constant 0 : i32
      %c319_i32 = arith.constant 319 : i32
      %283 = vector.broadcast %c0_i32_92 : i32 to vector<48x10xi32>
      %284 = arith.maxsi %283, %277 : vector<48x10xi32>
      %285 = vector.broadcast %c319_i32 : i32 to vector<48x10xi32>
      %286 = arith.minsi %285, %284 : vector<48x10xi32>
      %cst_93 = arith.constant dense<0xFF800000> : vector<48xf32>
      %287 = vector.multi_reduction <maximumf>, %276, %cst_93 [1] : vector<48x10xf32> to vector<48xf32>
      %288 = vector.shape_cast %287 : vector<48xf32> to vector<48x1xf32>
      %289 = vector.broadcast %288 : vector<48x1xf32> to vector<48x10xf32>
      %290 = arith.subf %276, %289 : vector<48x10xf32>
      %291 = math.exp %290 : vector<48x10xf32>
      %cst_94 = arith.constant dense<0.000000e+00> : vector<48xf32>
      %292 = vector.multi_reduction <add>, %291, %cst_94 [1] : vector<48x10xf32> to vector<48xf32>
      %293 = vector.shape_cast %292 : vector<48xf32> to vector<48x1xf32>
      %294 = vector.broadcast %293 : vector<48x1xf32> to vector<48x10xf32>
      %295 = arith.divf %291, %294 : vector<48x10xf32>
      %296 = tpu.transpose %295, [1, 0] : vector<48x10xf32> -> vector<10x48xf32>
      %c0_95 = arith.constant 0 : index
      %c0_96 = arith.constant 0 : index
      %c0_97 = arith.constant 0 : index
      %297 = vector.load %arg4[%c0_95, %c0_96, %c0_97] : memref<1x10x48xf32, #tpu.memory_space<vmem>>, vector<1x10x48xf32>
      %298 = vector.shape_cast %297 : vector<1x10x48xf32> to vector<10x48xf32>
      %299 = vector.shape_cast %296 : vector<10x48xf32> to vector<1x10x48xf32>
      tpu.vector_store %arg4[%c0_95, %c0_96, %c0_97], %299 {strides = array<i32>} : memref<1x10x48xf32, #tpu.memory_space<vmem>>, vector<1x10x48xf32>,
      %300 = tpu.transpose %286, [1, 0] : vector<48x10xi32> -> vector<10x48xi32>
      %c0_98 = arith.constant 0 : index
      %c0_99 = arith.constant 0 : index
      %c0_100 = arith.constant 0 : index
      %301 = vector.load %arg5[%c0_98, %c0_99, %c0_100] : memref<1x10x48xi32, #tpu.memory_space<vmem>>, vector<1x10x48xi32>
      %302 = vector.shape_cast %301 : vector<1x10x48xi32> to vector<10x48xi32>
      %303 = vector.shape_cast %300 : vector<10x48xi32> to vector<1x10x48xi32>
      tpu.vector_store %arg5[%c0_98, %c0_99, %c0_100], %303 {strides = array<i32>} : memref<1x10x48xi32, #tpu.memory_space<vmem>>, vector<1x10x48xi32>,
    } else {
    }
    return
  }
  func.func @transform_0(%arg0: i32, %arg1: i32) -> (i32, i32) {
    %c0_i32 = arith.constant 0 : i32
    %c0_i32_0 = arith.constant 0 : i32
    return %arg0, %c0_i32 : i32, i32
  }
  func.func @transform_1(%arg0: i32, %arg1: i32) -> (i32, i32) {
    %c0_i32 = arith.constant 0 : i32
    %c0_i32_0 = arith.constant 0 : i32
    return %c0_i32, %arg1 : i32, i32
  }
  func.func @transform_2(%arg0: i32, %arg1: i32) -> (i32, i32, i32) {
    %c0_i32 = arith.constant 0 : i32
    %c0_i32_0 = arith.constant 0 : i32
    %c0_i32_1 = arith.constant 0 : i32
    return %arg0, %c0_i32, %c0_i32_0 : i32, i32, i32
  }
  func.func @transform_3(%arg0: i32, %arg1: i32) -> (i32, i32, i32) {
    %c0_i32 = arith.constant 0 : i32
    %c0_i32_0 = arith.constant 0 : i32
    %c0_i32_1 = arith.constant 0 : i32
    return %arg0, %c0_i32, %c0_i32_0 : i32, i32, i32
  }
}

</mosaic_0001>

<llo_original>
// kernel: tpu_custom_call.1
$region0: #{tpu_custom_call.1}
  #allocation0 [shape = 'u32[]', space=smem, size = 0x4, offset = 0x4, fixed_abs, tag = 'smem constant byte address 0x4 - core index']
  #allocation1 [shape = 'u32[144,128]{1,0:T(1,128)}', space=vmem, size = 0x12000, scoped, tag = 'internal scratch']
  #allocation2 [shape = 'f32[48,10]{1,0:T(8,128)}', space=vmem, size = 0x6000, scoped, tag = 'scratch operand']
  #allocation3 [shape = 's32[48,10]{1,0:T(8,128)}', space=vmem, size = 0x6000, scoped, tag = 'scratch operand']
  %s0 = inlined_call_operand.vmem [shape: f32[96,32], index: 0, kind: input, shape index: {}]
  %s1 = inlined_call_operand.vmem [shape: f32[32,384], index: 1, kind: input, shape index: {}]
  %s2 = inlined_call_operand.vmem [shape: f32[2,10,48], index: 2, kind: output, shape index: {0}]
  %s3 = inlined_call_operand.vmem [shape: s32[2,10,48], index: 3, kind: output, shape index: {1}]
  %4 = xla_tuple %s2, %s3
  %s5 = sld [smem:[#allocation0]]
  $region95: #{tpu_custom_call.1} parent=0
    _
  %s7 = ssub.s32 1, %s5
  %s8 = scalar_select 0, %s7, %s5
  $region1: #{tpu_custom_call.1} parent=0
    #allocation4 [shape = 'u8[32768]{0}', space=vmem, size = 0x8000, scoped, tag = 'input window, operand 1']
    loop: start=0, step=1, limit=8
    $region2: #{tpu_custom_call.1} parent=1 // loop_pre_header
      _
    $region3: #{tpu_custom_call.1} parent=1 // loop_header
      %s10 = sphi 0, %s14
      %p11 = scmp.ge.s32.totalorder %s10, 8
      %s17 = sphi 0, %s29
      %s18 = sphi 0, %s25
      %s19 = sphi 0, %s17
      %s20 = sphi 0, %s18
      %s21 = sphi 0, %s19
      %s22 = sphi 0, %s20
      %s32 = sphi 0, %s34
      %s35 = sphi 0, %s32
      %s36 = sphi 0, %s35
      %s52 = sphi 0, %s36
      %s58 = sphi 0, %s60
      %s61 = sphi 0, %s58
      %s62 = sphi 0, %s61
      %s78 = sphi 0, %s62
      %s84 = sphi 0, %s86
      %s87 = sphi 0, %s84
      %s88 = sphi 0, %s87
      %s104 = sphi 0, %s88
      %s110 = sphi 0, %s112
      %s113 = sphi 0, %s110
      %s114 = sphi 0, %s113
      %s130 = sphi 0, %s114
    $region4: #{tpu_custom_call.1} parent=1 // loop_header_branch
      %13 = sbr.rel (%p11) target = $region8
    $region5: #{tpu_custom_call.1} parent=1 // loop_body
      %s15 = ssub.s32 %s10, 1
      %s16 = ssub.s32 %s10, 2
      %s23 = sadd.s32 1, %s18
      %p24 = scmp.ge.s32.totalorder %s23, 3
      %s25 = scalar_select %p24, 0, %s23
      %s26 = sadd.s32 1, %s17
      %s27 = scalar_select %p24, %s26, %s17
      %p28 = scmp.ge.s32.totalorder %s27, 2
      %s29 = scalar_select %p28, 0, %s27
      %s30 = ssub.s32 %s17, %s29
      %p31 = scmp.eq.s32.totalorder %s30, 0
      %s33 = sadd.s32 %s32, 1
      %s34 = scalar_select %p31, %s32, %s33
      %p37 = pneg %p31
      %p38 = scmp.eq.s32.totalorder %s10, 5
      %p39 = por %p37, %p38
      %p40 = scmp.ne.s32.totalorder %s32, %s35
      %p41 = scmp.eq.s32.totalorder %s10, 0
      %p42 = por %p40, %p41
      %p43 = scmp.ne.s32.totalorder %s32, %s35
      %p44 = scmp.eq.s32.totalorder %s15, 5
      %p45 = por %p43, %p44
      %p46 = scmp.ne.s32.totalorder %s35, %s36
      %p47 = scmp.eq.s32.totalorder %s15, 0
      %p48 = por %p46, %p47
      %p49 = scmp.ne.s32.totalorder %s35, %s36
      %p50 = scmp.eq.s32.totalorder %s16, 5
      %p51 = por %p49, %p50
      %p53 = scmp.ne.s32.totalorder %s36, %s52
      %p54 = scmp.eq.s32.totalorder %s16, 0
      %p55 = por %p53, %p54
      %s56 = ssub.s32 %s18, %s25
      %p57 = scmp.eq.s32.totalorder %s56, 0
      %s59 = sadd.s32 %s58, 1
      %s60 = scalar_select %p57, %s58, %s59
      %p63 = pneg %p57
      %p64 = scmp.eq.s32.totalorder %s10, 5
      %p65 = por %p63, %p64
      %p66 = scmp.ne.s32.totalorder %s58, %s61
      %p67 = scmp.eq.s32.totalorder %s10, 0
      %p68 = por %p66, %p67
      %p69 = scmp.ne.s32.totalorder %s58, %s61
      %p70 = scmp.eq.s32.totalorder %s15, 5
      %p71 = por %p69, %p70
      %p72 = scmp.ne.s32.totalorder %s61, %s62
      %p73 = scmp.eq.s32.totalorder %s15, 0
      %p74 = por %p72, %p73
      %p75 = scmp.ne.s32.totalorder %s61, %s62
      %p76 = scmp.eq.s32.totalorder %s16, 5
      %p77 = por %p75, %p76
      %p79 = scmp.ne.s32.totalorder %s62, %s78
      %p80 = scmp.eq.s32.totalorder %s16, 0
      %p81 = por %p79, %p80
      %s82 = ssub.s32 %s17, %s29
      %p83 = scmp.eq.s32.totalorder %s82, 0
      %s85 = sadd.s32 %s84, 1
      %s86 = scalar_select %p83, %s84, %s85
      %p89 = pneg %p83
      %p90 = scmp.eq.s32.totalorder %s10, 5
      %p91 = por %p89, %p90
      %p92 = scmp.ne.s32.totalorder %s84, %s87
      %p93 = scmp.eq.s32.totalorder %s10, 0
      %p94 = por %p92, %p93
      %p95 = scmp.ne.s32.totalorder %s84, %s87
      %p96 = scmp.eq.s32.totalorder %s15, 5
      %p97 = por %p95, %p96
      %p98 = scmp.ne.s32.totalorder %s87, %s88
      %p99 = scmp.eq.s32.totalorder %s15, 0
      %p100 = por %p98, %p99
      %p101 = scmp.ne.s32.totalorder %s87, %s88
      %p102 = scmp.eq.s32.totalorder %s16, 5
      %p103 = por %p101, %p102
      %p105 = scmp.ne.s32.totalorder %s88, %s104
      %p106 = scmp.eq.s32.totalorder %s16, 0
      %p107 = por %p105, %p106
      %s108 = ssub.s32 %s17, %s29
      %p109 = scmp.eq.s32.totalorder %s108, 0
      %s111 = sadd.s32 %s110, 1
      %s112 = scalar_select %p109, %s110, %s111
      %p115 = pneg %p109
      %p116 = scmp.eq.s32.totalorder %s10, 5
      %p117 = por %p115, %p116
      %p118 = scmp.ne.s32.totalorder %s110, %s113
      %p119 = scmp.eq.s32.totalorder %s10, 0
      %p120 = por %p118, %p119
      %p121 = scmp.ne.s32.totalorder %s110, %s113
      %p122 = scmp.eq.s32.totalorder %s15, 5
      %p123 = por %p121, %p122
      %p124 = scmp.ne.s32.totalorder %s113, %s114
      %p125 = scmp.eq.s32.totalorder %s15, 0
      %p126 = por %p124, %p125
      %p127 = scmp.ne.s32.totalorder %s113, %s114
      %p128 = scmp.eq.s32.totalorder %s16, 5
      %p129 = por %p127, %p128
      %p131 = scmp.ne.s32.totalorder %s114, %s130
      %p132 = scmp.eq.s32.totalorder %s16, 0
      %p133 = por %p131, %p132
      %p134 = scmp.le.s32.totalorder 1, %s10
      %p135 = scmp.lt.s32.totalorder %s10, 7
      %p136 = pnand %p134, %p135
      %p137 = pneg %p136
      // Predicated region
      $region9: #{tpu_custom_call.1} parent=5 // pred_check
        _
      $region10: #{tpu_custom_call.1} parent=5 // pred_check_branch
        %139 = sbr.rel (%p136) target = $region12
      $region11: #{tpu_custom_call.1} parent=5 // pred_region
        %s140 = ssub.s32 %s10, 1
      $region12: #{tpu_custom_call.1} parent=5 // pred_fallthru
        _
      %p141 = scmp.lt.s32.totalorder %s10, 6
      // Predicated region
      $region13: #{tpu_custom_call.1} parent=5 // pred_check
        %p142 = pneg %p141
      $region14: #{tpu_custom_call.1} parent=5 // pred_check_branch
        %144 = sbr.rel (%p142) target = $region16
      $region15: #{tpu_custom_call.1} parent=5 // pred_region
        // Predicated region
        $region17: #{tpu_custom_call.1} parent=15 // pred_check
          %p145 = pneg %p42
        $region18: #{tpu_custom_call.1} parent=15 // pred_check_branch
          %147 = sbr.rel (%p145) target = $region20
        $region19: #{tpu_custom_call.1} parent=15 // pred_region
          %s148 = smul.u32 6, %s17
          %p149 = scmp.lt.s32.totalorder %s148, 11
          %s150 = scalar_select %p149, %s148, 11
          %s151 = smul.addr %s150, 8
          %s152 = scalar_lea.vmem %s0, %s151
          %s153 = smul.u32 6, %s17
        $region20: #{tpu_custom_call.1} parent=15 // pred_fallthru
          _
        // Predicated region
        $region21: #{tpu_custom_call.1} parent=15 // pred_check
          %p154 = pneg %p68
        $region22: #{tpu_custom_call.1} parent=15 // pred_check_branch
          %156 = sbr.rel (%p154) target = $region24
        $region23: #{tpu_custom_call.1} parent=15 // pred_region
          %s157 = sand.u32 %s58, 1
          %s158 = sand.u32 %s58, 1
          %s159 = smul.addr %s158, 32
          %s160 = scalar_lea.vmem [#allocation4], %s159
          %s161 = smul.addr %s18, 8
          %s162 = scalar_lea.vmem %s1, %s161
          // Predicated region
          $region25: #{tpu_custom_call.1} parent=23 // pred_check
            _
          $region26: #{tpu_custom_call.1} parent=23 // pred_check_branch
            %164 = sbr.rel (0) target = $region28
          $region27: #{tpu_custom_call.1} parent=23 // pred_region
            // Predicated region
            $region29: #{tpu_custom_call.1} parent=27 // pred_check
              _
            $region30: #{tpu_custom_call.1} parent=27 // pred_check_branch
              %166 = sbr.rel (0) target = $region32
            $region31: #{tpu_custom_call.1} parent=27 // pred_region
              // Predicated region
              $region44: #{tpu_custom_call.1} parent=31 // pred_check
                _
              $region45: #{tpu_custom_call.1} parent=31 // pred_check_branch
                %187 = sbr.rel (0) target = $region47
              $region46: #{tpu_custom_call.1} parent=31 // pred_region
                loop: start=0, step=1, limit=1
                $region48: #{tpu_custom_call.1} parent=46 // loop_pre_header
                  _
                $region49: #{tpu_custom_call.1} parent=46 // loop_header
                  %s189 = sphi 0, %s193
                  %p190 = scmp.ge.s32.totalorder %s189, 1
                  %s194 = sphi %s162, %s162
                  %s195 = sphi %s160, %s160
                $region50: #{tpu_custom_call.1} parent=46 // loop_header_branch
                  %192 = sbr.rel (%p190) target = $region54
                $region51: #{tpu_custom_call.1} parent=46 // loop_body
                  %v196 = vld [vmem:[%s194] sm:$0xff]
                  %197 = vst [vmem:[%s195] sm:$0xff] %v196
                  %v198 = vld [vmem:[%s194 + $0x18] sm:$0xff]
                  %199 = vst [vmem:[%s195 + $0x8] sm:$0xff] %v198
                  %v200 = vld [vmem:[%s194 + $0x30] sm:$0xff]
                  %201 = vst [vmem:[%s195 + $0x10] sm:$0xff] %v200
                  %v202 = vld [vmem:[%s194 + $0x48] sm:$0xff]
                  %203 = vst [vmem:[%s195 + $0x18] sm:$0xff] %v202
                $region52: #{tpu_custom_call.1} parent=46 // loop_footer
                  %s193 = sadd.s32 1, %s189
                $region53: #{tpu_custom_call.1} parent=46 // loop_footer_branch
                  %188 = sbr.rel target = $region49
                $region54: #{tpu_custom_call.1} parent=46 // loop_exit
                  _
              $region47: #{tpu_custom_call.1} parent=31 // pred_fallthru
                _
              // Predicated region
              $region55: #{tpu_custom_call.1} parent=31 // pred_check
                _
              $region56: #{tpu_custom_call.1} parent=31 // pred_check_branch
                %205 = sbr.rel target = $region58
              $region57: #{tpu_custom_call.1} parent=31 // pred_region
                _
              $region58: #{tpu_custom_call.1} parent=31 // pred_fallthru
                _
            $region32: #{tpu_custom_call.1} parent=27 // pred_fallthru
              _
            // Predicated region
            $region33: #{tpu_custom_call.1} parent=27 // pred_check
              _
            $region34: #{tpu_custom_call.1} parent=27 // pred_check_branch
              %168 = sbr.rel target = $region36
            $region35: #{tpu_custom_call.1} parent=27 // pred_region
              loop: start=0, step=1, limit=1
              $region37: #{tpu_custom_call.1} parent=35 // loop_pre_header
                _
              $region38: #{tpu_custom_call.1} parent=35 // loop_header
                %s171 = sphi 0, %s175
                %p172 = scmp.ge.s32.totalorder %s171, 1
                %s176 = sphi %s162, %s162
                %s177 = sphi %s160, %s160
              $region39: #{tpu_custom_call.1} parent=35 // loop_header_branch
                %174 = sbr.rel (%p172) target = $region43
              $region40: #{tpu_custom_call.1} parent=35 // loop_body
                %v178 = vld [vmem:[%s176] sm:$0xff]
                %179 = vst [vmem:[%s177] sm:$0xff] %v178
                %v180 = vld [vmem:[%s176 + $0x18] sm:$0xff]
                %181 = vst [vmem:[%s177 + $0x8] sm:$0xff] %v180
                %v182 = vld [vmem:[%s176 + $0x30] sm:$0xff]
                %183 = vst [vmem:[%s177 + $0x10] sm:$0xff] %v182
                %v184 = vld [vmem:[%s176 + $0x48] sm:$0xff]
                %185 = vst [vmem:[%s177 + $0x18] sm:$0xff] %v184
              $region41: #{tpu_custom_call.1} parent=35 // loop_footer
                %s175 = sadd.s32 1, %s171
              $region42: #{tpu_custom_call.1} parent=35 // loop_footer_branch
                %170 = sbr.rel target = $region38
              $region43: #{tpu_custom_call.1} parent=35 // loop_exit
                _
            $region36: #{tpu_custom_call.1} parent=27 // pred_fallthru
              _
          $region28: #{tpu_custom_call.1} parent=23 // pred_fallthru
            _
          %206 = vnop
        $region24: #{tpu_custom_call.1} parent=15 // pred_fallthru
          _
      $region16: #{tpu_custom_call.1} parent=5 // pred_fallthru
        _
      %p207 = scmp.le.s32.totalorder 1, %s10
      %p208 = scmp.lt.s32.totalorder %s10, 7
      %p209 = pnand %p207, %p208
      %p210 = pneg %p209
      // Predicated region
      $region59: #{tpu_custom_call.1} parent=5 // pred_check
        _
      $region60: #{tpu_custom_call.1} parent=5 // pred_check_branch
        %212 = sbr.rel (%p209) target = $region62
      $region61: #{tpu_custom_call.1} parent=5 // pred_region
        %s213 = ssub.s32 %s10, 1
        %s214 = sand.u32 %s61, 1
        %s215 = sand.u32 %s61, 1
        %s216 = smul.addr %s215, 32
        %s217 = scalar_lea.vmem [#allocation4], %s216
        // Predicated region
        $region63: #{tpu_custom_call.1} parent=61 // pred_check
          %p218 = pneg %p74
        $region64: #{tpu_custom_call.1} parent=61 // pred_check_branch
          %220 = sbr.rel (%p218) target = $region66
        $region65: #{tpu_custom_call.1} parent=61 // pred_region
          _
        $region66: #{tpu_custom_call.1} parent=61 // pred_fallthru
          _
        %s221 = smul.u32 6, %s19
        %p222 = scmp.lt.s32.totalorder %s221, 11
        %s223 = scalar_select %p222, %s221, 11
        %s224 = smul.addr %s223, 8
        %s225 = scalar_lea.vmem %s0, %s224
        %p226 = pneg %p48
        %p227 = pneg %p45
        %s228 = sand.u32 %s61, 1
        %s229 = sand.u32 %s61, 1
        %s230 = smul.addr %s229, 32
        %s231 = scalar_lea.vmem [#allocation4], %s230
        %p232 = pneg %p74
        %p233 = pneg %p71
        %p234 = pneg %p100
        %p235 = pneg %p97
        %p236 = scmp.lt.s32.totalorder %s19, 1
        %s237 = scalar_select %p236, %s19, 1
        %s238 = smul.addr %s237, 2
        %s239 = smul.addr %s238, 8
        %s240 = scalar_lea.vmem %s2, %s239
        %p241 = pneg %p126
        %p242 = pneg %p123
        %p243 = scmp.lt.s32.totalorder %s19, 1
        %s244 = scalar_select %p243, %s19, 1
        %s245 = smul.addr %s244, 2
        %s246 = smul.addr %s245, 8
        %s247 = scalar_lea.vmem %s3, %s246
        %s248 = smul.u32 6, %s19
        %p249 = scmp.lt.s32.totalorder %s248, 11
        %s250 = scalar_select %p249, %s248, 11
        %s251 = smul.addr %s250, 8
        %s252 = scalar_lea.vmem %s0, %s251
        %s253 = smul.u32 6, %s19
        %p254 = scmp.lt.s32.totalorder %s19, 1
        %s255 = scalar_select %p254, %s19, 1
        %s256 = smul.addr %s255, 2
        %s257 = smul.addr %s256, 8
        %s258 = scalar_lea.vmem %s2, %s257
        %p259 = scmp.lt.s32.totalorder %s19, 1
        %s260 = scalar_select %p259, %s19, 1
        %s261 = smul.addr %s260, 2
        %s262 = smul.addr %s261, 8
        %s263 = scalar_lea.vmem %s3, %s262
        %p264 = scmp.eq.s32.totalorder %s20, 0
        // Predicated region
        $region67: #{tpu_custom_call.1} parent=61 // pred_check
          %p265 = pneg %p264
        $region68: #{tpu_custom_call.1} parent=61 // pred_check_branch
          %267 = sbr.rel (%p265) target = $region70
        $region69: #{tpu_custom_call.1} parent=61 // pred_region
          %vm268 = vcmask 80896
          %269 = vst.msk [vmem:[#allocation2] sm:$0xff] %vm268, -inf
          %270 = vst.msk [vmem:[#allocation2 + $0x8] sm:$0xff] %vm268, -inf
          %271 = vst.msk [vmem:[#allocation2 + $0x10] sm:$0xff] %vm268, -inf
          %272 = vst.msk [vmem:[#allocation2 + $0x18] sm:$0xff] %vm268, -inf
          %273 = vst.msk [vmem:[#allocation2 + $0x20] sm:$0xff] %vm268, -inf
          %274 = vst.msk [vmem:[#allocation2 + $0x28] sm:$0xff] %vm268, -inf
          %275 = vst.msk [vmem:[#allocation3] sm:$0xff] %vm268, 0
          %276 = vst.msk [vmem:[#allocation3 + $0x8] sm:$0xff] %vm268, 0
          %277 = vst.msk [vmem:[#allocation3 + $0x10] sm:$0xff] %vm268, 0
          %278 = vst.msk [vmem:[#allocation3 + $0x18] sm:$0xff] %vm268, 0
          %279 = vst.msk [vmem:[#allocation3 + $0x20] sm:$0xff] %vm268, 0
          %280 = vst.msk [vmem:[#allocation3 + $0x28] sm:$0xff] %vm268, 0
        $region70: #{tpu_custom_call.1} parent=61 // pred_fallthru
          _
        %v281 = vld [vmem:[%s252] sm:$0xff]
        %v282 = vld [vmem:[%s252 + $0x8] sm:$0xff]
        %v283 = vld [vmem:[%s252 + $0x10] sm:$0xff]
        %v284 = vld [vmem:[%s252 + $0x18] sm:$0xff]
        %v285 = vld [vmem:[%s252 + $0x20] sm:$0xff]
        %v286 = vld [vmem:[%s252 + $0x28] sm:$0xff]
        %v287 = vld [vmem:[%s217] sm:$0xff]
        %v288 = vld [vmem:[%s217 + $0x8] sm:$0xff]
        %v289 = vld [vmem:[%s217 + $0x10] sm:$0xff]
        %v290 = vld [vmem:[%s217 + $0x18] sm:$0xff]
        %vm291 = vcmask 261120
        %v293 = vsel %vm291, %v281, 0
        %v296 = vsel %vm291, %v282, 0
        %v299 = vsel %vm291, %v283, 0
        %v302 = vsel %vm291, %v284, 0
        %v305 = vsel %vm291, %v285, 0
        %v308 = vsel %vm291, %v286, 0
        %310 = vmatprep.subr.mxu0 0.0
        %311 = vmatpush1.msra.mxu0 %v287
        %312 = vmatprep.subr.mxu0 0.0
        %313 = vmatpush1.msra.mxu0 %v288
        %314 = vmatprep.subr.mxu0 0.0
        %315 = vmatpush1.msra.mxu0 %v289
        %316 = vmatprep.subr.mxu0 0.0
        %317 = vmatpush1.msra.mxu0 %v290
        %318 = vmatprep.subr.mxu0 0.0
        %319 = vmatpush1.msra.mxu0 0.0
        %320 = vmatprep.subr.mxu0 0.0
        %321 = vmatpush1.msra.mxu0 0.0
        %322 = vmatprep.subr.mxu0 0.0
        %323 = vmatpush1.msra.mxu0 0.0
        %324 = vmatprep.subr.mxu0 0.0
        %325 = vmatpush1.msra.mxu0 0.0
        %326 = vmatprep.subr.mxu0 0.0
        %327 = vmatpush1.msra.mxu0 0.0
        %328 = vmatprep.subr.mxu0 0.0
        %329 = vmatpush1.msra.mxu0 0.0
        %330 = vmatprep.subr.mxu0 0.0
        %331 = vmatpush1.msra.mxu0 0.0
        %332 = vmatprep.subr.mxu0 0.0
        %333 = vmatpush1.msra.mxu0 0.0
        %334 = vmatprep.subr.mxu0 0.0
        %335 = vmatpush1.msra.mxu0 0.0
        %336 = vmatprep.subr.mxu0 0.0
        %337 = vmatpush1.msra.mxu0 0.0
        %338 = vmatprep.subr.mxu0 0.0
        %339 = vmatpush1.msra.mxu0 0.0
        %340 = vmatprep.subr.mxu0 0.0
        %341 = vmatpush1.msra.mxu0 0.0
        %342 = vmatprep.subr.mxu0 0.0
        %343 = vmatpush1.msra.mxu0 0.0
        %344 = vmatprep.subr.mxu0 0.0
        %345 = vmatpush1.msra.mxu0 0.0
        %346 = vmatprep.subr.mxu0 0.0
        %347 = vmatpush1.msra.mxu0 0.0
        %348 = vmatprep.subr.mxu0 0.0
        %349 = vmatpush1.msra.mxu0 0.0
        %350 = vmatprep.subr.mxu0 0.0
        %351 = vmatpush1.msra.mxu0 0.0
        %352 = vmatprep.subr.mxu0 0.0
        %353 = vmatpush1.msra.mxu0 0.0
        %354 = vmatprep.subr.mxu0 0.0
        %355 = vmatpush1.msra.mxu0 0.0
        %356 = vmatprep.subr.mxu0 0.0
        %357 = vmatpush1.msra.mxu0 0.0
        %358 = vmatprep.subr.mxu0 0.0
        %359 = vmatpush1.msra.mxu0 0.0
        %360 = vmatprep.subr.mxu0 0.0
        %361 = vmatpush1.msra.mxu0 0.0
        %362 = vmatprep.subr.mxu0 0.0
        %363 = vmatpush1.msra.mxu0 0.0
        %364 = vmatprep.subr.mxu0 0.0
        %365 = vmatpush1.msra.mxu0 0.0
        %366 = vmatprep.subr.mxu0 0.0
        %367 = vmatpush1.msra.mxu0 0.0
        %368 = vmatprep.subr.mxu0 0.0
        %369 = vmatpush1.msra.mxu0 0.0
        %370 = vmatprep.subr.mxu0 0.0
        %371 = vmatpush1.msra.mxu0 0.0
        %372 = vmatprep.subr.mxu0 0.0
        %373 = vmatpush1.msra.mxu0 0.0
        %374 = vmatprep.mubr.f32.mxu0 0.0
        %375 = vmatmul.mubr.f32.gmra.mrb[0].mxu0 %v293
        %v376 = vpop.f32.mrb[0].mxu0
        %v377 = vadd.f32 0.0, %v376
        %v378 = vpop.f32.mrb[0].mxu0
        %379 = vmatprep.mubr.f32.mxu0 0.0
        %380 = vmatmul.mubr.f32.gmra.mrb[0].mxu0 %v296
        %v381 = vpop.f32.mrb[0].mxu0
        %v382 = vadd.f32 0.0, %v381
        %v383 = vpop.f32.mrb[0].mxu0
        %384 = vmatprep.mubr.f32.mxu0 0.0
        %385 = vmatmul.mubr.f32.gmra.mrb[0].mxu0 %v299
        %v386 = vpop.f32.mrb[0].mxu0
        %v387 = vadd.f32 0.0, %v386
        %v388 = vpop.f32.mrb[0].mxu0
        %389 = vmatprep.mubr.f32.mxu0 0.0
        %390 = vmatmul.mubr.f32.gmra.mrb[0].mxu0 %v302
        %v391 = vpop.f32.mrb[0].mxu0
        %v392 = vadd.f32 0.0, %v391
        %v393 = vpop.f32.mrb[0].mxu0
        %394 = vmatprep.mubr.f32.mxu0 0.0
        %395 = vmatmul.mubr.f32.gmra.mrb[0].mxu0 %v305
        %v396 = vpop.f32.mrb[0].mxu0
        %v397 = vadd.f32 0.0, %v396
        %v398 = vpop.f32.mrb[0].mxu0
        %399 = vmatprep.mubr.f32.mxu0 0.0
        %400 = vmatmul.mubr.f32.gmra.mrb[0].mxu0 %v308
        %v401 = vpop.f32.mrb[0].mxu0
        %v402 = vadd.f32 0.0, %v401
        %v403 = vpop.f32.mrb[0].mxu0
        %404 = vdwg.mxu0
        %v405 = vmul.f32 %v377, 20.0
        %v406 = vmul.f32 %v382, 20.0
        %v407 = vmul.f32 %v387, 20.0
        %v408 = vmul.f32 %v392, 20.0
        %v409 = vmul.f32 %v397, 20.0
        %v410 = vmul.f32 %v402, 20.0
        %v411 = vlaneseq
        %v412 = vand.u32 %v411, 127
        %s413 = smul.u32 %s20, 128
        %v414 = vstv %s413
        %v415 = vadd.s32 %v412, %v414
        %vm416 = vcmp.lt.s32.totalorder %v415, 320
        %v417 = vsel %vm416, 1, 0
        %vm418 = vcmp.eq.s32.totalorder %v417, 1
        %v419 = vsel %vm418, %v405, -inf
        %v420 = vsel %vm418, %v406, -inf
        %v421 = vsel %vm418, %v407, -inf
        %v422 = vsel %vm418, %v408, -inf
        %v423 = vsel %vm418, %v409, -inf
        %v424 = vsel %vm418, %v410, -inf
        %425 = vmax.xlane.f32.xlu0 %v419
        %v426 = vpop.xlane.xlu0 %425
        %427 = vmax.xlane.f32.xlu0 %v420
        %v428 = vpop.xlane.xlu0 %427
        %429 = vmax.xlane.f32.xlu0 %v421
        %v430 = vpop.xlane.xlu0 %429
        %431 = vmax.xlane.f32.xlu0 %v422
        %v432 = vpop.xlane.xlu0 %431
        %433 = vmax.xlane.f32.xlu0 %v423
        %v434 = vpop.xlane.xlu0 %433
        %435 = vmax.xlane.f32.xlu0 %v424
        %v436 = vpop.xlane.xlu0 %435
        %vm437 = vcmp.eq.f32.partialorder %v419, %v426
        %vm438 = vcmp.eq.f32.partialorder %v420, %v428
        %vm439 = vcmp.eq.f32.partialorder %v421, %v430
        %vm440 = vcmp.eq.f32.partialorder %v422, %v432
        %vm441 = vcmp.eq.f32.partialorder %v423, %v434
        %vm442 = vcmp.eq.f32.partialorder %v424, %v436
        %v443 = vsel %vm437, %v415, 2147483647
        %v444 = vsel %vm438, %v415, 2147483647
        %v445 = vsel %vm439, %v415, 2147483647
        %v446 = vsel %vm440, %v415, 2147483647
        %v447 = vsel %vm441, %v415, 2147483647
        %v448 = vsel %vm442, %v415, 2147483647
        %v449 = vand.u32 %v443, 65535
        %v450 = vshra.s32 %v443, 16
        %v451 = vcvt.s32.f32 %v449
        %v452 = vcvt.s32.f32 %v450
        %453 = vmin.xlane.f32.xlu0 %v452
        %v454 = vpop.xlane.xlu0 %453
        %vm455 = vcmp.eq.f32.partialorder %v452, %v454
        %v456 = vsel %vm455, %v451, inf
        %457 = vmin.xlane.f32.xlu0 %v456
        %v458 = vpop.xlane.xlu0 %457
        %v459 = vcvt.f32.s32 %v458
        %v460 = vcvt.f32.s32 %v454
        %v461 = vshll.u32 %v460, 16
        %v462 = vadd.s32 %v461, %v459
        %v463 = vand.u32 %v444, 65535
        %v464 = vshra.s32 %v444, 16
        %v465 = vcvt.s32.f32 %v463
        %v466 = vcvt.s32.f32 %v464
        %467 = vmin.xlane.f32.xlu0 %v466
        %v468 = vpop.xlane.xlu0 %467
        %vm469 = vcmp.eq.f32.partialorder %v466, %v468
        %v470 = vsel %vm469, %v465, inf
        %471 = vmin.xlane.f32.xlu0 %v470
        %v472 = vpop.xlane.xlu0 %471
        %v473 = vcvt.f32.s32 %v472
        %v474 = vcvt.f32.s32 %v468
        %v475 = vshll.u32 %v474, 16
        %v476 = vadd.s32 %v475, %v473
        %v477 = vand.u32 %v445, 65535
        %v478 = vshra.s32 %v445, 16
        %v479 = vcvt.s32.f32 %v477
        %v480 = vcvt.s32.f32 %v478
        %481 = vmin.xlane.f32.xlu0 %v480
        %v482 = vpop.xlane.xlu0 %481
        %vm483 = vcmp.eq.f32.partialorder %v480, %v482
        %v484 = vsel %vm483, %v479, inf
        %485 = vmin.xlane.f32.xlu0 %v484
        %v486 = vpop.xlane.xlu0 %485
        %v487 = vcvt.f32.s32 %v486
        %v488 = vcvt.f32.s32 %v482
        %v489 = vshll.u32 %v488, 16
        %v490 = vadd.s32 %v489, %v487
        %v491 = vand.u32 %v446, 65535
        %v492 = vshra.s32 %v446, 16
        %v493 = vcvt.s32.f32 %v491
        %v494 = vcvt.s32.f32 %v492
        %495 = vmin.xlane.f32.xlu0 %v494
        %v496 = vpop.xlane.xlu0 %495
        %vm497 = vcmp.eq.f32.partialorder %v494, %v496
        %v498 = vsel %vm497, %v493, inf
        %499 = vmin.xlane.f32.xlu0 %v498
        %v500 = vpop.xlane.xlu0 %499
        %v501 = vcvt.f32.s32 %v500
        %v502 = vcvt.f32.s32 %v496
        %v503 = vshll.u32 %v502, 16
        %v504 = vadd.s32 %v503, %v501
        %v505 = vand.u32 %v447, 65535
        %v506 = vshra.s32 %v447, 16
        %v507 = vcvt.s32.f32 %v505
        %v508 = vcvt.s32.f32 %v506
        %509 = vmin.xlane.f32.xlu0 %v508
        %v510 = vpop.xlane.xlu0 %509
        %vm511 = vcmp.eq.f32.partialorder %v508, %v510
        %v512 = vsel %vm511, %v507, inf
        %513 = vmin.xlane.f32.xlu0 %v512
        %v514 = vpop.xlane.xlu0 %513
        %v515 = vcvt.f32.s32 %v514
        %v516 = vcvt.f32.s32 %v510
        %v517 = vshll.u32 %v516, 16
        %v518 = vadd.s32 %v517, %v515
        %v519 = vand.u32 %v448, 65535
        %v520 = vshra.s32 %v448, 16
        %v521 = vcvt.s32.f32 %v519
        %v522 = vcvt.s32.f32 %v520
        %523 = vmin.xlane.f32.xlu0 %v522
        %v524 = vpop.xlane.xlu0 %523
        %vm525 = vcmp.eq.f32.partialorder %v522, %v524
        %v526 = vsel %vm525, %v521, inf
        %527 = vmin.xlane.f32.xlu0 %v526
        %v528 = vpop.xlane.xlu0 %527
        %v529 = vcvt.f32.s32 %v528
        %v530 = vcvt.f32.s32 %v524
        %v531 = vshll.u32 %v530, 16
        %v532 = vadd.s32 %v531, %v529
        %vm533 = vcmp.eq.s32.totalorder %v443, %v462
        %vm534 = vcmp.eq.s32.totalorder %v444, %v476
        %vm535 = vcmp.eq.s32.totalorder %v445, %v490
        %vm536 = vcmp.eq.s32.totalorder %v446, %v504
        %vm537 = vcmp.eq.s32.totalorder %v447, %v518
        %vm538 = vcmp.eq.s32.totalorder %v448, %v532
        %v539 = vsel %vm533, -inf, %v419
        %v540 = vsel %vm534, -inf, %v420
        %v541 = vsel %vm535, -inf, %v421
        %v542 = vsel %vm536, -inf, %v422
        %v543 = vsel %vm537, -inf, %v423
        %v544 = vsel %vm538, -inf, %v424
        %545 = vmax.xlane.f32.xlu0 %v539
        %v546 = vpop.xlane.xlu0 %545
        %547 = vmax.xlane.f32.xlu0 %v540
        %v548 = vpop.xlane.xlu0 %547
        %549 = vmax.xlane.f32.xlu0 %v541
        %v550 = vpop.xlane.xlu0 %549
        %551 = vmax.xlane.f32.xlu0 %v542
        %v552 = vpop.xlane.xlu0 %551
        %553 = vmax.xlane.f32.xlu0 %v543
        %v554 = vpop.xlane.xlu0 %553
        %555 = vmax.xlane.f32.xlu0 %v544
        %v556 = vpop.xlane.xlu0 %555
        %vm557 = vcmp.eq.f32.partialorder %v539, %v546
        %vm558 = vcmp.eq.f32.partialorder %v540, %v548
        %vm559 = vcmp.eq.f32.partialorder %v541, %v550
        %vm560 = vcmp.eq.f32.partialorder %v542, %v552
        %vm561 = vcmp.eq.f32.partialorder %v543, %v554
        %vm562 = vcmp.eq.f32.partialorder %v544, %v556
        %v563 = vsel %vm557, %v415, 2147483647
        %v564 = vsel %vm558, %v415, 2147483647
        %v565 = vsel %vm559, %v415, 2147483647
        %v566 = vsel %vm560, %v415, 2147483647
        %v567 = vsel %vm561, %v415, 2147483647
        %v568 = vsel %vm562, %v415, 2147483647
        %v569 = vand.u32 %v563, 65535
        %v570 = vshra.s32 %v563, 16
        %v571 = vcvt.s32.f32 %v569
        %v572 = vcvt.s32.f32 %v570
        %573 = vmin.xlane.f32.xlu0 %v572
        %v574 = vpop.xlane.xlu0 %573
        %vm575 = vcmp.eq.f32.partialorder %v572, %v574
        %v576 = vsel %vm575, %v571, inf
        %577 = vmin.xlane.f32.xlu0 %v576
        %v578 = vpop.xlane.xlu0 %577
        %v579 = vcvt.f32.s32 %v578
        %v580 = vcvt.f32.s32 %v574
        %v581 = vshll.u32 %v580, 16
        %v582 = vadd.s32 %v581, %v579
        %v583 = vand.u32 %v564, 65535
        %v584 = vshra.s32 %v564, 16
        %v585 = vcvt.s32.f32 %v583
        %v586 = vcvt.s32.f32 %v584
        %587 = vmin.xlane.f32.xlu0 %v586
        %v588 = vpop.xlane.xlu0 %587
        %vm589 = vcmp.eq.f32.partialorder %v586, %v588
        %v590 = vsel %vm589, %v585, inf
        %591 = vmin.xlane.f32.xlu0 %v590
        %v592 = vpop.xlane.xlu0 %591
        %v593 = vcvt.f32.s32 %v592
        %v594 = vcvt.f32.s32 %v588
        %v595 = vshll.u32 %v594, 16
        %v596 = vadd.s32 %v595, %v593
        %v597 = vand.u32 %v565, 65535
        %v598 = vshra.s32 %v565, 16
        %v599 = vcvt.s32.f32 %v597
        %v600 = vcvt.s32.f32 %v598
        %601 = vmin.xlane.f32.xlu0 %v600
        %v602 = vpop.xlane.xlu0 %601
        %vm603 = vcmp.eq.f32.partialorder %v600, %v602
        %v604 = vsel %vm603, %v599, inf
        %605 = vmin.xlane.f32.xlu0 %v604
        %v606 = vpop.xlane.xlu0 %605
        %v607 = vcvt.f32.s32 %v606
        %v608 = vcvt.f32.s32 %v602
        %v609 = vshll.u32 %v608, 16
        %v610 = vadd.s32 %v609, %v607
        %v611 = vand.u32 %v566, 65535
        %v612 = vshra.s32 %v566, 16
        %v613 = vcvt.s32.f32 %v611
        %v614 = vcvt.s32.f32 %v612
        %615 = vmin.xlane.f32.xlu0 %v614
        %v616 = vpop.xlane.xlu0 %615
        %vm617 = vcmp.eq.f32.partialorder %v614, %v616
        %v618 = vsel %vm617, %v613, inf
        %619 = vmin.xlane.f32.xlu0 %v618
        %v620 = vpop.xlane.xlu0 %619
        %v621 = vcvt.f32.s32 %v620
        %v622 = vcvt.f32.s32 %v616
        %v623 = vshll.u32 %v622, 16
        %v624 = vadd.s32 %v623, %v621
        %v625 = vand.u32 %v567, 65535
        %v626 = vshra.s32 %v567, 16
        %v627 = vcvt.s32.f32 %v625
        %v628 = vcvt.s32.f32 %v626
        %629 = vmin.xlane.f32.xlu0 %v628
        %v630 = vpop.xlane.xlu0 %629
        %vm631 = vcmp.eq.f32.partialorder %v628, %v630
        %v632 = vsel %vm631, %v627, inf
        %633 = vmin.xlane.f32.xlu0 %v632
        %v634 = vpop.xlane.xlu0 %633
        %v635 = vcvt.f32.s32 %v634
        %v636 = vcvt.f32.s32 %v630
        %v637 = vshll.u32 %v636, 16
        %v638 = vadd.s32 %v637, %v635
        %v639 = vand.u32 %v568, 65535
        %v640 = vshra.s32 %v568, 16
        %v641 = vcvt.s32.f32 %v639
        %v642 = vcvt.s32.f32 %v640
        %643 = vmin.xlane.f32.xlu0 %v642
        %v644 = vpop.xlane.xlu0 %643
        %vm645 = vcmp.eq.f32.partialorder %v642, %v644
        %v646 = vsel %vm645, %v641, inf
        %647 = vmin.xlane.f32.xlu0 %v646
        %v648 = vpop.xlane.xlu0 %647
        %v649 = vcvt.f32.s32 %v648
        %v650 = vcvt.f32.s32 %v644
        %v651 = vshll.u32 %v650, 16
        %v652 = vadd.s32 %v651, %v649
        %vm653 = vcmp.eq.s32.totalorder %v563, %v582
        %vm654 = vcmp.eq.s32.totalorder %v564, %v596
        %vm655 = vcmp.eq.s32.totalorder %v565, %v610
        %vm656 = vcmp.eq.s32.totalorder %v566, %v624
        %vm657 = vcmp.eq.s32.totalorder %v567, %v638
        %vm658 = vcmp.eq.s32.totalorder %v568, %v652
        %v659 = vsel %vm653, -inf, %v539
        %v660 = vsel %vm654, -inf, %v540
        %v661 = vsel %vm655, -inf, %v541
        %v662 = vsel %vm656, -inf, %v542
        %v663 = vsel %vm657, -inf, %v543
        %v664 = vsel %vm658, -inf, %v544
        %665 = vmax.xlane.f32.xlu0 %v659
        %v666 = vpop.xlane.xlu0 %665
        %667 = vmax.xlane.f32.xlu0 %v660
        %v668 = vpop.xlane.xlu0 %667
        %669 = vmax.xlane.f32.xlu0 %v661
        %v670 = vpop.xlane.xlu0 %669
        %671 = vmax.xlane.f32.xlu0 %v662
        %v672 = vpop.xlane.xlu0 %671
        %673 = vmax.xlane.f32.xlu0 %v663
        %v674 = vpop.xlane.xlu0 %673
        %675 = vmax.xlane.f32.xlu0 %v664
        %v676 = vpop.xlane.xlu0 %675
        %vm677 = vcmp.eq.f32.partialorder %v659, %v666
        %vm678 = vcmp.eq.f32.partialorder %v660, %v668
        %vm679 = vcmp.eq.f32.partialorder %v661, %v670
        %vm680 = vcmp.eq.f32.partialorder %v662, %v672
        %vm681 = vcmp.eq.f32.partialorder %v663, %v674
        %vm682 = vcmp.eq.f32.partialorder %v664, %v676
        %v683 = vsel %vm677, %v415, 2147483647
        %v684 = vsel %vm678, %v415, 2147483647
        %v685 = vsel %vm679, %v415, 2147483647
        %v686 = vsel %vm680, %v415, 2147483647
        %v687 = vsel %vm681, %v415, 2147483647
        %v688 = vsel %vm682, %v415, 2147483647
        %v689 = vand.u32 %v683, 65535
        %v690 = vshra.s32 %v683, 16
        %v691 = vcvt.s32.f32 %v689
        %v692 = vcvt.s32.f32 %v690
        %693 = vmin.xlane.f32.xlu0 %v692
        %v694 = vpop.xlane.xlu0 %693
        %vm695 = vcmp.eq.f32.partialorder %v692, %v694
        %v696 = vsel %vm695, %v691, inf
        %697 = vmin.xlane.f32.xlu0 %v696
        %v698 = vpop.xlane.xlu0 %697
        %v699 = vcvt.f32.s32 %v698
        %v700 = vcvt.f32.s32 %v694
        %v701 = vshll.u32 %v700, 16
        %v702 = vadd.s32 %v701, %v699
        %v703 = vand.u32 %v684, 65535
        %v704 = vshra.s32 %v684, 16
        %v705 = vcvt.s32.f32 %v703
        %v706 = vcvt.s32.f32 %v704
        %707 = vmin.xlane.f32.xlu0 %v706
        %v708 = vpop.xlane.xlu0 %707
        %vm709 = vcmp.eq.f32.partialorder %v706, %v708
        %v710 = vsel %vm709, %v705, inf
        %711 = vmin.xlane.f32.xlu0 %v710
        %v712 = vpop.xlane.xlu0 %711
        %v713 = vcvt.f32.s32 %v712
        %v714 = vcvt.f32.s32 %v708
        %v715 = vshll.u32 %v714, 16
        %v716 = vadd.s32 %v715, %v713
        %v717 = vand.u32 %v685, 65535
        %v718 = vshra.s32 %v685, 16
        %v719 = vcvt.s32.f32 %v717
        %v720 = vcvt.s32.f32 %v718
        %721 = vmin.xlane.f32.xlu0 %v720
        %v722 = vpop.xlane.xlu0 %721
        %vm723 = vcmp.eq.f32.partialorder %v720, %v722
        %v724 = vsel %vm723, %v719, inf
        %725 = vmin.xlane.f32.xlu0 %v724
        %v726 = vpop.xlane.xlu0 %725
        %v727 = vcvt.f32.s32 %v726
        %v728 = vcvt.f32.s32 %v722
        %v729 = vshll.u32 %v728, 16
        %v730 = vadd.s32 %v729, %v727
        %v731 = vand.u32 %v686, 65535
        %v732 = vshra.s32 %v686, 16
        %v733 = vcvt.s32.f32 %v731
        %v734 = vcvt.s32.f32 %v732
        %735 = vmin.xlane.f32.xlu0 %v734
        %v736 = vpop.xlane.xlu0 %735
        %vm737 = vcmp.eq.f32.partialorder %v734, %v736
        %v738 = vsel %vm737, %v733, inf
        %739 = vmin.xlane.f32.xlu0 %v738
        %v740 = vpop.xlane.xlu0 %739
        %v741 = vcvt.f32.s32 %v740
        %v742 = vcvt.f32.s32 %v736
        %v743 = vshll.u32 %v742, 16
        %v744 = vadd.s32 %v743, %v741
        %v745 = vand.u32 %v687, 65535
        %v746 = vshra.s32 %v687, 16
        %v747 = vcvt.s32.f32 %v745
        %v748 = vcvt.s32.f32 %v746
        %749 = vmin.xlane.f32.xlu0 %v748
        %v750 = vpop.xlane.xlu0 %749
        %vm751 = vcmp.eq.f32.partialorder %v748, %v750
        %v752 = vsel %vm751, %v747, inf
        %753 = vmin.xlane.f32.xlu0 %v752
        %v754 = vpop.xlane.xlu0 %753
        %v755 = vcvt.f32.s32 %v754
        %v756 = vcvt.f32.s32 %v750
        %v757 = vshll.u32 %v756, 16
        %v758 = vadd.s32 %v757, %v755
        %v759 = vand.u32 %v688, 65535
        %v760 = vshra.s32 %v688, 16
        %v761 = vcvt.s32.f32 %v759
        %v762 = vcvt.s32.f32 %v760
        %763 = vmin.xlane.f32.xlu0 %v762
        %v764 = vpop.xlane.xlu0 %763
        %vm765 = vcmp.eq.f32.partialorder %v762, %v764
        %v766 = vsel %vm765, %v761, inf
        %767 = vmin.xlane.f32.xlu0 %v766
        %v768 = vpop.xlane.xlu0 %767
        %v769 = vcvt.f32.s32 %v768
        %v770 = vcvt.f32.s32 %v764
        %v771 = vshll.u32 %v770, 16
        %v772 = vadd.s32 %v771, %v769
        %vm773 = vcmp.eq.s32.totalorder %v683, %v702
        %vm774 = vcmp.eq.s32.totalorder %v684, %v716
        %vm775 = vcmp.eq.s32.totalorder %v685, %v730
        %vm776 = vcmp.eq.s32.totalorder %v686, %v744
        %vm777 = vcmp.eq.s32.totalorder %v687, %v758
        %vm778 = vcmp.eq.s32.totalorder %v688, %v772
        %v779 = vsel %vm773, -inf, %v659
        %v780 = vsel %vm774, -inf, %v660
        %v781 = vsel %vm775, -inf, %v661
        %v782 = vsel %vm776, -inf, %v662
        %v783 = vsel %vm777, -inf, %v663
        %v784 = vsel %vm778, -inf, %v664
        %785 = vmax.xlane.f32.xlu0 %v779
        %v786 = vpop.xlane.xlu0 %785
        %787 = vmax.xlane.f32.xlu0 %v780
        %v788 = vpop.xlane.xlu0 %787
        %789 = vmax.xlane.f32.xlu0 %v781
        %v790 = vpop.xlane.xlu0 %789
        %791 = vmax.xlane.f32.xlu0 %v782
        %v792 = vpop.xlane.xlu0 %791
        %793 = vmax.xlane.f32.xlu0 %v783
        %v794 = vpop.xlane.xlu0 %793
        %795 = vmax.xlane.f32.xlu0 %v784
        %v796 = vpop.xlane.xlu0 %795
        %vm797 = vcmp.eq.f32.partialorder %v779, %v786
        %vm798 = vcmp.eq.f32.partialorder %v780, %v788
        %vm799 = vcmp.eq.f32.partialorder %v781, %v790
        %vm800 = vcmp.eq.f32.partialorder %v782, %v792
        %vm801 = vcmp.eq.f32.partialorder %v783, %v794
        %vm802 = vcmp.eq.f32.partialorder %v784, %v796
        %v803 = vsel %vm797, %v415, 2147483647
        %v804 = vsel %vm798, %v415, 2147483647
        %v805 = vsel %vm799, %v415, 2147483647
        %v806 = vsel %vm800, %v415, 2147483647
        %v807 = vsel %vm801, %v415, 2147483647
        %v808 = vsel %vm802, %v415, 2147483647
        %v809 = vand.u32 %v803, 65535
        %v810 = vshra.s32 %v803, 16
        %v811 = vcvt.s32.f32 %v809
        %v812 = vcvt.s32.f32 %v810
        %813 = vmin.xlane.f32.xlu0 %v812
        %v814 = vpop.xlane.xlu0 %813
        %vm815 = vcmp.eq.f32.partialorder %v812, %v814
        %v816 = vsel %vm815, %v811, inf
        %817 = vmin.xlane.f32.xlu0 %v816
        %v818 = vpop.xlane.xlu0 %817
        %v819 = vcvt.f32.s32 %v818
        %v820 = vcvt.f32.s32 %v814
        %v821 = vshll.u32 %v820, 16
        %v822 = vadd.s32 %v821, %v819
        %v823 = vand.u32 %v804, 65535
        %v824 = vshra.s32 %v804, 16
        %v825 = vcvt.s32.f32 %v823
        %v826 = vcvt.s32.f32 %v824
        %827 = vmin.xlane.f32.xlu0 %v826
        %v828 = vpop.xlane.xlu0 %827
        %vm829 = vcmp.eq.f32.partialorder %v826, %v828
        %v830 = vsel %vm829, %v825, inf
        %831 = vmin.xlane.f32.xlu0 %v830
        %v832 = vpop.xlane.xlu0 %831
        %v833 = vcvt.f32.s32 %v832
        %v834 = vcvt.f32.s32 %v828
        %v835 = vshll.u32 %v834, 16
        %v836 = vadd.s32 %v835, %v833
        %v837 = vand.u32 %v805, 65535
        %v838 = vshra.s32 %v805, 16
        %v839 = vcvt.s32.f32 %v837
        %v840 = vcvt.s32.f32 %v838
        %841 = vmin.xlane.f32.xlu0 %v840
        %v842 = vpop.xlane.xlu0 %841
        %vm843 = vcmp.eq.f32.partialorder %v840, %v842
        %v844 = vsel %vm843, %v839, inf
        %845 = vmin.xlane.f32.xlu0 %v844
        %v846 = vpop.xlane.xlu0 %845
        %v847 = vcvt.f32.s32 %v846
        %v848 = vcvt.f32.s32 %v842
        %v849 = vshll.u32 %v848, 16
        %v850 = vadd.s32 %v849, %v847
        %v851 = vand.u32 %v806, 65535
        %v852 = vshra.s32 %v806, 16
        %v853 = vcvt.s32.f32 %v851
        %v854 = vcvt.s32.f32 %v852
        %855 = vmin.xlane.f32.xlu0 %v854
        %v856 = vpop.xlane.xlu0 %855
        %vm857 = vcmp.eq.f32.partialorder %v854, %v856
        %v858 = vsel %vm857, %v853, inf
        %859 = vmin.xlane.f32.xlu0 %v858
        %v860 = vpop.xlane.xlu0 %859
        %v861 = vcvt.f32.s32 %v860
        %v862 = vcvt.f32.s32 %v856
        %v863 = vshll.u32 %v862, 16
        %v864 = vadd.s32 %v863, %v861
        %v865 = vand.u32 %v807, 65535
        %v866 = vshra.s32 %v807, 16
        %v867 = vcvt.s32.f32 %v865
        %v868 = vcvt.s32.f32 %v866
        %869 = vmin.xlane.f32.xlu0 %v868
        %v870 = vpop.xlane.xlu0 %869
        %vm871 = vcmp.eq.f32.partialorder %v868, %v870
        %v872 = vsel %vm871, %v867, inf
        %873 = vmin.xlane.f32.xlu0 %v872
        %v874 = vpop.xlane.xlu0 %873
        %v875 = vcvt.f32.s32 %v874
        %v876 = vcvt.f32.s32 %v870
        %v877 = vshll.u32 %v876, 16
        %v878 = vadd.s32 %v877, %v875
        %v879 = vand.u32 %v808, 65535
        %v880 = vshra.s32 %v808, 16
        %v881 = vcvt.s32.f32 %v879
        %v882 = vcvt.s32.f32 %v880
        %883 = vmin.xlane.f32.xlu0 %v882
        %v884 = vpop.xlane.xlu0 %883
        %vm885 = vcmp.eq.f32.partialorder %v882, %v884
        %v886 = vsel %vm885, %v881, inf
        %887 = vmin.xlane.f32.xlu0 %v886
        %v888 = vpop.xlane.xlu0 %887
        %v889 = vcvt.f32.s32 %v888
        %v890 = vcvt.f32.s32 %v884
        %v891 = vshll.u32 %v890, 16
        %v892 = vadd.s32 %v891, %v889
        %vm893 = vcmp.eq.s32.totalorder %v803, %v822
        %vm894 = vcmp.eq.s32.totalorder %v804, %v836
        %vm895 = vcmp.eq.s32.totalorder %v805, %v850
        %vm896 = vcmp.eq.s32.totalorder %v806, %v864
        %vm897 = vcmp.eq.s32.totalorder %v807, %v878
        %vm898 = vcmp.eq.s32.totalorder %v808, %v892
        %v899 = vsel %vm893, -inf, %v779
        %v900 = vsel %vm894, -inf, %v780
        %v901 = vsel %vm895, -inf, %v781
        %v902 = vsel %vm896, -inf, %v782
        %v903 = vsel %vm897, -inf, %v783
        %v904 = vsel %vm898, -inf, %v784
        %905 = vmax.xlane.f32.xlu0 %v899
        %v906 = vpop.xlane.xlu0 %905
        %907 = vmax.xlane.f32.xlu0 %v900
        %v908 = vpop.xlane.xlu0 %907
        %909 = vmax.xlane.f32.xlu0 %v901
        %v910 = vpop.xlane.xlu0 %909
        %911 = vmax.xlane.f32.xlu0 %v902
        %v912 = vpop.xlane.xlu0 %911
        %913 = vmax.xlane.f32.xlu0 %v903
        %v914 = vpop.xlane.xlu0 %913
        %915 = vmax.xlane.f32.xlu0 %v904
        %v916 = vpop.xlane.xlu0 %915
        %vm917 = vcmp.eq.f32.partialorder %v899, %v906
        %vm918 = vcmp.eq.f32.partialorder %v900, %v908
        %vm919 = vcmp.eq.f32.partialorder %v901, %v910
        %vm920 = vcmp.eq.f32.partialorder %v902, %v912
        %vm921 = vcmp.eq.f32.partialorder %v903, %v914
        %vm922 = vcmp.eq.f32.partialorder %v904, %v916
        %v923 = vsel %vm917, %v415, 2147483647
        %v924 = vsel %vm918, %v415, 2147483647
        %v925 = vsel %vm919, %v415, 2147483647
        %v926 = vsel %vm920, %v415, 2147483647
        %v927 = vsel %vm921, %v415, 2147483647
        %v928 = vsel %vm922, %v415, 2147483647
        %v929 = vand.u32 %v923, 65535
        %v930 = vshra.s32 %v923, 16
        %v931 = vcvt.s32.f32 %v929
        %v932 = vcvt.s32.f32 %v930
        %933 = vmin.xlane.f32.xlu0 %v932
        %v934 = vpop.xlane.xlu0 %933
        %vm935 = vcmp.eq.f32.partialorder %v932, %v934
        %v936 = vsel %vm935, %v931, inf
        %937 = vmin.xlane.f32.xlu0 %v936
        %v938 = vpop.xlane.xlu0 %937
        %v939 = vcvt.f32.s32 %v938
        %v940 = vcvt.f32.s32 %v934
        %v941 = vshll.u32 %v940, 16
        %v942 = vadd.s32 %v941, %v939
        %v943 = vand.u32 %v924, 65535
        %v944 = vshra.s32 %v924, 16
        %v945 = vcvt.s32.f32 %v943
        %v946 = vcvt.s32.f32 %v944
        %947 = vmin.xlane.f32.xlu0 %v946
        %v948 = vpop.xlane.xlu0 %947
        %vm949 = vcmp.eq.f32.partialorder %v946, %v948
        %v950 = vsel %vm949, %v945, inf
        %951 = vmin.xlane.f32.xlu0 %v950
        %v952 = vpop.xlane.xlu0 %951
        %v953 = vcvt.f32.s32 %v952
        %v954 = vcvt.f32.s32 %v948
        %v955 = vshll.u32 %v954, 16
        %v956 = vadd.s32 %v955, %v953
        %v957 = vand.u32 %v925, 65535
        %v958 = vshra.s32 %v925, 16
        %v959 = vcvt.s32.f32 %v957
        %v960 = vcvt.s32.f32 %v958
        %961 = vmin.xlane.f32.xlu0 %v960
        %v962 = vpop.xlane.xlu0 %961
        %vm963 = vcmp.eq.f32.partialorder %v960, %v962
        %v964 = vsel %vm963, %v959, inf
        %965 = vmin.xlane.f32.xlu0 %v964
        %v966 = vpop.xlane.xlu0 %965
        %v967 = vcvt.f32.s32 %v966
        %v968 = vcvt.f32.s32 %v962
        %v969 = vshll.u32 %v968, 16
        %v970 = vadd.s32 %v969, %v967
        %v971 = vand.u32 %v926, 65535
        %v972 = vshra.s32 %v926, 16
        %v973 = vcvt.s32.f32 %v971
        %v974 = vcvt.s32.f32 %v972
        %975 = vmin.xlane.f32.xlu0 %v974
        %v976 = vpop.xlane.xlu0 %975
        %vm977 = vcmp.eq.f32.partialorder %v974, %v976
        %v978 = vsel %vm977, %v973, inf
        %979 = vmin.xlane.f32.xlu0 %v978
        %v980 = vpop.xlane.xlu0 %979
        %v981 = vcvt.f32.s32 %v980
        %v982 = vcvt.f32.s32 %v976
        %v983 = vshll.u32 %v982, 16
        %v984 = vadd.s32 %v983, %v981
        %v985 = vand.u32 %v927, 65535
        %v986 = vshra.s32 %v927, 16
        %v987 = vcvt.s32.f32 %v985
        %v988 = vcvt.s32.f32 %v986
        %989 = vmin.xlane.f32.xlu0 %v988
        %v990 = vpop.xlane.xlu0 %989
        %vm991 = vcmp.eq.f32.partialorder %v988, %v990
        %v992 = vsel %vm991, %v987, inf
        %993 = vmin.xlane.f32.xlu0 %v992
        %v994 = vpop.xlane.xlu0 %993
        %v995 = vcvt.f32.s32 %v994
        %v996 = vcvt.f32.s32 %v990
        %v997 = vshll.u32 %v996, 16
        %v998 = vadd.s32 %v997, %v995
        %v999 = vand.u32 %v928, 65535
        %v1000 = vshra.s32 %v928, 16
        %v1001 = vcvt.s32.f32 %v999
        %v1002 = vcvt.s32.f32 %v1000
        %1003 = vmin.xlane.f32.xlu0 %v1002
        %v1004 = vpop.xlane.xlu0 %1003
        %vm1005 = vcmp.eq.f32.partialorder %v1002, %v1004
        %v1006 = vsel %vm1005, %v1001, inf
        %1007 = vmin.xlane.f32.xlu0 %v1006
        %v1008 = vpop.xlane.xlu0 %1007
        %v1009 = vcvt.f32.s32 %v1008
        %v1010 = vcvt.f32.s32 %v1004
        %v1011 = vshll.u32 %v1010, 16
        %v1012 = vadd.s32 %v1011, %v1009
        %vm1013 = vcmp.eq.s32.totalorder %v923, %v942
        %vm1014 = vcmp.eq.s32.totalorder %v924, %v956
        %vm1015 = vcmp.eq.s32.totalorder %v925, %v970
        %vm1016 = vcmp.eq.s32.totalorder %v926, %v984
        %vm1017 = vcmp.eq.s32.totalorder %v927, %v998
        %vm1018 = vcmp.eq.s32.totalorder %v928, %v1012
        %v1019 = vsel %vm1013, -inf, %v899
        %v1020 = vsel %vm1014, -inf, %v900
        %v1021 = vsel %vm1015, -inf, %v901
        %v1022 = vsel %vm1016, -inf, %v902
        %v1023 = vsel %vm1017, -inf, %v903
        %v1024 = vsel %vm1018, -inf, %v904
        %1025 = vmax.xlane.f32.xlu0 %v1019
        %v1026 = vpop.xlane.xlu0 %1025
        %1027 = vmax.xlane.f32.xlu0 %v1020
        %v1028 = vpop.xlane.xlu0 %1027
        %1029 = vmax.xlane.f32.xlu0 %v1021
        %v1030 = vpop.xlane.xlu0 %1029
        %1031 = vmax.xlane.f32.xlu0 %v1022
        %v1032 = vpop.xlane.xlu0 %1031
        %1033 = vmax.xlane.f32.xlu0 %v1023
        %v1034 = vpop.xlane.xlu0 %1033
        %1035 = vmax.xlane.f32.xlu0 %v1024
        %v1036 = vpop.xlane.xlu0 %1035
        %vm1037 = vcmp.eq.f32.partialorder %v1019, %v1026
        %vm1038 = vcmp.eq.f32.partialorder %v1020, %v1028
        %vm1039 = vcmp.eq.f32.partialorder %v1021, %v1030
        %vm1040 = vcmp.eq.f32.partialorder %v1022, %v1032
        %vm1041 = vcmp.eq.f32.partialorder %v1023, %v1034
        %vm1042 = vcmp.eq.f32.partialorder %v1024, %v1036
        %v1043 = vsel %vm1037, %v415, 2147483647
        %v1044 = vsel %vm1038, %v415, 2147483647
        %v1045 = vsel %vm1039, %v415, 2147483647
        %v1046 = vsel %vm1040, %v415, 2147483647
        %v1047 = vsel %vm1041, %v415, 2147483647
        %v1048 = vsel %vm1042, %v415, 2147483647
        %v1049 = vand.u32 %v1043, 65535
        %v1050 = vshra.s32 %v1043, 16
        %v1051 = vcvt.s32.f32 %v1049
        %v1052 = vcvt.s32.f32 %v1050
        %1053 = vmin.xlane.f32.xlu0 %v1052
        %v1054 = vpop.xlane.xlu0 %1053
        %vm1055 = vcmp.eq.f32.partialorder %v1052, %v1054
        %v1056 = vsel %vm1055, %v1051, inf
        %1057 = vmin.xlane.f32.xlu0 %v1056
        %v1058 = vpop.xlane.xlu0 %1057
        %v1059 = vcvt.f32.s32 %v1058
        %v1060 = vcvt.f32.s32 %v1054
        %v1061 = vshll.u32 %v1060, 16
        %v1062 = vadd.s32 %v1061, %v1059
        %v1063 = vand.u32 %v1044, 65535
        %v1064 = vshra.s32 %v1044, 16
        %v1065 = vcvt.s32.f32 %v1063
        %v1066 = vcvt.s32.f32 %v1064
        %1067 = vmin.xlane.f32.xlu0 %v1066
        %v1068 = vpop.xlane.xlu0 %1067
        %vm1069 = vcmp.eq.f32.partialorder %v1066, %v1068
        %v1070 = vsel %vm1069, %v1065, inf
        %1071 = vmin.xlane.f32.xlu0 %v1070
        %v1072 = vpop.xlane.xlu0 %1071
        %v1073 = vcvt.f32.s32 %v1072
        %v1074 = vcvt.f32.s32 %v1068
        %v1075 = vshll.u32 %v1074, 16
        %v1076 = vadd.s32 %v1075, %v1073
        %v1077 = vand.u32 %v1045, 65535
        %v1078 = vshra.s32 %v1045, 16
        %v1079 = vcvt.s32.f32 %v1077
        %v1080 = vcvt.s32.f32 %v1078
        %1081 = vmin.xlane.f32.xlu0 %v1080
        %v1082 = vpop.xlane.xlu0 %1081
        %vm1083 = vcmp.eq.f32.partialorder %v1080, %v1082
        %v1084 = vsel %vm1083, %v1079, inf
        %1085 = vmin.xlane.f32.xlu0 %v1084
        %v1086 = vpop.xlane.xlu0 %1085
        %v1087 = vcvt.f32.s32 %v1086
        %v1088 = vcvt.f32.s32 %v1082
        %v1089 = vshll.u32 %v1088, 16
        %v1090 = vadd.s32 %v1089, %v1087
        %v1091 = vand.u32 %v1046, 65535
        %v1092 = vshra.s32 %v1046, 16
        %v1093 = vcvt.s32.f32 %v1091
        %v1094 = vcvt.s32.f32 %v1092
        %1095 = vmin.xlane.f32.xlu0 %v1094
        %v1096 = vpop.xlane.xlu0 %1095
        %vm1097 = vcmp.eq.f32.partialorder %v1094, %v1096
        %v1098 = vsel %vm1097, %v1093, inf
        %1099 = vmin.xlane.f32.xlu0 %v1098
        %v1100 = vpop.xlane.xlu0 %1099
        %v1101 = vcvt.f32.s32 %v1100
        %v1102 = vcvt.f32.s32 %v1096
        %v1103 = vshll.u32 %v1102, 16
        %v1104 = vadd.s32 %v1103, %v1101
        %v1105 = vand.u32 %v1047, 65535
        %v1106 = vshra.s32 %v1047, 16
        %v1107 = vcvt.s32.f32 %v1105
        %v1108 = vcvt.s32.f32 %v1106
        %1109 = vmin.xlane.f32.xlu0 %v1108
        %v1110 = vpop.xlane.xlu0 %1109
        %vm1111 = vcmp.eq.f32.partialorder %v1108, %v1110
        %v1112 = vsel %vm1111, %v1107, inf
        %1113 = vmin.xlane.f32.xlu0 %v1112
        %v1114 = vpop.xlane.xlu0 %1113
        %v1115 = vcvt.f32.s32 %v1114
        %v1116 = vcvt.f32.s32 %v1110
        %v1117 = vshll.u32 %v1116, 16
        %v1118 = vadd.s32 %v1117, %v1115
        %v1119 = vand.u32 %v1048, 65535
        %v1120 = vshra.s32 %v1048, 16
        %v1121 = vcvt.s32.f32 %v1119
        %v1122 = vcvt.s32.f32 %v1120
        %1123 = vmin.xlane.f32.xlu0 %v1122
        %v1124 = vpop.xlane.xlu0 %1123
        %vm1125 = vcmp.eq.f32.partialorder %v1122, %v1124
        %v1126 = vsel %vm1125, %v1121, inf
        %1127 = vmin.xlane.f32.xlu0 %v1126
        %v1128 = vpop.xlane.xlu0 %1127
        %v1129 = vcvt.f32.s32 %v1128
        %v1130 = vcvt.f32.s32 %v1124
        %v1131 = vshll.u32 %v1130, 16
        %v1132 = vadd.s32 %v1131, %v1129
        %vm1133 = vcmp.eq.s32.totalorder %v1043, %v1062
        %vm1134 = vcmp.eq.s32.totalorder %v1044, %v1076
        %vm1135 = vcmp.eq.s32.totalorder %v1045, %v1090
        %vm1136 = vcmp.eq.s32.totalorder %v1046, %v1104
        %vm1137 = vcmp.eq.s32.totalorder %v1047, %v1118
        %vm1138 = vcmp.eq.s32.totalorder %v1048, %v1132
        %v1139 = vsel %vm1133, -inf, %v1019
        %v1140 = vsel %vm1134, -inf, %v1020
        %v1141 = vsel %vm1135, -inf, %v1021
        %v1142 = vsel %vm1136, -inf, %v1022
        %v1143 = vsel %vm1137, -inf, %v1023
        %v1144 = vsel %vm1138, -inf, %v1024
        %1145 = vmax.xlane.f32.xlu0 %v1139
        %v1146 = vpop.xlane.xlu0 %1145
        %1147 = vmax.xlane.f32.xlu0 %v1140
        %v1148 = vpop.xlane.xlu0 %1147
        %1149 = vmax.xlane.f32.xlu0 %v1141
        %v1150 = vpop.xlane.xlu0 %1149
        %1151 = vmax.xlane.f32.xlu0 %v1142
        %v1152 = vpop.xlane.xlu0 %1151
        %1153 = vmax.xlane.f32.xlu0 %v1143
        %v1154 = vpop.xlane.xlu0 %1153
        %1155 = vmax.xlane.f32.xlu0 %v1144
        %v1156 = vpop.xlane.xlu0 %1155
        %vm1157 = vcmp.eq.f32.partialorder %v1139, %v1146
        %vm1158 = vcmp.eq.f32.partialorder %v1140, %v1148
        %vm1159 = vcmp.eq.f32.partialorder %v1141, %v1150
        %vm1160 = vcmp.eq.f32.partialorder %v1142, %v1152
        %vm1161 = vcmp.eq.f32.partialorder %v1143, %v1154
        %vm1162 = vcmp.eq.f32.partialorder %v1144, %v1156
        %v1163 = vsel %vm1157, %v415, 2147483647
        %v1164 = vsel %vm1158, %v415, 2147483647
        %v1165 = vsel %vm1159, %v415, 2147483647
        %v1166 = vsel %vm1160, %v415, 2147483647
        %v1167 = vsel %vm1161, %v415, 2147483647
        %v1168 = vsel %vm1162, %v415, 2147483647
        %v1169 = vand.u32 %v1163, 65535
        %v1170 = vshra.s32 %v1163, 16
        %v1171 = vcvt.s32.f32 %v1169
        %v1172 = vcvt.s32.f32 %v1170
        %1173 = vmin.xlane.f32.xlu0 %v1172
        %v1174 = vpop.xlane.xlu0 %1173
        %vm1175 = vcmp.eq.f32.partialorder %v1172, %v1174
        %v1176 = vsel %vm1175, %v1171, inf
        %1177 = vmin.xlane.f32.xlu0 %v1176
        %v1178 = vpop.xlane.xlu0 %1177
        %v1179 = vcvt.f32.s32 %v1178
        %v1180 = vcvt.f32.s32 %v1174
        %v1181 = vshll.u32 %v1180, 16
        %v1182 = vadd.s32 %v1181, %v1179
        %v1183 = vand.u32 %v1164, 65535
        %v1184 = vshra.s32 %v1164, 16
        %v1185 = vcvt.s32.f32 %v1183
        %v1186 = vcvt.s32.f32 %v1184
        %1187 = vmin.xlane.f32.xlu0 %v1186
        %v1188 = vpop.xlane.xlu0 %1187
        %vm1189 = vcmp.eq.f32.partialorder %v1186, %v1188
        %v1190 = vsel %vm1189, %v1185, inf
        %1191 = vmin.xlane.f32.xlu0 %v1190
        %v1192 = vpop.xlane.xlu0 %1191
        %v1193 = vcvt.f32.s32 %v1192
        %v1194 = vcvt.f32.s32 %v1188
        %v1195 = vshll.u32 %v1194, 16
        %v1196 = vadd.s32 %v1195, %v1193
        %v1197 = vand.u32 %v1165, 65535
        %v1198 = vshra.s32 %v1165, 16
        %v1199 = vcvt.s32.f32 %v1197
        %v1200 = vcvt.s32.f32 %v1198
        %1201 = vmin.xlane.f32.xlu0 %v1200
        %v1202 = vpop.xlane.xlu0 %1201
        %vm1203 = vcmp.eq.f32.partialorder %v1200, %v1202
        %v1204 = vsel %vm1203, %v1199, inf
        %1205 = vmin.xlane.f32.xlu0 %v1204
        %v1206 = vpop.xlane.xlu0 %1205
        %v1207 = vcvt.f32.s32 %v1206
        %v1208 = vcvt.f32.s32 %v1202
        %v1209 = vshll.u32 %v1208, 16
        %v1210 = vadd.s32 %v1209, %v1207
        %v1211 = vand.u32 %v1166, 65535
        %v1212 = vshra.s32 %v1166, 16
        %v1213 = vcvt.s32.f32 %v1211
        %v1214 = vcvt.s32.f32 %v1212
        %1215 = vmin.xlane.f32.xlu0 %v1214
        %v1216 = vpop.xlane.xlu0 %1215
        %vm1217 = vcmp.eq.f32.partialorder %v1214, %v1216
        %v1218 = vsel %vm1217, %v1213, inf
        %1219 = vmin.xlane.f32.xlu0 %v1218
        %v1220 = vpop.xlane.xlu0 %1219
        %v1221 = vcvt.f32.s32 %v1220
        %v1222 = vcvt.f32.s32 %v1216
        %v1223 = vshll.u32 %v1222, 16
        %v1224 = vadd.s32 %v1223, %v1221
        %v1225 = vand.u32 %v1167, 65535
        %v1226 = vshra.s32 %v1167, 16
        %v1227 = vcvt.s32.f32 %v1225
        %v1228 = vcvt.s32.f32 %v1226
        %1229 = vmin.xlane.f32.xlu0 %v1228
        %v1230 = vpop.xlane.xlu0 %1229
        %vm1231 = vcmp.eq.f32.partialorder %v1228, %v1230
        %v1232 = vsel %vm1231, %v1227, inf
        %1233 = vmin.xlane.f32.xlu0 %v1232
        %v1234 = vpop.xlane.xlu0 %1233
        %v1235 = vcvt.f32.s32 %v1234
        %v1236 = vcvt.f32.s32 %v1230
        %v1237 = vshll.u32 %v1236, 16
        %v1238 = vadd.s32 %v1237, %v1235
        %v1239 = vand.u32 %v1168, 65535
        %v1240 = vshra.s32 %v1168, 16
        %v1241 = vcvt.s32.f32 %v1239
        %v1242 = vcvt.s32.f32 %v1240
        %1243 = vmin.xlane.f32.xlu0 %v1242
        %v1244 = vpop.xlane.xlu0 %1243
        %vm1245 = vcmp.eq.f32.partialorder %v1242, %v1244
        %v1246 = vsel %vm1245, %v1241, inf
        %1247 = vmin.xlane.f32.xlu0 %v1246
        %v1248 = vpop.xlane.xlu0 %1247
        %v1249 = vcvt.f32.s32 %v1248
        %v1250 = vcvt.f32.s32 %v1244
        %v1251 = vshll.u32 %v1250, 16
        %v1252 = vadd.s32 %v1251, %v1249
        %vm1253 = vcmp.eq.s32.totalorder %v1163, %v1182
        %vm1254 = vcmp.eq.s32.totalorder %v1164, %v1196
        %vm1255 = vcmp.eq.s32.totalorder %v1165, %v1210
        %vm1256 = vcmp.eq.s32.totalorder %v1166, %v1224
        %vm1257 = vcmp.eq.s32.totalorder %v1167, %v1238
        %vm1258 = vcmp.eq.s32.totalorder %v1168, %v1252
        %v1259 = vsel %vm1253, -inf, %v1139
        %v1260 = vsel %vm1254, -inf, %v1140
        %v1261 = vsel %vm1255, -inf, %v1141
        %v1262 = vsel %vm1256, -inf, %v1142
        %v1263 = vsel %vm1257, -inf, %v1143
        %v1264 = vsel %vm1258, -inf, %v1144
        %1265 = vmax.xlane.f32.xlu0 %v1259
        %v1266 = vpop.xlane.xlu0 %1265
        %1267 = vmax.xlane.f32.xlu0 %v1260
        %v1268 = vpop.xlane.xlu0 %1267
        %1269 = vmax.xlane.f32.xlu0 %v1261
        %v1270 = vpop.xlane.xlu0 %1269
        %1271 = vmax.xlane.f32.xlu0 %v1262
        %v1272 = vpop.xlane.xlu0 %1271
        %1273 = vmax.xlane.f32.xlu0 %v1263
        %v1274 = vpop.xlane.xlu0 %1273
        %1275 = vmax.xlane.f32.xlu0 %v1264
        %v1276 = vpop.xlane.xlu0 %1275
        %vm1277 = vcmp.eq.f32.partialorder %v1259, %v1266
        %vm1278 = vcmp.eq.f32.partialorder %v1260, %v1268
        %vm1279 = vcmp.eq.f32.partialorder %v1261, %v1270
        %vm1280 = vcmp.eq.f32.partialorder %v1262, %v1272
        %vm1281 = vcmp.eq.f32.partialorder %v1263, %v1274
        %vm1282 = vcmp.eq.f32.partialorder %v1264, %v1276
        %v1283 = vsel %vm1277, %v415, 2147483647
        %v1284 = vsel %vm1278, %v415, 2147483647
        %v1285 = vsel %vm1279, %v415, 2147483647
        %v1286 = vsel %vm1280, %v415, 2147483647
        %v1287 = vsel %vm1281, %v415, 2147483647
        %v1288 = vsel %vm1282, %v415, 2147483647
        %v1289 = vand.u32 %v1283, 65535
        %v1290 = vshra.s32 %v1283, 16
        %v1291 = vcvt.s32.f32 %v1289
        %v1292 = vcvt.s32.f32 %v1290
        %1293 = vmin.xlane.f32.xlu0 %v1292
        %v1294 = vpop.xlane.xlu0 %1293
        %vm1295 = vcmp.eq.f32.partialorder %v1292, %v1294
        %v1296 = vsel %vm1295, %v1291, inf
        %1297 = vmin.xlane.f32.xlu0 %v1296
        %v1298 = vpop.xlane.xlu0 %1297
        %v1299 = vcvt.f32.s32 %v1298
        %v1300 = vcvt.f32.s32 %v1294
        %v1301 = vshll.u32 %v1300, 16
        %v1302 = vadd.s32 %v1301, %v1299
        %v1303 = vand.u32 %v1284, 65535
        %v1304 = vshra.s32 %v1284, 16
        %v1305 = vcvt.s32.f32 %v1303
        %v1306 = vcvt.s32.f32 %v1304
        %1307 = vmin.xlane.f32.xlu0 %v1306
        %v1308 = vpop.xlane.xlu0 %1307
        %vm1309 = vcmp.eq.f32.partialorder %v1306, %v1308
        %v1310 = vsel %vm1309, %v1305, inf
        %1311 = vmin.xlane.f32.xlu0 %v1310
        %v1312 = vpop.xlane.xlu0 %1311
        %v1313 = vcvt.f32.s32 %v1312
        %v1314 = vcvt.f32.s32 %v1308
        %v1315 = vshll.u32 %v1314, 16
        %v1316 = vadd.s32 %v1315, %v1313
        %v1317 = vand.u32 %v1285, 65535
        %v1318 = vshra.s32 %v1285, 16
        %v1319 = vcvt.s32.f32 %v1317
        %v1320 = vcvt.s32.f32 %v1318
        %1321 = vmin.xlane.f32.xlu0 %v1320
        %v1322 = vpop.xlane.xlu0 %1321
        %vm1323 = vcmp.eq.f32.partialorder %v1320, %v1322
        %v1324 = vsel %vm1323, %v1319, inf
        %1325 = vmin.xlane.f32.xlu0 %v1324
        %v1326 = vpop.xlane.xlu0 %1325
        %v1327 = vcvt.f32.s32 %v1326
        %v1328 = vcvt.f32.s32 %v1322
        %v1329 = vshll.u32 %v1328, 16
        %v1330 = vadd.s32 %v1329, %v1327
        %v1331 = vand.u32 %v1286, 65535
        %v1332 = vshra.s32 %v1286, 16
        %v1333 = vcvt.s32.f32 %v1331
        %v1334 = vcvt.s32.f32 %v1332
        %1335 = vmin.xlane.f32.xlu0 %v1334
        %v1336 = vpop.xlane.xlu0 %1335
        %vm1337 = vcmp.eq.f32.partialorder %v1334, %v1336
        %v1338 = vsel %vm1337, %v1333, inf
        %1339 = vmin.xlane.f32.xlu0 %v1338
        %v1340 = vpop.xlane.xlu0 %1339
        %v1341 = vcvt.f32.s32 %v1340
        %v1342 = vcvt.f32.s32 %v1336
        %v1343 = vshll.u32 %v1342, 16
        %v1344 = vadd.s32 %v1343, %v1341
        %v1345 = vand.u32 %v1287, 65535
        %v1346 = vshra.s32 %v1287, 16
        %v1347 = vcvt.s32.f32 %v1345
        %v1348 = vcvt.s32.f32 %v1346
        %1349 = vmin.xlane.f32.xlu0 %v1348
        %v1350 = vpop.xlane.xlu0 %1349
        %vm1351 = vcmp.eq.f32.partialorder %v1348, %v1350
        %v1352 = vsel %vm1351, %v1347, inf
        %1353 = vmin.xlane.f32.xlu0 %v1352
        %v1354 = vpop.xlane.xlu0 %1353
        %v1355 = vcvt.f32.s32 %v1354
        %v1356 = vcvt.f32.s32 %v1350
        %v1357 = vshll.u32 %v1356, 16
        %v1358 = vadd.s32 %v1357, %v1355
        %v1359 = vand.u32 %v1288, 65535
        %v1360 = vshra.s32 %v1288, 16
        %v1361 = vcvt.s32.f32 %v1359
        %v1362 = vcvt.s32.f32 %v1360
        %1363 = vmin.xlane.f32.xlu0 %v1362
        %v1364 = vpop.xlane.xlu0 %1363
        %vm1365 = vcmp.eq.f32.partialorder %v1362, %v1364
        %v1366 = vsel %vm1365, %v1361, inf
        %1367 = vmin.xlane.f32.xlu0 %v1366
        %v1368 = vpop.xlane.xlu0 %1367
        %v1369 = vcvt.f32.s32 %v1368
        %v1370 = vcvt.f32.s32 %v1364
        %v1371 = vshll.u32 %v1370, 16
        %v1372 = vadd.s32 %v1371, %v1369
        %vm1373 = vcmp.eq.s32.totalorder %v1283, %v1302
        %vm1374 = vcmp.eq.s32.totalorder %v1284, %v1316
        %vm1375 = vcmp.eq.s32.totalorder %v1285, %v1330
        %vm1376 = vcmp.eq.s32.totalorder %v1286, %v1344
        %vm1377 = vcmp.eq.s32.totalorder %v1287, %v1358
        %vm1378 = vcmp.eq.s32.totalorder %v1288, %v1372
        %v1379 = vsel %vm1373, -inf, %v1259
        %v1380 = vsel %vm1374, -inf, %v1260
        %v1381 = vsel %vm1375, -inf, %v1261
        %v1382 = vsel %vm1376, -inf, %v1262
        %v1383 = vsel %vm1377, -inf, %v1263
        %v1384 = vsel %vm1378, -inf, %v1264
        %1385 = vmax.xlane.f32.xlu0 %v1379
        %v1386 = vpop.xlane.xlu0 %1385
        %1387 = vmax.xlane.f32.xlu0 %v1380
        %v1388 = vpop.xlane.xlu0 %1387
        %1389 = vmax.xlane.f32.xlu0 %v1381
        %v1390 = vpop.xlane.xlu0 %1389
        %1391 = vmax.xlane.f32.xlu0 %v1382
        %v1392 = vpop.xlane.xlu0 %1391
        %1393 = vmax.xlane.f32.xlu0 %v1383
        %v1394 = vpop.xlane.xlu0 %1393
        %1395 = vmax.xlane.f32.xlu0 %v1384
        %v1396 = vpop.xlane.xlu0 %1395
        %vm1397 = vcmp.eq.f32.partialorder %v1379, %v1386
        %vm1398 = vcmp.eq.f32.partialorder %v1380, %v1388
        %vm1399 = vcmp.eq.f32.partialorder %v1381, %v1390
        %vm1400 = vcmp.eq.f32.partialorder %v1382, %v1392
        %vm1401 = vcmp.eq.f32.partialorder %v1383, %v1394
        %vm1402 = vcmp.eq.f32.partialorder %v1384, %v1396
        %v1403 = vsel %vm1397, %v415, 2147483647
        %v1404 = vsel %vm1398, %v415, 2147483647
        %v1405 = vsel %vm1399, %v415, 2147483647
        %v1406 = vsel %vm1400, %v415, 2147483647
        %v1407 = vsel %vm1401, %v415, 2147483647
        %v1408 = vsel %vm1402, %v415, 2147483647
        %v1409 = vand.u32 %v1403, 65535
        %v1410 = vshra.s32 %v1403, 16
        %v1411 = vcvt.s32.f32 %v1409
        %v1412 = vcvt.s32.f32 %v1410
        %1413 = vmin.xlane.f32.xlu0 %v1412
        %v1414 = vpop.xlane.xlu0 %1413
        %vm1415 = vcmp.eq.f32.partialorder %v1412, %v1414
        %v1416 = vsel %vm1415, %v1411, inf
        %1417 = vmin.xlane.f32.xlu0 %v1416
        %v1418 = vpop.xlane.xlu0 %1417
        %v1419 = vcvt.f32.s32 %v1418
        %v1420 = vcvt.f32.s32 %v1414
        %v1421 = vshll.u32 %v1420, 16
        %v1422 = vadd.s32 %v1421, %v1419
        %v1423 = vand.u32 %v1404, 65535
        %v1424 = vshra.s32 %v1404, 16
        %v1425 = vcvt.s32.f32 %v1423
        %v1426 = vcvt.s32.f32 %v1424
        %1427 = vmin.xlane.f32.xlu0 %v1426
        %v1428 = vpop.xlane.xlu0 %1427
        %vm1429 = vcmp.eq.f32.partialorder %v1426, %v1428
        %v1430 = vsel %vm1429, %v1425, inf
        %1431 = vmin.xlane.f32.xlu0 %v1430
        %v1432 = vpop.xlane.xlu0 %1431
        %v1433 = vcvt.f32.s32 %v1432
        %v1434 = vcvt.f32.s32 %v1428
        %v1435 = vshll.u32 %v1434, 16
        %v1436 = vadd.s32 %v1435, %v1433
        %v1437 = vand.u32 %v1405, 65535
        %v1438 = vshra.s32 %v1405, 16
        %v1439 = vcvt.s32.f32 %v1437
        %v1440 = vcvt.s32.f32 %v1438
        %1441 = vmin.xlane.f32.xlu0 %v1440
        %v1442 = vpop.xlane.xlu0 %1441
        %vm1443 = vcmp.eq.f32.partialorder %v1440, %v1442
        %v1444 = vsel %vm1443, %v1439, inf
        %1445 = vmin.xlane.f32.xlu0 %v1444
        %v1446 = vpop.xlane.xlu0 %1445
        %v1447 = vcvt.f32.s32 %v1446
        %v1448 = vcvt.f32.s32 %v1442
        %v1449 = vshll.u32 %v1448, 16
        %v1450 = vadd.s32 %v1449, %v1447
        %v1451 = vand.u32 %v1406, 65535
        %v1452 = vshra.s32 %v1406, 16
        %v1453 = vcvt.s32.f32 %v1451
        %v1454 = vcvt.s32.f32 %v1452
        %1455 = vmin.xlane.f32.xlu0 %v1454
        %v1456 = vpop.xlane.xlu0 %1455
        %vm1457 = vcmp.eq.f32.partialorder %v1454, %v1456
        %v1458 = vsel %vm1457, %v1453, inf
        %1459 = vmin.xlane.f32.xlu0 %v1458
        %v1460 = vpop.xlane.xlu0 %1459
        %v1461 = vcvt.f32.s32 %v1460
        %v1462 = vcvt.f32.s32 %v1456
        %v1463 = vshll.u32 %v1462, 16
        %v1464 = vadd.s32 %v1463, %v1461
        %v1465 = vand.u32 %v1407, 65535
        %v1466 = vshra.s32 %v1407, 16
        %v1467 = vcvt.s32.f32 %v1465
        %v1468 = vcvt.s32.f32 %v1466
        %1469 = vmin.xlane.f32.xlu0 %v1468
        %v1470 = vpop.xlane.xlu0 %1469
        %vm1471 = vcmp.eq.f32.partialorder %v1468, %v1470
        %v1472 = vsel %vm1471, %v1467, inf
        %1473 = vmin.xlane.f32.xlu0 %v1472
        %v1474 = vpop.xlane.xlu0 %1473
        %v1475 = vcvt.f32.s32 %v1474
        %v1476 = vcvt.f32.s32 %v1470
        %v1477 = vshll.u32 %v1476, 16
        %v1478 = vadd.s32 %v1477, %v1475
        %v1479 = vand.u32 %v1408, 65535
        %v1480 = vshra.s32 %v1408, 16
        %v1481 = vcvt.s32.f32 %v1479
        %v1482 = vcvt.s32.f32 %v1480
        %1483 = vmin.xlane.f32.xlu0 %v1482
        %v1484 = vpop.xlane.xlu0 %1483
        %vm1485 = vcmp.eq.f32.partialorder %v1482, %v1484
        %v1486 = vsel %vm1485, %v1481, inf
        %1487 = vmin.xlane.f32.xlu0 %v1486
        %v1488 = vpop.xlane.xlu0 %1487
        %v1489 = vcvt.f32.s32 %v1488
        %v1490 = vcvt.f32.s32 %v1484
        %v1491 = vshll.u32 %v1490, 16
        %v1492 = vadd.s32 %v1491, %v1489
        %vm1493 = vcmp.eq.s32.totalorder %v1403, %v1422
        %vm1494 = vcmp.eq.s32.totalorder %v1404, %v1436
        %vm1495 = vcmp.eq.s32.totalorder %v1405, %v1450
        %vm1496 = vcmp.eq.s32.totalorder %v1406, %v1464
        %vm1497 = vcmp.eq.s32.totalorder %v1407, %v1478
        %vm1498 = vcmp.eq.s32.totalorder %v1408, %v1492
        %v1499 = vsel %vm1493, -inf, %v1379
        %v1500 = vsel %vm1494, -inf, %v1380
        %v1501 = vsel %vm1495, -inf, %v1381
        %v1502 = vsel %vm1496, -inf, %v1382
        %v1503 = vsel %vm1497, -inf, %v1383
        %v1504 = vsel %vm1498, -inf, %v1384
        %1505 = vmax.xlane.f32.xlu0 %v1499
        %v1506 = vpop.xlane.xlu0 %1505
        %1507 = vmax.xlane.f32.xlu0 %v1500
        %v1508 = vpop.xlane.xlu0 %1507
        %1509 = vmax.xlane.f32.xlu0 %v1501
        %v1510 = vpop.xlane.xlu0 %1509
        %1511 = vmax.xlane.f32.xlu0 %v1502
        %v1512 = vpop.xlane.xlu0 %1511
        %1513 = vmax.xlane.f32.xlu0 %v1503
        %v1514 = vpop.xlane.xlu0 %1513
        %1515 = vmax.xlane.f32.xlu0 %v1504
        %v1516 = vpop.xlane.xlu0 %1515
        %vm1517 = vcmp.eq.f32.partialorder %v1499, %v1506
        %vm1518 = vcmp.eq.f32.partialorder %v1500, %v1508
        %vm1519 = vcmp.eq.f32.partialorder %v1501, %v1510
        %vm1520 = vcmp.eq.f32.partialorder %v1502, %v1512
        %vm1521 = vcmp.eq.f32.partialorder %v1503, %v1514
        %vm1522 = vcmp.eq.f32.partialorder %v1504, %v1516
        %v1523 = vsel %vm1517, %v415, 2147483647
        %v1524 = vsel %vm1518, %v415, 2147483647
        %v1525 = vsel %vm1519, %v415, 2147483647
        %v1526 = vsel %vm1520, %v415, 2147483647
        %v1527 = vsel %vm1521, %v415, 2147483647
        %v1528 = vsel %vm1522, %v415, 2147483647
        %v1529 = vand.u32 %v1523, 65535
        %v1530 = vshra.s32 %v1523, 16
        %v1531 = vcvt.s32.f32 %v1529
        %v1532 = vcvt.s32.f32 %v1530
        %1533 = vmin.xlane.f32.xlu0 %v1532
        %v1534 = vpop.xlane.xlu0 %1533
        %vm1535 = vcmp.eq.f32.partialorder %v1532, %v1534
        %v1536 = vsel %vm1535, %v1531, inf
        %1537 = vmin.xlane.f32.xlu0 %v1536
        %v1538 = vpop.xlane.xlu0 %1537
        %v1539 = vcvt.f32.s32 %v1538
        %v1540 = vcvt.f32.s32 %v1534
        %v1541 = vshll.u32 %v1540, 16
        %v1542 = vadd.s32 %v1541, %v1539
        %v1543 = vand.u32 %v1524, 65535
        %v1544 = vshra.s32 %v1524, 16
        %v1545 = vcvt.s32.f32 %v1543
        %v1546 = vcvt.s32.f32 %v1544
        %1547 = vmin.xlane.f32.xlu0 %v1546
        %v1548 = vpop.xlane.xlu0 %1547
        %vm1549 = vcmp.eq.f32.partialorder %v1546, %v1548
        %v1550 = vsel %vm1549, %v1545, inf
        %1551 = vmin.xlane.f32.xlu0 %v1550
        %v1552 = vpop.xlane.xlu0 %1551
        %v1553 = vcvt.f32.s32 %v1552
        %v1554 = vcvt.f32.s32 %v1548
        %v1555 = vshll.u32 %v1554, 16
        %v1556 = vadd.s32 %v1555, %v1553
        %v1557 = vand.u32 %v1525, 65535
        %v1558 = vshra.s32 %v1525, 16
        %v1559 = vcvt.s32.f32 %v1557
        %v1560 = vcvt.s32.f32 %v1558
        %1561 = vmin.xlane.f32.xlu0 %v1560
        %v1562 = vpop.xlane.xlu0 %1561
        %vm1563 = vcmp.eq.f32.partialorder %v1560, %v1562
        %v1564 = vsel %vm1563, %v1559, inf
        %1565 = vmin.xlane.f32.xlu0 %v1564
        %v1566 = vpop.xlane.xlu0 %1565
        %v1567 = vcvt.f32.s32 %v1566
        %v1568 = vcvt.f32.s32 %v1562
        %v1569 = vshll.u32 %v1568, 16
        %v1570 = vadd.s32 %v1569, %v1567
        %v1571 = vand.u32 %v1526, 65535
        %v1572 = vshra.s32 %v1526, 16
        %v1573 = vcvt.s32.f32 %v1571
        %v1574 = vcvt.s32.f32 %v1572
        %1575 = vmin.xlane.f32.xlu0 %v1574
        %v1576 = vpop.xlane.xlu0 %1575
        %vm1577 = vcmp.eq.f32.partialorder %v1574, %v1576
        %v1578 = vsel %vm1577, %v1573, inf
        %1579 = vmin.xlane.f32.xlu0 %v1578
        %v1580 = vpop.xlane.xlu0 %1579
        %v1581 = vcvt.f32.s32 %v1580
        %v1582 = vcvt.f32.s32 %v1576
        %v1583 = vshll.u32 %v1582, 16
        %v1584 = vadd.s32 %v1583, %v1581
        %v1585 = vand.u32 %v1527, 65535
        %v1586 = vshra.s32 %v1527, 16
        %v1587 = vcvt.s32.f32 %v1585
        %v1588 = vcvt.s32.f32 %v1586
        %1589 = vmin.xlane.f32.xlu0 %v1588
        %v1590 = vpop.xlane.xlu0 %1589
        %vm1591 = vcmp.eq.f32.partialorder %v1588, %v1590
        %v1592 = vsel %vm1591, %v1587, inf
        %1593 = vmin.xlane.f32.xlu0 %v1592
        %v1594 = vpop.xlane.xlu0 %1593
        %v1595 = vcvt.f32.s32 %v1594
        %v1596 = vcvt.f32.s32 %v1590
        %v1597 = vshll.u32 %v1596, 16
        %v1598 = vadd.s32 %v1597, %v1595
        %v1599 = vand.u32 %v1528, 65535
        %v1600 = vshra.s32 %v1528, 16
        %v1601 = vcvt.s32.f32 %v1599
        %v1602 = vcvt.s32.f32 %v1600
        %1603 = vmin.xlane.f32.xlu0 %v1602
        %v1604 = vpop.xlane.xlu0 %1603
        %vm1605 = vcmp.eq.f32.partialorder %v1602, %v1604
        %v1606 = vsel %vm1605, %v1601, inf
        %1607 = vmin.xlane.f32.xlu0 %v1606
        %v1608 = vpop.xlane.xlu0 %1607
        %v1609 = vcvt.f32.s32 %v1608
        %v1610 = vcvt.f32.s32 %v1604
        %v1611 = vshll.u32 %v1610, 16
        %v1612 = vadd.s32 %v1611, %v1609
        %vm1613 = vcmask 7168
        %v1614 = vsel %vm1613, %v426, %v546
        %v1615 = vsel %vm1613, %v428, %v548
        %v1616 = vsel %vm1613, %v430, %v550
        %v1617 = vsel %vm1613, %v432, %v552
        %v1618 = vsel %vm1613, %v434, %v554
        %v1619 = vsel %vm1613, %v436, %v556
        %vm1620 = vcmask 15360
        %v1621 = vsel %vm1620, %v1614, %v666
        %v1622 = vsel %vm1620, %v1615, %v668
        %v1623 = vsel %vm1620, %v1616, %v670
        %v1624 = vsel %vm1620, %v1617, %v672
        %v1625 = vsel %vm1620, %v1618, %v674
        %v1626 = vsel %vm1620, %v1619, %v676
        %vm1627 = vcmask 23552
        %v1628 = vsel %vm1627, %v1621, %v786
        %v1629 = vsel %vm1627, %v1622, %v788
        %v1630 = vsel %vm1627, %v1623, %v790
        %v1631 = vsel %vm1627, %v1624, %v792
        %v1632 = vsel %vm1627, %v1625, %v794
        %v1633 = vsel %vm1627, %v1626, %v796
        %vm1634 = vcmask 31744
        %v1635 = vsel %vm1634, %v1628, %v906
        %v1636 = vsel %vm1634, %v1629, %v908
        %v1637 = vsel %vm1634, %v1630, %v910
        %v1638 = vsel %vm1634, %v1631, %v912
        %v1639 = vsel %vm1634, %v1632, %v914
        %v1640 = vsel %vm1634, %v1633, %v916
        %vm1641 = vcmask 39936
        %v1642 = vsel %vm1641, %v1635, %v1026
        %v1643 = vsel %vm1641, %v1636, %v1028
        %v1644 = vsel %vm1641, %v1637, %v1030
        %v1645 = vsel %vm1641, %v1638, %v1032
        %v1646 = vsel %vm1641, %v1639, %v1034
        %v1647 = vsel %vm1641, %v1640, %v1036
        %vm1648 = vcmask 48128
        %v1649 = vsel %vm1648, %v1642, %v1146
        %v1650 = vsel %vm1648, %v1643, %v1148
        %v1651 = vsel %vm1648, %v1644, %v1150
        %v1652 = vsel %vm1648, %v1645, %v1152
        %v1653 = vsel %vm1648, %v1646, %v1154
        %v1654 = vsel %vm1648, %v1647, %v1156
        %vm1655 = vcmask 56320
        %v1656 = vsel %vm1655, %v1649, %v1266
        %v1657 = vsel %vm1655, %v1650, %v1268
        %v1658 = vsel %vm1655, %v1651, %v1270
        %v1659 = vsel %vm1655, %v1652, %v1272
        %v1660 = vsel %vm1655, %v1653, %v1274
        %v1661 = vsel %vm1655, %v1654, %v1276
        %vm1662 = vcmask 64512
        %v1663 = vsel %vm1662, %v1656, %v1386
        %v1664 = vsel %vm1662, %v1657, %v1388
        %v1665 = vsel %vm1662, %v1658, %v1390
        %v1666 = vsel %vm1662, %v1659, %v1392
        %v1667 = vsel %vm1662, %v1660, %v1394
        %v1668 = vsel %vm1662, %v1661, %v1396
        %vm1669 = vcmask 72704
        %v1670 = vsel %vm1669, %v1663, %v1506
        %v1671 = vsel %vm1669, %v1664, %v1508
        %v1672 = vsel %vm1669, %v1665, %v1510
        %v1673 = vsel %vm1669, %v1666, %v1512
        %v1674 = vsel %vm1669, %v1667, %v1514
        %v1675 = vsel %vm1669, %v1668, %v1516
        %v1676 = vsel %vm1613, %v462, %v582
        %v1677 = vsel %vm1613, %v476, %v596
        %v1678 = vsel %vm1613, %v490, %v610
        %v1679 = vsel %vm1613, %v504, %v624
        %v1680 = vsel %vm1613, %v518, %v638
        %v1681 = vsel %vm1613, %v532, %v652
        %v1682 = vsel %vm1620, %v1676, %v702
        %v1683 = vsel %vm1620, %v1677, %v716
        %v1684 = vsel %vm1620, %v1678, %v730
        %v1685 = vsel %vm1620, %v1679, %v744
        %v1686 = vsel %vm1620, %v1680, %v758
        %v1687 = vsel %vm1620, %v1681, %v772
        %v1688 = vsel %vm1627, %v1682, %v822
        %v1689 = vsel %vm1627, %v1683, %v836
        %v1690 = vsel %vm1627, %v1684, %v850
        %v1691 = vsel %vm1627, %v1685, %v864
        %v1692 = vsel %vm1627, %v1686, %v878
        %v1693 = vsel %vm1627, %v1687, %v892
        %v1694 = vsel %vm1634, %v1688, %v942
        %v1695 = vsel %vm1634, %v1689, %v956
        %v1696 = vsel %vm1634, %v1690, %v970
        %v1697 = vsel %vm1634, %v1691, %v984
        %v1698 = vsel %vm1634, %v1692, %v998
        %v1699 = vsel %vm1634, %v1693, %v1012
        %v1700 = vsel %vm1641, %v1694, %v1062
        %v1701 = vsel %vm1641, %v1695, %v1076
        %v1702 = vsel %vm1641, %v1696, %v1090
        %v1703 = vsel %vm1641, %v1697, %v1104
        %v1704 = vsel %vm1641, %v1698, %v1118
        %v1705 = vsel %vm1641, %v1699, %v1132
        %v1706 = vsel %vm1648, %v1700, %v1182
        %v1707 = vsel %vm1648, %v1701, %v1196
        %v1708 = vsel %vm1648, %v1702, %v1210
        %v1709 = vsel %vm1648, %v1703, %v1224
        %v1710 = vsel %vm1648, %v1704, %v1238
        %v1711 = vsel %vm1648, %v1705, %v1252
        %v1712 = vsel %vm1655, %v1706, %v1302
        %v1713 = vsel %vm1655, %v1707, %v1316
        %v1714 = vsel %vm1655, %v1708, %v1330
        %v1715 = vsel %vm1655, %v1709, %v1344
        %v1716 = vsel %vm1655, %v1710, %v1358
        %v1717 = vsel %vm1655, %v1711, %v1372
        %v1718 = vsel %vm1662, %v1712, %v1422
        %v1719 = vsel %vm1662, %v1713, %v1436
        %v1720 = vsel %vm1662, %v1714, %v1450
        %v1721 = vsel %vm1662, %v1715, %v1464
        %v1722 = vsel %vm1662, %v1716, %v1478
        %v1723 = vsel %vm1662, %v1717, %v1492
        %v1724 = vsel %vm1669, %v1718, %v1542
        %v1725 = vsel %vm1669, %v1719, %v1556
        %v1726 = vsel %vm1669, %v1720, %v1570
        %v1727 = vsel %vm1669, %v1721, %v1584
        %v1728 = vsel %vm1669, %v1722, %v1598
        %v1729 = vsel %vm1669, %v1723, %v1612
        %v1730 = vld [vmem:[#allocation2] sm:$0xff]
        %v1731 = vld [vmem:[#allocation2 + $0x8] sm:$0xff]
        %v1732 = vld [vmem:[#allocation2 + $0x10] sm:$0xff]
        %v1733 = vld [vmem:[#allocation2 + $0x18] sm:$0xff]
        %v1734 = vld [vmem:[#allocation2 + $0x20] sm:$0xff]
        %v1735 = vld [vmem:[#allocation2 + $0x28] sm:$0xff]
        %1742 = vrot.lane.b32.xlu0 %v1670, 10
        %v1743 = vpop.permute.xlu0 %1742
        %1744 = vrot.lane.b32.xlu0 %v1671, 10
        %v1745 = vpop.permute.xlu0 %1744
        %1746 = vrot.lane.b32.xlu0 %v1672, 10
        %v1747 = vpop.permute.xlu0 %1746
        %1748 = vrot.lane.b32.xlu0 %v1673, 10
        %v1749 = vpop.permute.xlu0 %1748
        %1750 = vrot.lane.b32.xlu0 %v1674, 10
        %v1751 = vpop.permute.xlu0 %1750
        %1752 = vrot.lane.b32.xlu0 %v1675, 10
        %v1753 = vpop.permute.xlu0 %1752
        %vm1760 = vcmask 80896
        %v1761 = vsel %vm1760, %v1730, %v1743
        %v1762 = vsel %vm1760, %v1731, %v1745
        %v1763 = vsel %vm1760, %v1732, %v1747
        %v1764 = vsel %vm1760, %v1733, %v1749
        %v1765 = vsel %vm1760, %v1734, %v1751
        %v1766 = vsel %vm1760, %v1735, %v1753
        %v1767 = vld [vmem:[#allocation3] sm:$0xff]
        %v1768 = vld [vmem:[#allocation3 + $0x8] sm:$0xff]
        %v1769 = vld [vmem:[#allocation3 + $0x10] sm:$0xff]
        %v1770 = vld [vmem:[#allocation3 + $0x18] sm:$0xff]
        %v1771 = vld [vmem:[#allocation3 + $0x20] sm:$0xff]
        %v1772 = vld [vmem:[#allocation3 + $0x28] sm:$0xff]
        %1773 = vrot.lane.b32.xlu0 %v1724, 10
        %v1774 = vpop.permute.xlu0 %1773
        %1775 = vrot.lane.b32.xlu0 %v1725, 10
        %v1776 = vpop.permute.xlu0 %1775
        %1777 = vrot.lane.b32.xlu0 %v1726, 10
        %v1778 = vpop.permute.xlu0 %1777
        %1779 = vrot.lane.b32.xlu0 %v1727, 10
        %v1780 = vpop.permute.xlu0 %1779
        %1781 = vrot.lane.b32.xlu0 %v1728, 10
        %v1782 = vpop.permute.xlu0 %1781
        %1783 = vrot.lane.b32.xlu0 %v1729, 10
        %v1784 = vpop.permute.xlu0 %1783
        %v1785 = vsel %vm1760, %v1767, %v1774
        %v1786 = vsel %vm1760, %v1768, %v1776
        %v1787 = vsel %vm1760, %v1769, %v1778
        %v1788 = vsel %vm1760, %v1770, %v1780
        %v1789 = vsel %vm1760, %v1771, %v1782
        %v1790 = vsel %vm1760, %v1772, %v1784
        %vm1791 = vcmask 162816
        %v1792 = vsel %vm1791, %v1761, -inf
        %1793 = vmax.xlane.f32.xlu0 %v1792
        %v1794 = vpop.xlane.xlu0 %1793
        %v1795 = vsel %vm1791, %v1762, -inf
        %1796 = vmax.xlane.f32.xlu0 %v1795
        %v1797 = vpop.xlane.xlu0 %1796
        %v1798 = vsel %vm1791, %v1763, -inf
        %1799 = vmax.xlane.f32.xlu0 %v1798
        %v1800 = vpop.xlane.xlu0 %1799
        %v1801 = vsel %vm1791, %v1764, -inf
        %1802 = vmax.xlane.f32.xlu0 %v1801
        %v1803 = vpop.xlane.xlu0 %1802
        %v1804 = vsel %vm1791, %v1765, -inf
        %1805 = vmax.xlane.f32.xlu0 %v1804
        %v1806 = vpop.xlane.xlu0 %1805
        %v1807 = vsel %vm1791, %v1766, -inf
        %1808 = vmax.xlane.f32.xlu0 %v1807
        %v1809 = vpop.xlane.xlu0 %1808
        %vm1810 = vcmp.eq.f32.partialorder %v1761, %v1794
        %vm1811 = vcmp.eq.f32.partialorder %v1762, %v1797
        %vm1812 = vcmp.eq.f32.partialorder %v1763, %v1800
        %vm1813 = vcmp.eq.f32.partialorder %v1764, %v1803
        %vm1814 = vcmp.eq.f32.partialorder %v1765, %v1806
        %vm1815 = vcmp.eq.f32.partialorder %v1766, %v1809
        %v1816 = vsel %vm1810, %v1785, 2147483647
        %v1817 = vsel %vm1811, %v1786, 2147483647
        %v1818 = vsel %vm1812, %v1787, 2147483647
        %v1819 = vsel %vm1813, %v1788, 2147483647
        %v1820 = vsel %vm1814, %v1789, 2147483647
        %v1821 = vsel %vm1815, %v1790, 2147483647
        %v1822 = vsel %vm1791, %v1816, 2147483647
        %v1823 = vand.u32 %v1822, 65535
        %v1824 = vshra.s32 %v1822, 16
        %v1825 = vcvt.s32.f32 %v1823
        %v1826 = vcvt.s32.f32 %v1824
        %1827 = vmin.xlane.f32.xlu0 %v1826
        %v1828 = vpop.xlane.xlu0 %1827
        %vm1829 = vcmp.eq.f32.partialorder %v1826, %v1828
        %v1830 = vsel %vm1829, %v1825, inf
        %1831 = vmin.xlane.f32.xlu0 %v1830
        %v1832 = vpop.xlane.xlu0 %1831
        %v1833 = vcvt.f32.s32 %v1832
        %v1834 = vcvt.f32.s32 %v1828
        %v1835 = vshll.u32 %v1834, 16
        %v1836 = vadd.s32 %v1835, %v1833
        %v1837 = vsel %vm1791, %v1817, 2147483647
        %v1838 = vand.u32 %v1837, 65535
        %v1839 = vshra.s32 %v1837, 16
        %v1840 = vcvt.s32.f32 %v1838
        %v1841 = vcvt.s32.f32 %v1839
        %1842 = vmin.xlane.f32.xlu0 %v1841
        %v1843 = vpop.xlane.xlu0 %1842
        %vm1844 = vcmp.eq.f32.partialorder %v1841, %v1843
        %v1845 = vsel %vm1844, %v1840, inf
        %1846 = vmin.xlane.f32.xlu0 %v1845
        %v1847 = vpop.xlane.xlu0 %1846
        %v1848 = vcvt.f32.s32 %v1847
        %v1849 = vcvt.f32.s32 %v1843
        %v1850 = vshll.u32 %v1849, 16
        %v1851 = vadd.s32 %v1850, %v1848
        %v1852 = vsel %vm1791, %v1818, 2147483647
        %v1853 = vand.u32 %v1852, 65535
        %v1854 = vshra.s32 %v1852, 16
        %v1855 = vcvt.s32.f32 %v1853
        %v1856 = vcvt.s32.f32 %v1854
        %1857 = vmin.xlane.f32.xlu0 %v1856
        %v1858 = vpop.xlane.xlu0 %1857
        %vm1859 = vcmp.eq.f32.partialorder %v1856, %v1858
        %v1860 = vsel %vm1859, %v1855, inf
        %1861 = vmin.xlane.f32.xlu0 %v1860
        %v1862 = vpop.xlane.xlu0 %1861
        %v1863 = vcvt.f32.s32 %v1862
        %v1864 = vcvt.f32.s32 %v1858
        %v1865 = vshll.u32 %v1864, 16
        %v1866 = vadd.s32 %v1865, %v1863
        %v1867 = vsel %vm1791, %v1819, 2147483647
        %v1868 = vand.u32 %v1867, 65535
        %v1869 = vshra.s32 %v1867, 16
        %v1870 = vcvt.s32.f32 %v1868
        %v1871 = vcvt.s32.f32 %v1869
        %1872 = vmin.xlane.f32.xlu0 %v1871
        %v1873 = vpop.xlane.xlu0 %1872
        %vm1874 = vcmp.eq.f32.partialorder %v1871, %v1873
        %v1875 = vsel %vm1874, %v1870, inf
        %1876 = vmin.xlane.f32.xlu0 %v1875
        %v1877 = vpop.xlane.xlu0 %1876
        %v1878 = vcvt.f32.s32 %v1877
        %v1879 = vcvt.f32.s32 %v1873
        %v1880 = vshll.u32 %v1879, 16
        %v1881 = vadd.s32 %v1880, %v1878
        %v1882 = vsel %vm1791, %v1820, 2147483647
        %v1883 = vand.u32 %v1882, 65535
        %v1884 = vshra.s32 %v1882, 16
        %v1885 = vcvt.s32.f32 %v1883
        %v1886 = vcvt.s32.f32 %v1884
        %1887 = vmin.xlane.f32.xlu0 %v1886
        %v1888 = vpop.xlane.xlu0 %1887
        %vm1889 = vcmp.eq.f32.partialorder %v1886, %v1888
        %v1890 = vsel %vm1889, %v1885, inf
        %1891 = vmin.xlane.f32.xlu0 %v1890
        %v1892 = vpop.xlane.xlu0 %1891
        %v1893 = vcvt.f32.s32 %v1892
        %v1894 = vcvt.f32.s32 %v1888
        %v1895 = vshll.u32 %v1894, 16
        %v1896 = vadd.s32 %v1895, %v1893
        %v1897 = vsel %vm1791, %v1821, 2147483647
        %v1898 = vand.u32 %v1897, 65535
        %v1899 = vshra.s32 %v1897, 16
        %v1900 = vcvt.s32.f32 %v1898
        %v1901 = vcvt.s32.f32 %v1899
        %1902 = vmin.xlane.f32.xlu0 %v1901
        %v1903 = vpop.xlane.xlu0 %1902
        %vm1904 = vcmp.eq.f32.partialorder %v1901, %v1903
        %v1905 = vsel %vm1904, %v1900, inf
        %1906 = vmin.xlane.f32.xlu0 %v1905
        %v1907 = vpop.xlane.xlu0 %1906
        %v1908 = vcvt.f32.s32 %v1907
        %v1909 = vcvt.f32.s32 %v1903
        %v1910 = vshll.u32 %v1909, 16
        %v1911 = vadd.s32 %v1910, %v1908
        %vm1912 = vcmp.eq.s32.totalorder %v1816, %v1836
        %vm1913 = vcmp.eq.s32.totalorder %v1817, %v1851
        %vm1914 = vcmp.eq.s32.totalorder %v1818, %v1866
        %vm1915 = vcmp.eq.s32.totalorder %v1819, %v1881
        %vm1916 = vcmp.eq.s32.totalorder %v1820, %v1896
        %vm1917 = vcmp.eq.s32.totalorder %v1821, %v1911
        %v1918 = vsel %vm1912, -inf, %v1761
        %v1919 = vsel %vm1913, -inf, %v1762
        %v1920 = vsel %vm1914, -inf, %v1763
        %v1921 = vsel %vm1915, -inf, %v1764
        %v1922 = vsel %vm1916, -inf, %v1765
        %v1923 = vsel %vm1917, -inf, %v1766
        %v1924 = vsel %vm1791, %v1918, -inf
        %1925 = vmax.xlane.f32.xlu0 %v1924
        %v1926 = vpop.xlane.xlu0 %1925
        %v1927 = vsel %vm1791, %v1919, -inf
        %1928 = vmax.xlane.f32.xlu0 %v1927
        %v1929 = vpop.xlane.xlu0 %1928
        %v1930 = vsel %vm1791, %v1920, -inf
        %1931 = vmax.xlane.f32.xlu0 %v1930
        %v1932 = vpop.xlane.xlu0 %1931
        %v1933 = vsel %vm1791, %v1921, -inf
        %1934 = vmax.xlane.f32.xlu0 %v1933
        %v1935 = vpop.xlane.xlu0 %1934
        %v1936 = vsel %vm1791, %v1922, -inf
        %1937 = vmax.xlane.f32.xlu0 %v1936
        %v1938 = vpop.xlane.xlu0 %1937
        %v1939 = vsel %vm1791, %v1923, -inf
        %1940 = vmax.xlane.f32.xlu0 %v1939
        %v1941 = vpop.xlane.xlu0 %1940
        %vm1942 = vcmp.eq.f32.partialorder %v1918, %v1926
        %vm1943 = vcmp.eq.f32.partialorder %v1919, %v1929
        %vm1944 = vcmp.eq.f32.partialorder %v1920, %v1932
        %vm1945 = vcmp.eq.f32.partialorder %v1921, %v1935
        %vm1946 = vcmp.eq.f32.partialorder %v1922, %v1938
        %vm1947 = vcmp.eq.f32.partialorder %v1923, %v1941
        %v1948 = vsel %vm1942, %v1785, 2147483647
        %v1949 = vsel %vm1943, %v1786, 2147483647
        %v1950 = vsel %vm1944, %v1787, 2147483647
        %v1951 = vsel %vm1945, %v1788, 2147483647
        %v1952 = vsel %vm1946, %v1789, 2147483647
        %v1953 = vsel %vm1947, %v1790, 2147483647
        %v1954 = vsel %vm1791, %v1948, 2147483647
        %v1955 = vand.u32 %v1954, 65535
        %v1956 = vshra.s32 %v1954, 16
        %v1957 = vcvt.s32.f32 %v1955
        %v1958 = vcvt.s32.f32 %v1956
        %1959 = vmin.xlane.f32.xlu0 %v1958
        %v1960 = vpop.xlane.xlu0 %1959
        %vm1961 = vcmp.eq.f32.partialorder %v1958, %v1960
        %v1962 = vsel %vm1961, %v1957, inf
        %1963 = vmin.xlane.f32.xlu0 %v1962
        %v1964 = vpop.xlane.xlu0 %1963
        %v1965 = vcvt.f32.s32 %v1964
        %v1966 = vcvt.f32.s32 %v1960
        %v1967 = vshll.u32 %v1966, 16
        %v1968 = vadd.s32 %v1967, %v1965
        %v1969 = vsel %vm1791, %v1949, 2147483647
        %v1970 = vand.u32 %v1969, 65535
        %v1971 = vshra.s32 %v1969, 16
        %v1972 = vcvt.s32.f32 %v1970
        %v1973 = vcvt.s32.f32 %v1971
        %1974 = vmin.xlane.f32.xlu0 %v1973
        %v1975 = vpop.xlane.xlu0 %1974
        %vm1976 = vcmp.eq.f32.partialorder %v1973, %v1975
        %v1977 = vsel %vm1976, %v1972, inf
        %1978 = vmin.xlane.f32.xlu0 %v1977
        %v1979 = vpop.xlane.xlu0 %1978
        %v1980 = vcvt.f32.s32 %v1979
        %v1981 = vcvt.f32.s32 %v1975
        %v1982 = vshll.u32 %v1981, 16
        %v1983 = vadd.s32 %v1982, %v1980
        %v1984 = vsel %vm1791, %v1950, 2147483647
        %v1985 = vand.u32 %v1984, 65535
        %v1986 = vshra.s32 %v1984, 16
        %v1987 = vcvt.s32.f32 %v1985
        %v1988 = vcvt.s32.f32 %v1986
        %1989 = vmin.xlane.f32.xlu0 %v1988
        %v1990 = vpop.xlane.xlu0 %1989
        %vm1991 = vcmp.eq.f32.partialorder %v1988, %v1990
        %v1992 = vsel %vm1991, %v1987, inf
        %1993 = vmin.xlane.f32.xlu0 %v1992
        %v1994 = vpop.xlane.xlu0 %1993
        %v1995 = vcvt.f32.s32 %v1994
        %v1996 = vcvt.f32.s32 %v1990
        %v1997 = vshll.u32 %v1996, 16
        %v1998 = vadd.s32 %v1997, %v1995
        %v1999 = vsel %vm1791, %v1951, 2147483647
        %v2000 = vand.u32 %v1999, 65535
        %v2001 = vshra.s32 %v1999, 16
        %v2002 = vcvt.s32.f32 %v2000
        %v2003 = vcvt.s32.f32 %v2001
        %2004 = vmin.xlane.f32.xlu0 %v2003
        %v2005 = vpop.xlane.xlu0 %2004
        %vm2006 = vcmp.eq.f32.partialorder %v2003, %v2005
        %v2007 = vsel %vm2006, %v2002, inf
        %2008 = vmin.xlane.f32.xlu0 %v2007
        %v2009 = vpop.xlane.xlu0 %2008
        %v2010 = vcvt.f32.s32 %v2009
        %v2011 = vcvt.f32.s32 %v2005
        %v2012 = vshll.u32 %v2011, 16
        %v2013 = vadd.s32 %v2012, %v2010
        %v2014 = vsel %vm1791, %v1952, 2147483647
        %v2015 = vand.u32 %v2014, 65535
        %v2016 = vshra.s32 %v2014, 16
        %v2017 = vcvt.s32.f32 %v2015
        %v2018 = vcvt.s32.f32 %v2016
        %2019 = vmin.xlane.f32.xlu0 %v2018
        %v2020 = vpop.xlane.xlu0 %2019
        %vm2021 = vcmp.eq.f32.partialorder %v2018, %v2020
        %v2022 = vsel %vm2021, %v2017, inf
        %2023 = vmin.xlane.f32.xlu0 %v2022
        %v2024 = vpop.xlane.xlu0 %2023
        %v2025 = vcvt.f32.s32 %v2024
        %v2026 = vcvt.f32.s32 %v2020
        %v2027 = vshll.u32 %v2026, 16
        %v2028 = vadd.s32 %v2027, %v2025
        %v2029 = vsel %vm1791, %v1953, 2147483647
        %v2030 = vand.u32 %v2029, 65535
        %v2031 = vshra.s32 %v2029, 16
        %v2032 = vcvt.s32.f32 %v2030
        %v2033 = vcvt.s32.f32 %v2031
        %2034 = vmin.xlane.f32.xlu0 %v2033
        %v2035 = vpop.xlane.xlu0 %2034
        %vm2036 = vcmp.eq.f32.partialorder %v2033, %v2035
        %v2037 = vsel %vm2036, %v2032, inf
        %2038 = vmin.xlane.f32.xlu0 %v2037
        %v2039 = vpop.xlane.xlu0 %2038
        %v2040 = vcvt.f32.s32 %v2039
        %v2041 = vcvt.f32.s32 %v2035
        %v2042 = vshll.u32 %v2041, 16
        %v2043 = vadd.s32 %v2042, %v2040
        %vm2044 = vcmp.eq.s32.totalorder %v1948, %v1968
        %vm2045 = vcmp.eq.s32.totalorder %v1949, %v1983
        %vm2046 = vcmp.eq.s32.totalorder %v1950, %v1998
        %vm2047 = vcmp.eq.s32.totalorder %v1951, %v2013
        %vm2048 = vcmp.eq.s32.totalorder %v1952, %v2028
        %vm2049 = vcmp.eq.s32.totalorder %v1953, %v2043
        %v2050 = vsel %vm2044, -inf, %v1918
        %v2051 = vsel %vm2045, -inf, %v1919
        %v2052 = vsel %vm2046, -inf, %v1920
        %v2053 = vsel %vm2047, -inf, %v1921
        %v2054 = vsel %vm2048, -inf, %v1922
        %v2055 = vsel %vm2049, -inf, %v1923
        %v2056 = vsel %vm1791, %v2050, -inf
        %2057 = vmax.xlane.f32.xlu0 %v2056
        %v2058 = vpop.xlane.xlu0 %2057
        %v2059 = vsel %vm1791, %v2051, -inf
        %2060 = vmax.xlane.f32.xlu0 %v2059
        %v2061 = vpop.xlane.xlu0 %2060
        %v2062 = vsel %vm1791, %v2052, -inf
        %2063 = vmax.xlane.f32.xlu0 %v2062
        %v2064 = vpop.xlane.xlu0 %2063
        %v2065 = vsel %vm1791, %v2053, -inf
        %2066 = vmax.xlane.f32.xlu0 %v2065
        %v2067 = vpop.xlane.xlu0 %2066
        %v2068 = vsel %vm1791, %v2054, -inf
        %2069 = vmax.xlane.f32.xlu0 %v2068
        %v2070 = vpop.xlane.xlu0 %2069
        %v2071 = vsel %vm1791, %v2055, -inf
        %2072 = vmax.xlane.f32.xlu0 %v2071
        %v2073 = vpop.xlane.xlu0 %2072
        %vm2074 = vcmp.eq.f32.partialorder %v2050, %v2058
        %vm2075 = vcmp.eq.f32.partialorder %v2051, %v2061
        %vm2076 = vcmp.eq.f32.partialorder %v2052, %v2064
        %vm2077 = vcmp.eq.f32.partialorder %v2053, %v2067
        %vm2078 = vcmp.eq.f32.partialorder %v2054, %v2070
        %vm2079 = vcmp.eq.f32.partialorder %v2055, %v2073
        %v2080 = vsel %vm2074, %v1785, 2147483647
        %v2081 = vsel %vm2075, %v1786, 2147483647
        %v2082 = vsel %vm2076, %v1787, 2147483647
        %v2083 = vsel %vm2077, %v1788, 2147483647
        %v2084 = vsel %vm2078, %v1789, 2147483647
        %v2085 = vsel %vm2079, %v1790, 2147483647
        %v2086 = vsel %vm1791, %v2080, 2147483647
        %v2087 = vand.u32 %v2086, 65535
        %v2088 = vshra.s32 %v2086, 16
        %v2089 = vcvt.s32.f32 %v2087
        %v2090 = vcvt.s32.f32 %v2088
        %2091 = vmin.xlane.f32.xlu0 %v2090
        %v2092 = vpop.xlane.xlu0 %2091
        %vm2093 = vcmp.eq.f32.partialorder %v2090, %v2092
        %v2094 = vsel %vm2093, %v2089, inf
        %2095 = vmin.xlane.f32.xlu0 %v2094
        %v2096 = vpop.xlane.xlu0 %2095
        %v2097 = vcvt.f32.s32 %v2096
        %v2098 = vcvt.f32.s32 %v2092
        %v2099 = vshll.u32 %v2098, 16
        %v2100 = vadd.s32 %v2099, %v2097
        %v2101 = vsel %vm1791, %v2081, 2147483647
        %v2102 = vand.u32 %v2101, 65535
        %v2103 = vshra.s32 %v2101, 16
        %v2104 = vcvt.s32.f32 %v2102
        %v2105 = vcvt.s32.f32 %v2103
        %2106 = vmin.xlane.f32.xlu0 %v2105
        %v2107 = vpop.xlane.xlu0 %2106
        %vm2108 = vcmp.eq.f32.partialorder %v2105, %v2107
        %v2109 = vsel %vm2108, %v2104, inf
        %2110 = vmin.xlane.f32.xlu0 %v2109
        %v2111 = vpop.xlane.xlu0 %2110
        %v2112 = vcvt.f32.s32 %v2111
        %v2113 = vcvt.f32.s32 %v2107
        %v2114 = vshll.u32 %v2113, 16
        %v2115 = vadd.s32 %v2114, %v2112
        %v2116 = vsel %vm1791, %v2082, 2147483647
        %v2117 = vand.u32 %v2116, 65535
        %v2118 = vshra.s32 %v2116, 16
        %v2119 = vcvt.s32.f32 %v2117
        %v2120 = vcvt.s32.f32 %v2118
        %2121 = vmin.xlane.f32.xlu0 %v2120
        %v2122 = vpop.xlane.xlu0 %2121
        %vm2123 = vcmp.eq.f32.partialorder %v2120, %v2122
        %v2124 = vsel %vm2123, %v2119, inf
        %2125 = vmin.xlane.f32.xlu0 %v2124
        %v2126 = vpop.xlane.xlu0 %2125
        %v2127 = vcvt.f32.s32 %v2126
        %v2128 = vcvt.f32.s32 %v2122
        %v2129 = vshll.u32 %v2128, 16
        %v2130 = vadd.s32 %v2129, %v2127
        %v2131 = vsel %vm1791, %v2083, 2147483647
        %v2132 = vand.u32 %v2131, 65535
        %v2133 = vshra.s32 %v2131, 16
        %v2134 = vcvt.s32.f32 %v2132
        %v2135 = vcvt.s32.f32 %v2133
        %2136 = vmin.xlane.f32.xlu0 %v2135
        %v2137 = vpop.xlane.xlu0 %2136
        %vm2138 = vcmp.eq.f32.partialorder %v2135, %v2137
        %v2139 = vsel %vm2138, %v2134, inf
        %2140 = vmin.xlane.f32.xlu0 %v2139
        %v2141 = vpop.xlane.xlu0 %2140
        %v2142 = vcvt.f32.s32 %v2141
        %v2143 = vcvt.f32.s32 %v2137
        %v2144 = vshll.u32 %v2143, 16
        %v2145 = vadd.s32 %v2144, %v2142
        %v2146 = vsel %vm1791, %v2084, 2147483647
        %v2147 = vand.u32 %v2146, 65535
        %v2148 = vshra.s32 %v2146, 16
        %v2149 = vcvt.s32.f32 %v2147
        %v2150 = vcvt.s32.f32 %v2148
        %2151 = vmin.xlane.f32.xlu0 %v2150
        %v2152 = vpop.xlane.xlu0 %2151
        %vm2153 = vcmp.eq.f32.partialorder %v2150, %v2152
        %v2154 = vsel %vm2153, %v2149, inf
        %2155 = vmin.xlane.f32.xlu0 %v2154
        %v2156 = vpop.xlane.xlu0 %2155
        %v2157 = vcvt.f32.s32 %v2156
        %v2158 = vcvt.f32.s32 %v2152
        %v2159 = vshll.u32 %v2158, 16
        %v2160 = vadd.s32 %v2159, %v2157
        %v2161 = vsel %vm1791, %v2085, 2147483647
        %v2162 = vand.u32 %v2161, 65535
        %v2163 = vshra.s32 %v2161, 16
        %v2164 = vcvt.s32.f32 %v2162
        %v2165 = vcvt.s32.f32 %v2163
        %2166 = vmin.xlane.f32.xlu0 %v2165
        %v2167 = vpop.xlane.xlu0 %2166
        %vm2168 = vcmp.eq.f32.partialorder %v2165, %v2167
        %v2169 = vsel %vm2168, %v2164, inf
        %2170 = vmin.xlane.f32.xlu0 %v2169
        %v2171 = vpop.xlane.xlu0 %2170
        %v2172 = vcvt.f32.s32 %v2171
        %v2173 = vcvt.f32.s32 %v2167
        %v2174 = vshll.u32 %v2173, 16
        %v2175 = vadd.s32 %v2174, %v2172
        %vm2176 = vcmp.eq.s32.totalorder %v2080, %v2100
        %vm2177 = vcmp.eq.s32.totalorder %v2081, %v2115
        %vm2178 = vcmp.eq.s32.totalorder %v2082, %v2130
        %vm2179 = vcmp.eq.s32.totalorder %v2083, %v2145
        %vm2180 = vcmp.eq.s32.totalorder %v2084, %v2160
        %vm2181 = vcmp.eq.s32.totalorder %v2085, %v2175
        %v2182 = vsel %vm2176, -inf, %v2050
        %v2183 = vsel %vm2177, -inf, %v2051
        %v2184 = vsel %vm2178, -inf, %v2052
        %v2185 = vsel %vm2179, -inf, %v2053
        %v2186 = vsel %vm2180, -inf, %v2054
        %v2187 = vsel %vm2181, -inf, %v2055
        %v2188 = vsel %vm1791, %v2182, -inf
        %2189 = vmax.xlane.f32.xlu0 %v2188
        %v2190 = vpop.xlane.xlu0 %2189
        %v2191 = vsel %vm1791, %v2183, -inf
        %2192 = vmax.xlane.f32.xlu0 %v2191
        %v2193 = vpop.xlane.xlu0 %2192
        %v2194 = vsel %vm1791, %v2184, -inf
        %2195 = vmax.xlane.f32.xlu0 %v2194
        %v2196 = vpop.xlane.xlu0 %2195
        %v2197 = vsel %vm1791, %v2185, -inf
        %2198 = vmax.xlane.f32.xlu0 %v2197
        %v2199 = vpop.xlane.xlu0 %2198
        %v2200 = vsel %vm1791, %v2186, -inf
        %2201 = vmax.xlane.f32.xlu0 %v2200
        %v2202 = vpop.xlane.xlu0 %2201
        %v2203 = vsel %vm1791, %v2187, -inf
        %2204 = vmax.xlane.f32.xlu0 %v2203
        %v2205 = vpop.xlane.xlu0 %2204
        %vm2206 = vcmp.eq.f32.partialorder %v2182, %v2190
        %vm2207 = vcmp.eq.f32.partialorder %v2183, %v2193
        %vm2208 = vcmp.eq.f32.partialorder %v2184, %v2196
        %vm2209 = vcmp.eq.f32.partialorder %v2185, %v2199
        %vm2210 = vcmp.eq.f32.partialorder %v2186, %v2202
        %vm2211 = vcmp.eq.f32.partialorder %v2187, %v2205
        %v2212 = vsel %vm2206, %v1785, 2147483647
        %v2213 = vsel %vm2207, %v1786, 2147483647
        %v2214 = vsel %vm2208, %v1787, 2147483647
        %v2215 = vsel %vm2209, %v1788, 2147483647
        %v2216 = vsel %vm2210, %v1789, 2147483647
        %v2217 = vsel %vm2211, %v1790, 2147483647
        %v2218 = vsel %vm1791, %v2212, 2147483647
        %v2219 = vand.u32 %v2218, 65535
        %v2220 = vshra.s32 %v2218, 16
        %v2221 = vcvt.s32.f32 %v2219
        %v2222 = vcvt.s32.f32 %v2220
        %2223 = vmin.xlane.f32.xlu0 %v2222
        %v2224 = vpop.xlane.xlu0 %2223
        %vm2225 = vcmp.eq.f32.partialorder %v2222, %v2224
        %v2226 = vsel %vm2225, %v2221, inf
        %2227 = vmin.xlane.f32.xlu0 %v2226
        %v2228 = vpop.xlane.xlu0 %2227
        %v2229 = vcvt.f32.s32 %v2228
        %v2230 = vcvt.f32.s32 %v2224
        %v2231 = vshll.u32 %v2230, 16
        %v2232 = vadd.s32 %v2231, %v2229
        %v2233 = vsel %vm1791, %v2213, 2147483647
        %v2234 = vand.u32 %v2233, 65535
        %v2235 = vshra.s32 %v2233, 16
        %v2236 = vcvt.s32.f32 %v2234
        %v2237 = vcvt.s32.f32 %v2235
        %2238 = vmin.xlane.f32.xlu0 %v2237
        %v2239 = vpop.xlane.xlu0 %2238
        %vm2240 = vcmp.eq.f32.partialorder %v2237, %v2239
        %v2241 = vsel %vm2240, %v2236, inf
        %2242 = vmin.xlane.f32.xlu0 %v2241
        %v2243 = vpop.xlane.xlu0 %2242
        %v2244 = vcvt.f32.s32 %v2243
        %v2245 = vcvt.f32.s32 %v2239
        %v2246 = vshll.u32 %v2245, 16
        %v2247 = vadd.s32 %v2246, %v2244
        %v2248 = vsel %vm1791, %v2214, 2147483647
        %v2249 = vand.u32 %v2248, 65535
        %v2250 = vshra.s32 %v2248, 16
        %v2251 = vcvt.s32.f32 %v2249
        %v2252 = vcvt.s32.f32 %v2250
        %2253 = vmin.xlane.f32.xlu0 %v2252
        %v2254 = vpop.xlane.xlu0 %2253
        %vm2255 = vcmp.eq.f32.partialorder %v2252, %v2254
        %v2256 = vsel %vm2255, %v2251, inf
        %2257 = vmin.xlane.f32.xlu0 %v2256
        %v2258 = vpop.xlane.xlu0 %2257
        %v2259 = vcvt.f32.s32 %v2258
        %v2260 = vcvt.f32.s32 %v2254
        %v2261 = vshll.u32 %v2260, 16
        %v2262 = vadd.s32 %v2261, %v2259
        %v2263 = vsel %vm1791, %v2215, 2147483647
        %v2264 = vand.u32 %v2263, 65535
        %v2265 = vshra.s32 %v2263, 16
        %v2266 = vcvt.s32.f32 %v2264
        %v2267 = vcvt.s32.f32 %v2265
        %2268 = vmin.xlane.f32.xlu0 %v2267
        %v2269 = vpop.xlane.xlu0 %2268
        %vm2270 = vcmp.eq.f32.partialorder %v2267, %v2269
        %v2271 = vsel %vm2270, %v2266, inf
        %2272 = vmin.xlane.f32.xlu0 %v2271
        %v2273 = vpop.xlane.xlu0 %2272
        %v2274 = vcvt.f32.s32 %v2273
        %v2275 = vcvt.f32.s32 %v2269
        %v2276 = vshll.u32 %v2275, 16
        %v2277 = vadd.s32 %v2276, %v2274
        %v2278 = vsel %vm1791, %v2216, 2147483647
        %v2279 = vand.u32 %v2278, 65535
        %v2280 = vshra.s32 %v2278, 16
        %v2281 = vcvt.s32.f32 %v2279
        %v2282 = vcvt.s32.f32 %v2280
        %2283 = vmin.xlane.f32.xlu0 %v2282
        %v2284 = vpop.xlane.xlu0 %2283
        %vm2285 = vcmp.eq.f32.partialorder %v2282, %v2284
        %v2286 = vsel %vm2285, %v2281, inf
        %2287 = vmin.xlane.f32.xlu0 %v2286
        %v2288 = vpop.xlane.xlu0 %2287
        %v2289 = vcvt.f32.s32 %v2288
        %v2290 = vcvt.f32.s32 %v2284
        %v2291 = vshll.u32 %v2290, 16
        %v2292 = vadd.s32 %v2291, %v2289
        %v2293 = vsel %vm1791, %v2217, 2147483647
        %v2294 = vand.u32 %v2293, 65535
        %v2295 = vshra.s32 %v2293, 16
        %v2296 = vcvt.s32.f32 %v2294
        %v2297 = vcvt.s32.f32 %v2295
        %2298 = vmin.xlane.f32.xlu0 %v2297
        %v2299 = vpop.xlane.xlu0 %2298
        %vm2300 = vcmp.eq.f32.partialorder %v2297, %v2299
        %v2301 = vsel %vm2300, %v2296, inf
        %2302 = vmin.xlane.f32.xlu0 %v2301
        %v2303 = vpop.xlane.xlu0 %2302
        %v2304 = vcvt.f32.s32 %v2303
        %v2305 = vcvt.f32.s32 %v2299
        %v2306 = vshll.u32 %v2305, 16
        %v2307 = vadd.s32 %v2306, %v2304
        %vm2308 = vcmp.eq.s32.totalorder %v2212, %v2232
        %vm2309 = vcmp.eq.s32.totalorder %v2213, %v2247
        %vm2310 = vcmp.eq.s32.totalorder %v2214, %v2262
        %vm2311 = vcmp.eq.s32.totalorder %v2215, %v2277
        %vm2312 = vcmp.eq.s32.totalorder %v2216, %v2292
        %vm2313 = vcmp.eq.s32.totalorder %v2217, %v2307
        %v2314 = vsel %vm2308, -inf, %v2182
        %v2315 = vsel %vm2309, -inf, %v2183
        %v2316 = vsel %vm2310, -inf, %v2184
        %v2317 = vsel %vm2311, -inf, %v2185
        %v2318 = vsel %vm2312, -inf, %v2186
        %v2319 = vsel %vm2313, -inf, %v2187
        %v2320 = vsel %vm1791, %v2314, -inf
        %2321 = vmax.xlane.f32.xlu0 %v2320
        %v2322 = vpop.xlane.xlu0 %2321
        %v2323 = vsel %vm1791, %v2315, -inf
        %2324 = vmax.xlane.f32.xlu0 %v2323
        %v2325 = vpop.xlane.xlu0 %2324
        %v2326 = vsel %vm1791, %v2316, -inf
        %2327 = vmax.xlane.f32.xlu0 %v2326
        %v2328 = vpop.xlane.xlu0 %2327
        %v2329 = vsel %vm1791, %v2317, -inf
        %2330 = vmax.xlane.f32.xlu0 %v2329
        %v2331 = vpop.xlane.xlu0 %2330
        %v2332 = vsel %vm1791, %v2318, -inf
        %2333 = vmax.xlane.f32.xlu0 %v2332
        %v2334 = vpop.xlane.xlu0 %2333
        %v2335 = vsel %vm1791, %v2319, -inf
        %2336 = vmax.xlane.f32.xlu0 %v2335
        %v2337 = vpop.xlane.xlu0 %2336
        %vm2338 = vcmp.eq.f32.partialorder %v2314, %v2322
        %vm2339 = vcmp.eq.f32.partialorder %v2315, %v2325
        %vm2340 = vcmp.eq.f32.partialorder %v2316, %v2328
        %vm2341 = vcmp.eq.f32.partialorder %v2317, %v2331
        %vm2342 = vcmp.eq.f32.partialorder %v2318, %v2334
        %vm2343 = vcmp.eq.f32.partialorder %v2319, %v2337
        %v2344 = vsel %vm2338, %v1785, 2147483647
        %v2345 = vsel %vm2339, %v1786, 2147483647
        %v2346 = vsel %vm2340, %v1787, 2147483647
        %v2347 = vsel %vm2341, %v1788, 2147483647
        %v2348 = vsel %vm2342, %v1789, 2147483647
        %v2349 = vsel %vm2343, %v1790, 2147483647
        %v2350 = vsel %vm1791, %v2344, 2147483647
        %v2351 = vand.u32 %v2350, 65535
        %v2352 = vshra.s32 %v2350, 16
        %v2353 = vcvt.s32.f32 %v2351
        %v2354 = vcvt.s32.f32 %v2352
        %2355 = vmin.xlane.f32.xlu0 %v2354
        %v2356 = vpop.xlane.xlu0 %2355
        %vm2357 = vcmp.eq.f32.partialorder %v2354, %v2356
        %v2358 = vsel %vm2357, %v2353, inf
        %2359 = vmin.xlane.f32.xlu0 %v2358
        %v2360 = vpop.xlane.xlu0 %2359
        %v2361 = vcvt.f32.s32 %v2360
        %v2362 = vcvt.f32.s32 %v2356
        %v2363 = vshll.u32 %v2362, 16
        %v2364 = vadd.s32 %v2363, %v2361
        %v2365 = vsel %vm1791, %v2345, 2147483647
        %v2366 = vand.u32 %v2365, 65535
        %v2367 = vshra.s32 %v2365, 16
        %v2368 = vcvt.s32.f32 %v2366
        %v2369 = vcvt.s32.f32 %v2367
        %2370 = vmin.xlane.f32.xlu0 %v2369
        %v2371 = vpop.xlane.xlu0 %2370
        %vm2372 = vcmp.eq.f32.partialorder %v2369, %v2371
        %v2373 = vsel %vm2372, %v2368, inf
        %2374 = vmin.xlane.f32.xlu0 %v2373
        %v2375 = vpop.xlane.xlu0 %2374
        %v2376 = vcvt.f32.s32 %v2375
        %v2377 = vcvt.f32.s32 %v2371
        %v2378 = vshll.u32 %v2377, 16
        %v2379 = vadd.s32 %v2378, %v2376
        %v2380 = vsel %vm1791, %v2346, 2147483647
        %v2381 = vand.u32 %v2380, 65535
        %v2382 = vshra.s32 %v2380, 16
        %v2383 = vcvt.s32.f32 %v2381
        %v2384 = vcvt.s32.f32 %v2382
        %2385 = vmin.xlane.f32.xlu0 %v2384
        %v2386 = vpop.xlane.xlu0 %2385
        %vm2387 = vcmp.eq.f32.partialorder %v2384, %v2386
        %v2388 = vsel %vm2387, %v2383, inf
        %2389 = vmin.xlane.f32.xlu0 %v2388
        %v2390 = vpop.xlane.xlu0 %2389
        %v2391 = vcvt.f32.s32 %v2390
        %v2392 = vcvt.f32.s32 %v2386
        %v2393 = vshll.u32 %v2392, 16
        %v2394 = vadd.s32 %v2393, %v2391
        %v2395 = vsel %vm1791, %v2347, 2147483647
        %v2396 = vand.u32 %v2395, 65535
        %v2397 = vshra.s32 %v2395, 16
        %v2398 = vcvt.s32.f32 %v2396
        %v2399 = vcvt.s32.f32 %v2397
        %2400 = vmin.xlane.f32.xlu0 %v2399
        %v2401 = vpop.xlane.xlu0 %2400
        %vm2402 = vcmp.eq.f32.partialorder %v2399, %v2401
        %v2403 = vsel %vm2402, %v2398, inf
        %2404 = vmin.xlane.f32.xlu0 %v2403
        %v2405 = vpop.xlane.xlu0 %2404
        %v2406 = vcvt.f32.s32 %v2405
        %v2407 = vcvt.f32.s32 %v2401
        %v2408 = vshll.u32 %v2407, 16
        %v2409 = vadd.s32 %v2408, %v2406
        %v2410 = vsel %vm1791, %v2348, 2147483647
        %v2411 = vand.u32 %v2410, 65535
        %v2412 = vshra.s32 %v2410, 16
        %v2413 = vcvt.s32.f32 %v2411
        %v2414 = vcvt.s32.f32 %v2412
        %2415 = vmin.xlane.f32.xlu0 %v2414
        %v2416 = vpop.xlane.xlu0 %2415
        %vm2417 = vcmp.eq.f32.partialorder %v2414, %v2416
        %v2418 = vsel %vm2417, %v2413, inf
        %2419 = vmin.xlane.f32.xlu0 %v2418
        %v2420 = vpop.xlane.xlu0 %2419
        %v2421 = vcvt.f32.s32 %v2420
        %v2422 = vcvt.f32.s32 %v2416
        %v2423 = vshll.u32 %v2422, 16
        %v2424 = vadd.s32 %v2423, %v2421
        %v2425 = vsel %vm1791, %v2349, 2147483647
        %v2426 = vand.u32 %v2425, 65535
        %v2427 = vshra.s32 %v2425, 16
        %v2428 = vcvt.s32.f32 %v2426
        %v2429 = vcvt.s32.f32 %v2427
        %2430 = vmin.xlane.f32.xlu0 %v2429
        %v2431 = vpop.xlane.xlu0 %2430
        %vm2432 = vcmp.eq.f32.partialorder %v2429, %v2431
        %v2433 = vsel %vm2432, %v2428, inf
        %2434 = vmin.xlane.f32.xlu0 %v2433
        %v2435 = vpop.xlane.xlu0 %2434
        %v2436 = vcvt.f32.s32 %v2435
        %v2437 = vcvt.f32.s32 %v2431
        %v2438 = vshll.u32 %v2437, 16
        %v2439 = vadd.s32 %v2438, %v2436
        %vm2440 = vcmp.eq.s32.totalorder %v2344, %v2364
        %vm2441 = vcmp.eq.s32.totalorder %v2345, %v2379
        %vm2442 = vcmp.eq.s32.totalorder %v2346, %v2394
        %vm2443 = vcmp.eq.s32.totalorder %v2347, %v2409
        %vm2444 = vcmp.eq.s32.totalorder %v2348, %v2424
        %vm2445 = vcmp.eq.s32.totalorder %v2349, %v2439
        %v2446 = vsel %vm2440, -inf, %v2314
        %v2447 = vsel %vm2441, -inf, %v2315
        %v2448 = vsel %vm2442, -inf, %v2316
        %v2449 = vsel %vm2443, -inf, %v2317
        %v2450 = vsel %vm2444, -inf, %v2318
        %v2451 = vsel %vm2445, -inf, %v2319
        %v2452 = vsel %vm1791, %v2446, -inf
        %2453 = vmax.xlane.f32.xlu0 %v2452
        %v2454 = vpop.xlane.xlu0 %2453
        %v2455 = vsel %vm1791, %v2447, -inf
        %2456 = vmax.xlane.f32.xlu0 %v2455
        %v2457 = vpop.xlane.xlu0 %2456
        %v2458 = vsel %vm1791, %v2448, -inf
        %2459 = vmax.xlane.f32.xlu0 %v2458
        %v2460 = vpop.xlane.xlu0 %2459
        %v2461 = vsel %vm1791, %v2449, -inf
        %2462 = vmax.xlane.f32.xlu0 %v2461
        %v2463 = vpop.xlane.xlu0 %2462
        %v2464 = vsel %vm1791, %v2450, -inf
        %2465 = vmax.xlane.f32.xlu0 %v2464
        %v2466 = vpop.xlane.xlu0 %2465
        %v2467 = vsel %vm1791, %v2451, -inf
        %2468 = vmax.xlane.f32.xlu0 %v2467
        %v2469 = vpop.xlane.xlu0 %2468
        %vm2470 = vcmp.eq.f32.partialorder %v2446, %v2454
        %vm2471 = vcmp.eq.f32.partialorder %v2447, %v2457
        %vm2472 = vcmp.eq.f32.partialorder %v2448, %v2460
        %vm2473 = vcmp.eq.f32.partialorder %v2449, %v2463
        %vm2474 = vcmp.eq.f32.partialorder %v2450, %v2466
        %vm2475 = vcmp.eq.f32.partialorder %v2451, %v2469
        %v2476 = vsel %vm2470, %v1785, 2147483647
        %v2477 = vsel %vm2471, %v1786, 2147483647
        %v2478 = vsel %vm2472, %v1787, 2147483647
        %v2479 = vsel %vm2473, %v1788, 2147483647
        %v2480 = vsel %vm2474, %v1789, 2147483647
        %v2481 = vsel %vm2475, %v1790, 2147483647
        %v2482 = vsel %vm1791, %v2476, 2147483647
        %v2483 = vand.u32 %v2482, 65535
        %v2484 = vshra.s32 %v2482, 16
        %v2485 = vcvt.s32.f32 %v2483
        %v2486 = vcvt.s32.f32 %v2484
        %2487 = vmin.xlane.f32.xlu0 %v2486
        %v2488 = vpop.xlane.xlu0 %2487
        %vm2489 = vcmp.eq.f32.partialorder %v2486, %v2488
        %v2490 = vsel %vm2489, %v2485, inf
        %2491 = vmin.xlane.f32.xlu0 %v2490
        %v2492 = vpop.xlane.xlu0 %2491
        %v2493 = vcvt.f32.s32 %v2492
        %v2494 = vcvt.f32.s32 %v2488
        %v2495 = vshll.u32 %v2494, 16
        %v2496 = vadd.s32 %v2495, %v2493
        %v2497 = vsel %vm1791, %v2477, 2147483647
        %v2498 = vand.u32 %v2497, 65535
        %v2499 = vshra.s32 %v2497, 16
        %v2500 = vcvt.s32.f32 %v2498
        %v2501 = vcvt.s32.f32 %v2499
        %2502 = vmin.xlane.f32.xlu0 %v2501
        %v2503 = vpop.xlane.xlu0 %2502
        %vm2504 = vcmp.eq.f32.partialorder %v2501, %v2503
        %v2505 = vsel %vm2504, %v2500, inf
        %2506 = vmin.xlane.f32.xlu0 %v2505
        %v2507 = vpop.xlane.xlu0 %2506
        %v2508 = vcvt.f32.s32 %v2507
        %v2509 = vcvt.f32.s32 %v2503
        %v2510 = vshll.u32 %v2509, 16
        %v2511 = vadd.s32 %v2510, %v2508
        %v2512 = vsel %vm1791, %v2478, 2147483647
        %v2513 = vand.u32 %v2512, 65535
        %v2514 = vshra.s32 %v2512, 16
        %v2515 = vcvt.s32.f32 %v2513
        %v2516 = vcvt.s32.f32 %v2514
        %2517 = vmin.xlane.f32.xlu0 %v2516
        %v2518 = vpop.xlane.xlu0 %2517
        %vm2519 = vcmp.eq.f32.partialorder %v2516, %v2518
        %v2520 = vsel %vm2519, %v2515, inf
        %2521 = vmin.xlane.f32.xlu0 %v2520
        %v2522 = vpop.xlane.xlu0 %2521
        %v2523 = vcvt.f32.s32 %v2522
        %v2524 = vcvt.f32.s32 %v2518
        %v2525 = vshll.u32 %v2524, 16
        %v2526 = vadd.s32 %v2525, %v2523
        %v2527 = vsel %vm1791, %v2479, 2147483647
        %v2528 = vand.u32 %v2527, 65535
        %v2529 = vshra.s32 %v2527, 16
        %v2530 = vcvt.s32.f32 %v2528
        %v2531 = vcvt.s32.f32 %v2529
        %2532 = vmin.xlane.f32.xlu0 %v2531
        %v2533 = vpop.xlane.xlu0 %2532
        %vm2534 = vcmp.eq.f32.partialorder %v2531, %v2533
        %v2535 = vsel %vm2534, %v2530, inf
        %2536 = vmin.xlane.f32.xlu0 %v2535
        %v2537 = vpop.xlane.xlu0 %2536
        %v2538 = vcvt.f32.s32 %v2537
        %v2539 = vcvt.f32.s32 %v2533
        %v2540 = vshll.u32 %v2539, 16
        %v2541 = vadd.s32 %v2540, %v2538
        %v2542 = vsel %vm1791, %v2480, 2147483647
        %v2543 = vand.u32 %v2542, 65535
        %v2544 = vshra.s32 %v2542, 16
        %v2545 = vcvt.s32.f32 %v2543
        %v2546 = vcvt.s32.f32 %v2544
        %2547 = vmin.xlane.f32.xlu0 %v2546
        %v2548 = vpop.xlane.xlu0 %2547
        %vm2549 = vcmp.eq.f32.partialorder %v2546, %v2548
        %v2550 = vsel %vm2549, %v2545, inf
        %2551 = vmin.xlane.f32.xlu0 %v2550
        %v2552 = vpop.xlane.xlu0 %2551
        %v2553 = vcvt.f32.s32 %v2552
        %v2554 = vcvt.f32.s32 %v2548
        %v2555 = vshll.u32 %v2554, 16
        %v2556 = vadd.s32 %v2555, %v2553
        %v2557 = vsel %vm1791, %v2481, 2147483647
        %v2558 = vand.u32 %v2557, 65535
        %v2559 = vshra.s32 %v2557, 16
        %v2560 = vcvt.s32.f32 %v2558
        %v2561 = vcvt.s32.f32 %v2559
        %2562 = vmin.xlane.f32.xlu0 %v2561
        %v2563 = vpop.xlane.xlu0 %2562
        %vm2564 = vcmp.eq.f32.partialorder %v2561, %v2563
        %v2565 = vsel %vm2564, %v2560, inf
        %2566 = vmin.xlane.f32.xlu0 %v2565
        %v2567 = vpop.xlane.xlu0 %2566
        %v2568 = vcvt.f32.s32 %v2567
        %v2569 = vcvt.f32.s32 %v2563
        %v2570 = vshll.u32 %v2569, 16
        %v2571 = vadd.s32 %v2570, %v2568
        %vm2572 = vcmp.eq.s32.totalorder %v2476, %v2496
        %vm2573 = vcmp.eq.s32.totalorder %v2477, %v2511
        %vm2574 = vcmp.eq.s32.totalorder %v2478, %v2526
        %vm2575 = vcmp.eq.s32.totalorder %v2479, %v2541
        %vm2576 = vcmp.eq.s32.totalorder %v2480, %v2556
        %vm2577 = vcmp.eq.s32.totalorder %v2481, %v2571
        %v2578 = vsel %vm2572, -inf, %v2446
        %v2579 = vsel %vm2573, -inf, %v2447
        %v2580 = vsel %vm2574, -inf, %v2448
        %v2581 = vsel %vm2575, -inf, %v2449
        %v2582 = vsel %vm2576, -inf, %v2450
        %v2583 = vsel %vm2577, -inf, %v2451
        %v2584 = vsel %vm1791, %v2578, -inf
        %2585 = vmax.xlane.f32.xlu0 %v2584
        %v2586 = vpop.xlane.xlu0 %2585
        %v2587 = vsel %vm1791, %v2579, -inf
        %2588 = vmax.xlane.f32.xlu0 %v2587
        %v2589 = vpop.xlane.xlu0 %2588
        %v2590 = vsel %vm1791, %v2580, -inf
        %2591 = vmax.xlane.f32.xlu0 %v2590
        %v2592 = vpop.xlane.xlu0 %2591
        %v2593 = vsel %vm1791, %v2581, -inf
        %2594 = vmax.xlane.f32.xlu0 %v2593
        %v2595 = vpop.xlane.xlu0 %2594
        %v2596 = vsel %vm1791, %v2582, -inf
        %2597 = vmax.xlane.f32.xlu0 %v2596
        %v2598 = vpop.xlane.xlu0 %2597
        %v2599 = vsel %vm1791, %v2583, -inf
        %2600 = vmax.xlane.f32.xlu0 %v2599
        %v2601 = vpop.xlane.xlu0 %2600
        %vm2602 = vcmp.eq.f32.partialorder %v2578, %v2586
        %vm2603 = vcmp.eq.f32.partialorder %v2579, %v2589
        %vm2604 = vcmp.eq.f32.partialorder %v2580, %v2592
        %vm2605 = vcmp.eq.f32.partialorder %v2581, %v2595
        %vm2606 = vcmp.eq.f32.partialorder %v2582, %v2598
        %vm2607 = vcmp.eq.f32.partialorder %v2583, %v2601
        %v2608 = vsel %vm2602, %v1785, 2147483647
        %v2609 = vsel %vm2603, %v1786, 2147483647
        %v2610 = vsel %vm2604, %v1787, 2147483647
        %v2611 = vsel %vm2605, %v1788, 2147483647
        %v2612 = vsel %vm2606, %v1789, 2147483647
        %v2613 = vsel %vm2607, %v1790, 2147483647
        %v2614 = vsel %vm1791, %v2608, 2147483647
        %v2615 = vand.u32 %v2614, 65535
        %v2616 = vshra.s32 %v2614, 16
        %v2617 = vcvt.s32.f32 %v2615
        %v2618 = vcvt.s32.f32 %v2616
        %2619 = vmin.xlane.f32.xlu0 %v2618
        %v2620 = vpop.xlane.xlu0 %2619
        %vm2621 = vcmp.eq.f32.partialorder %v2618, %v2620
        %v2622 = vsel %vm2621, %v2617, inf
        %2623 = vmin.xlane.f32.xlu0 %v2622
        %v2624 = vpop.xlane.xlu0 %2623
        %v2625 = vcvt.f32.s32 %v2624
        %v2626 = vcvt.f32.s32 %v2620
        %v2627 = vshll.u32 %v2626, 16
        %v2628 = vadd.s32 %v2627, %v2625
        %v2629 = vsel %vm1791, %v2609, 2147483647
        %v2630 = vand.u32 %v2629, 65535
        %v2631 = vshra.s32 %v2629, 16
        %v2632 = vcvt.s32.f32 %v2630
        %v2633 = vcvt.s32.f32 %v2631
        %2634 = vmin.xlane.f32.xlu0 %v2633
        %v2635 = vpop.xlane.xlu0 %2634
        %vm2636 = vcmp.eq.f32.partialorder %v2633, %v2635
        %v2637 = vsel %vm2636, %v2632, inf
        %2638 = vmin.xlane.f32.xlu0 %v2637
        %v2639 = vpop.xlane.xlu0 %2638
        %v2640 = vcvt.f32.s32 %v2639
        %v2641 = vcvt.f32.s32 %v2635
        %v2642 = vshll.u32 %v2641, 16
        %v2643 = vadd.s32 %v2642, %v2640
        %v2644 = vsel %vm1791, %v2610, 2147483647
        %v2645 = vand.u32 %v2644, 65535
        %v2646 = vshra.s32 %v2644, 16
        %v2647 = vcvt.s32.f32 %v2645
        %v2648 = vcvt.s32.f32 %v2646
        %2649 = vmin.xlane.f32.xlu0 %v2648
        %v2650 = vpop.xlane.xlu0 %2649
        %vm2651 = vcmp.eq.f32.partialorder %v2648, %v2650
        %v2652 = vsel %vm2651, %v2647, inf
        %2653 = vmin.xlane.f32.xlu0 %v2652
        %v2654 = vpop.xlane.xlu0 %2653
        %v2655 = vcvt.f32.s32 %v2654
        %v2656 = vcvt.f32.s32 %v2650
        %v2657 = vshll.u32 %v2656, 16
        %v2658 = vadd.s32 %v2657, %v2655
        %v2659 = vsel %vm1791, %v2611, 2147483647
        %v2660 = vand.u32 %v2659, 65535
        %v2661 = vshra.s32 %v2659, 16
        %v2662 = vcvt.s32.f32 %v2660
        %v2663 = vcvt.s32.f32 %v2661
        %2664 = vmin.xlane.f32.xlu0 %v2663
        %v2665 = vpop.xlane.xlu0 %2664
        %vm2666 = vcmp.eq.f32.partialorder %v2663, %v2665
        %v2667 = vsel %vm2666, %v2662, inf
        %2668 = vmin.xlane.f32.xlu0 %v2667
        %v2669 = vpop.xlane.xlu0 %2668
        %v2670 = vcvt.f32.s32 %v2669
        %v2671 = vcvt.f32.s32 %v2665
        %v2672 = vshll.u32 %v2671, 16
        %v2673 = vadd.s32 %v2672, %v2670
        %v2674 = vsel %vm1791, %v2612, 2147483647
        %v2675 = vand.u32 %v2674, 65535
        %v2676 = vshra.s32 %v2674, 16
        %v2677 = vcvt.s32.f32 %v2675
        %v2678 = vcvt.s32.f32 %v2676
        %2679 = vmin.xlane.f32.xlu0 %v2678
        %v2680 = vpop.xlane.xlu0 %2679
        %vm2681 = vcmp.eq.f32.partialorder %v2678, %v2680
        %v2682 = vsel %vm2681, %v2677, inf
        %2683 = vmin.xlane.f32.xlu0 %v2682
        %v2684 = vpop.xlane.xlu0 %2683
        %v2685 = vcvt.f32.s32 %v2684
        %v2686 = vcvt.f32.s32 %v2680
        %v2687 = vshll.u32 %v2686, 16
        %v2688 = vadd.s32 %v2687, %v2685
        %v2689 = vsel %vm1791, %v2613, 2147483647
        %v2690 = vand.u32 %v2689, 65535
        %v2691 = vshra.s32 %v2689, 16
        %v2692 = vcvt.s32.f32 %v2690
        %v2693 = vcvt.s32.f32 %v2691
        %2694 = vmin.xlane.f32.xlu0 %v2693
        %v2695 = vpop.xlane.xlu0 %2694
        %vm2696 = vcmp.eq.f32.partialorder %v2693, %v2695
        %v2697 = vsel %vm2696, %v2692, inf
        %2698 = vmin.xlane.f32.xlu0 %v2697
        %v2699 = vpop.xlane.xlu0 %2698
        %v2700 = vcvt.f32.s32 %v2699
        %v2701 = vcvt.f32.s32 %v2695
        %v2702 = vshll.u32 %v2701, 16
        %v2703 = vadd.s32 %v2702, %v2700
        %vm2704 = vcmp.eq.s32.totalorder %v2608, %v2628
        %vm2705 = vcmp.eq.s32.totalorder %v2609, %v2643
        %vm2706 = vcmp.eq.s32.totalorder %v2610, %v2658
        %vm2707 = vcmp.eq.s32.totalorder %v2611, %v2673
        %vm2708 = vcmp.eq.s32.totalorder %v2612, %v2688
        %vm2709 = vcmp.eq.s32.totalorder %v2613, %v2703
        %v2710 = vsel %vm2704, -inf, %v2578
        %v2711 = vsel %vm2705, -inf, %v2579
        %v2712 = vsel %vm2706, -inf, %v2580
        %v2713 = vsel %vm2707, -inf, %v2581
        %v2714 = vsel %vm2708, -inf, %v2582
        %v2715 = vsel %vm2709, -inf, %v2583
        %v2716 = vsel %vm1791, %v2710, -inf
        %2717 = vmax.xlane.f32.xlu0 %v2716
        %v2718 = vpop.xlane.xlu0 %2717
        %v2719 = vsel %vm1791, %v2711, -inf
        %2720 = vmax.xlane.f32.xlu0 %v2719
        %v2721 = vpop.xlane.xlu0 %2720
        %v2722 = vsel %vm1791, %v2712, -inf
        %2723 = vmax.xlane.f32.xlu0 %v2722
        %v2724 = vpop.xlane.xlu0 %2723
        %v2725 = vsel %vm1791, %v2713, -inf
        %2726 = vmax.xlane.f32.xlu0 %v2725
        %v2727 = vpop.xlane.xlu0 %2726
        %v2728 = vsel %vm1791, %v2714, -inf
        %2729 = vmax.xlane.f32.xlu0 %v2728
        %v2730 = vpop.xlane.xlu0 %2729
        %v2731 = vsel %vm1791, %v2715, -inf
        %2732 = vmax.xlane.f32.xlu0 %v2731
        %v2733 = vpop.xlane.xlu0 %2732
        %vm2734 = vcmp.eq.f32.partialorder %v2710, %v2718
        %vm2735 = vcmp.eq.f32.partialorder %v2711, %v2721
        %vm2736 = vcmp.eq.f32.partialorder %v2712, %v2724
        %vm2737 = vcmp.eq.f32.partialorder %v2713, %v2727
        %vm2738 = vcmp.eq.f32.partialorder %v2714, %v2730
        %vm2739 = vcmp.eq.f32.partialorder %v2715, %v2733
        %v2740 = vsel %vm2734, %v1785, 2147483647
        %v2741 = vsel %vm2735, %v1786, 2147483647
        %v2742 = vsel %vm2736, %v1787, 2147483647
        %v2743 = vsel %vm2737, %v1788, 2147483647
        %v2744 = vsel %vm2738, %v1789, 2147483647
        %v2745 = vsel %vm2739, %v1790, 2147483647
        %v2746 = vsel %vm1791, %v2740, 2147483647
        %v2747 = vand.u32 %v2746, 65535
        %v2748 = vshra.s32 %v2746, 16
        %v2749 = vcvt.s32.f32 %v2747
        %v2750 = vcvt.s32.f32 %v2748
        %2751 = vmin.xlane.f32.xlu0 %v2750
        %v2752 = vpop.xlane.xlu0 %2751
        %vm2753 = vcmp.eq.f32.partialorder %v2750, %v2752
        %v2754 = vsel %vm2753, %v2749, inf
        %2755 = vmin.xlane.f32.xlu0 %v2754
        %v2756 = vpop.xlane.xlu0 %2755
        %v2757 = vcvt.f32.s32 %v2756
        %v2758 = vcvt.f32.s32 %v2752
        %v2759 = vshll.u32 %v2758, 16
        %v2760 = vadd.s32 %v2759, %v2757
        %v2761 = vsel %vm1791, %v2741, 2147483647
        %v2762 = vand.u32 %v2761, 65535
        %v2763 = vshra.s32 %v2761, 16
        %v2764 = vcvt.s32.f32 %v2762
        %v2765 = vcvt.s32.f32 %v2763
        %2766 = vmin.xlane.f32.xlu0 %v2765
        %v2767 = vpop.xlane.xlu0 %2766
        %vm2768 = vcmp.eq.f32.partialorder %v2765, %v2767
        %v2769 = vsel %vm2768, %v2764, inf
        %2770 = vmin.xlane.f32.xlu0 %v2769
        %v2771 = vpop.xlane.xlu0 %2770
        %v2772 = vcvt.f32.s32 %v2771
        %v2773 = vcvt.f32.s32 %v2767
        %v2774 = vshll.u32 %v2773, 16
        %v2775 = vadd.s32 %v2774, %v2772
        %v2776 = vsel %vm1791, %v2742, 2147483647
        %v2777 = vand.u32 %v2776, 65535
        %v2778 = vshra.s32 %v2776, 16
        %v2779 = vcvt.s32.f32 %v2777
        %v2780 = vcvt.s32.f32 %v2778
        %2781 = vmin.xlane.f32.xlu0 %v2780
        %v2782 = vpop.xlane.xlu0 %2781
        %vm2783 = vcmp.eq.f32.partialorder %v2780, %v2782
        %v2784 = vsel %vm2783, %v2779, inf
        %2785 = vmin.xlane.f32.xlu0 %v2784
        %v2786 = vpop.xlane.xlu0 %2785
        %v2787 = vcvt.f32.s32 %v2786
        %v2788 = vcvt.f32.s32 %v2782
        %v2789 = vshll.u32 %v2788, 16
        %v2790 = vadd.s32 %v2789, %v2787
        %v2791 = vsel %vm1791, %v2743, 2147483647
        %v2792 = vand.u32 %v2791, 65535
        %v2793 = vshra.s32 %v2791, 16
        %v2794 = vcvt.s32.f32 %v2792
        %v2795 = vcvt.s32.f32 %v2793
        %2796 = vmin.xlane.f32.xlu0 %v2795
        %v2797 = vpop.xlane.xlu0 %2796
        %vm2798 = vcmp.eq.f32.partialorder %v2795, %v2797
        %v2799 = vsel %vm2798, %v2794, inf
        %2800 = vmin.xlane.f32.xlu0 %v2799
        %v2801 = vpop.xlane.xlu0 %2800
        %v2802 = vcvt.f32.s32 %v2801
        %v2803 = vcvt.f32.s32 %v2797
        %v2804 = vshll.u32 %v2803, 16
        %v2805 = vadd.s32 %v2804, %v2802
        %v2806 = vsel %vm1791, %v2744, 2147483647
        %v2807 = vand.u32 %v2806, 65535
        %v2808 = vshra.s32 %v2806, 16
        %v2809 = vcvt.s32.f32 %v2807
        %v2810 = vcvt.s32.f32 %v2808
        %2811 = vmin.xlane.f32.xlu0 %v2810
        %v2812 = vpop.xlane.xlu0 %2811
        %vm2813 = vcmp.eq.f32.partialorder %v2810, %v2812
        %v2814 = vsel %vm2813, %v2809, inf
        %2815 = vmin.xlane.f32.xlu0 %v2814
        %v2816 = vpop.xlane.xlu0 %2815
        %v2817 = vcvt.f32.s32 %v2816
        %v2818 = vcvt.f32.s32 %v2812
        %v2819 = vshll.u32 %v2818, 16
        %v2820 = vadd.s32 %v2819, %v2817
        %v2821 = vsel %vm1791, %v2745, 2147483647
        %v2822 = vand.u32 %v2821, 65535
        %v2823 = vshra.s32 %v2821, 16
        %v2824 = vcvt.s32.f32 %v2822
        %v2825 = vcvt.s32.f32 %v2823
        %2826 = vmin.xlane.f32.xlu0 %v2825
        %v2827 = vpop.xlane.xlu0 %2826
        %vm2828 = vcmp.eq.f32.partialorder %v2825, %v2827
        %v2829 = vsel %vm2828, %v2824, inf
        %2830 = vmin.xlane.f32.xlu0 %v2829
        %v2831 = vpop.xlane.xlu0 %2830
        %v2832 = vcvt.f32.s32 %v2831
        %v2833 = vcvt.f32.s32 %v2827
        %v2834 = vshll.u32 %v2833, 16
        %v2835 = vadd.s32 %v2834, %v2832
        %vm2836 = vcmp.eq.s32.totalorder %v2740, %v2760
        %vm2837 = vcmp.eq.s32.totalorder %v2741, %v2775
        %vm2838 = vcmp.eq.s32.totalorder %v2742, %v2790
        %vm2839 = vcmp.eq.s32.totalorder %v2743, %v2805
        %vm2840 = vcmp.eq.s32.totalorder %v2744, %v2820
        %vm2841 = vcmp.eq.s32.totalorder %v2745, %v2835
        %v2842 = vsel %vm2836, -inf, %v2710
        %v2843 = vsel %vm2837, -inf, %v2711
        %v2844 = vsel %vm2838, -inf, %v2712
        %v2845 = vsel %vm2839, -inf, %v2713
        %v2846 = vsel %vm2840, -inf, %v2714
        %v2847 = vsel %vm2841, -inf, %v2715
        %v2848 = vsel %vm1791, %v2842, -inf
        %2849 = vmax.xlane.f32.xlu0 %v2848
        %v2850 = vpop.xlane.xlu0 %2849
        %v2851 = vsel %vm1791, %v2843, -inf
        %2852 = vmax.xlane.f32.xlu0 %v2851
        %v2853 = vpop.xlane.xlu0 %2852
        %v2854 = vsel %vm1791, %v2844, -inf
        %2855 = vmax.xlane.f32.xlu0 %v2854
        %v2856 = vpop.xlane.xlu0 %2855
        %v2857 = vsel %vm1791, %v2845, -inf
        %2858 = vmax.xlane.f32.xlu0 %v2857
        %v2859 = vpop.xlane.xlu0 %2858
        %v2860 = vsel %vm1791, %v2846, -inf
        %2861 = vmax.xlane.f32.xlu0 %v2860
        %v2862 = vpop.xlane.xlu0 %2861
        %v2863 = vsel %vm1791, %v2847, -inf
        %2864 = vmax.xlane.f32.xlu0 %v2863
        %v2865 = vpop.xlane.xlu0 %2864
        %vm2866 = vcmp.eq.f32.partialorder %v2842, %v2850
        %vm2867 = vcmp.eq.f32.partialorder %v2843, %v2853
        %vm2868 = vcmp.eq.f32.partialorder %v2844, %v2856
        %vm2869 = vcmp.eq.f32.partialorder %v2845, %v2859
        %vm2870 = vcmp.eq.f32.partialorder %v2846, %v2862
        %vm2871 = vcmp.eq.f32.partialorder %v2847, %v2865
        %v2872 = vsel %vm2866, %v1785, 2147483647
        %v2873 = vsel %vm2867, %v1786, 2147483647
        %v2874 = vsel %vm2868, %v1787, 2147483647
        %v2875 = vsel %vm2869, %v1788, 2147483647
        %v2876 = vsel %vm2870, %v1789, 2147483647
        %v2877 = vsel %vm2871, %v1790, 2147483647
        %v2878 = vsel %vm1791, %v2872, 2147483647
        %v2879 = vand.u32 %v2878, 65535
        %v2880 = vshra.s32 %v2878, 16
        %v2881 = vcvt.s32.f32 %v2879
        %v2882 = vcvt.s32.f32 %v2880
        %2883 = vmin.xlane.f32.xlu0 %v2882
        %v2884 = vpop.xlane.xlu0 %2883
        %vm2885 = vcmp.eq.f32.partialorder %v2882, %v2884
        %v2886 = vsel %vm2885, %v2881, inf
        %2887 = vmin.xlane.f32.xlu0 %v2886
        %v2888 = vpop.xlane.xlu0 %2887
        %v2889 = vcvt.f32.s32 %v2888
        %v2890 = vcvt.f32.s32 %v2884
        %v2891 = vshll.u32 %v2890, 16
        %v2892 = vadd.s32 %v2891, %v2889
        %v2893 = vsel %vm1791, %v2873, 2147483647
        %v2894 = vand.u32 %v2893, 65535
        %v2895 = vshra.s32 %v2893, 16
        %v2896 = vcvt.s32.f32 %v2894
        %v2897 = vcvt.s32.f32 %v2895
        %2898 = vmin.xlane.f32.xlu0 %v2897
        %v2899 = vpop.xlane.xlu0 %2898
        %vm2900 = vcmp.eq.f32.partialorder %v2897, %v2899
        %v2901 = vsel %vm2900, %v2896, inf
        %2902 = vmin.xlane.f32.xlu0 %v2901
        %v2903 = vpop.xlane.xlu0 %2902
        %v2904 = vcvt.f32.s32 %v2903
        %v2905 = vcvt.f32.s32 %v2899
        %v2906 = vshll.u32 %v2905, 16
        %v2907 = vadd.s32 %v2906, %v2904
        %v2908 = vsel %vm1791, %v2874, 2147483647
        %v2909 = vand.u32 %v2908, 65535
        %v2910 = vshra.s32 %v2908, 16
        %v2911 = vcvt.s32.f32 %v2909
        %v2912 = vcvt.s32.f32 %v2910
        %2913 = vmin.xlane.f32.xlu0 %v2912
        %v2914 = vpop.xlane.xlu0 %2913
        %vm2915 = vcmp.eq.f32.partialorder %v2912, %v2914
        %v2916 = vsel %vm2915, %v2911, inf
        %2917 = vmin.xlane.f32.xlu0 %v2916
        %v2918 = vpop.xlane.xlu0 %2917
        %v2919 = vcvt.f32.s32 %v2918
        %v2920 = vcvt.f32.s32 %v2914
        %v2921 = vshll.u32 %v2920, 16
        %v2922 = vadd.s32 %v2921, %v2919
        %v2923 = vsel %vm1791, %v2875, 2147483647
        %v2924 = vand.u32 %v2923, 65535
        %v2925 = vshra.s32 %v2923, 16
        %v2926 = vcvt.s32.f32 %v2924
        %v2927 = vcvt.s32.f32 %v2925
        %2928 = vmin.xlane.f32.xlu0 %v2927
        %v2929 = vpop.xlane.xlu0 %2928
        %vm2930 = vcmp.eq.f32.partialorder %v2927, %v2929
        %v2931 = vsel %vm2930, %v2926, inf
        %2932 = vmin.xlane.f32.xlu0 %v2931
        %v2933 = vpop.xlane.xlu0 %2932
        %v2934 = vcvt.f32.s32 %v2933
        %v2935 = vcvt.f32.s32 %v2929
        %v2936 = vshll.u32 %v2935, 16
        %v2937 = vadd.s32 %v2936, %v2934
        %v2938 = vsel %vm1791, %v2876, 2147483647
        %v2939 = vand.u32 %v2938, 65535
        %v2940 = vshra.s32 %v2938, 16
        %v2941 = vcvt.s32.f32 %v2939
        %v2942 = vcvt.s32.f32 %v2940
        %2943 = vmin.xlane.f32.xlu0 %v2942
        %v2944 = vpop.xlane.xlu0 %2943
        %vm2945 = vcmp.eq.f32.partialorder %v2942, %v2944
        %v2946 = vsel %vm2945, %v2941, inf
        %2947 = vmin.xlane.f32.xlu0 %v2946
        %v2948 = vpop.xlane.xlu0 %2947
        %v2949 = vcvt.f32.s32 %v2948
        %v2950 = vcvt.f32.s32 %v2944
        %v2951 = vshll.u32 %v2950, 16
        %v2952 = vadd.s32 %v2951, %v2949
        %v2953 = vsel %vm1791, %v2877, 2147483647
        %v2954 = vand.u32 %v2953, 65535
        %v2955 = vshra.s32 %v2953, 16
        %v2956 = vcvt.s32.f32 %v2954
        %v2957 = vcvt.s32.f32 %v2955
        %2958 = vmin.xlane.f32.xlu0 %v2957
        %v2959 = vpop.xlane.xlu0 %2958
        %vm2960 = vcmp.eq.f32.partialorder %v2957, %v2959
        %v2961 = vsel %vm2960, %v2956, inf
        %2962 = vmin.xlane.f32.xlu0 %v2961
        %v2963 = vpop.xlane.xlu0 %2962
        %v2964 = vcvt.f32.s32 %v2963
        %v2965 = vcvt.f32.s32 %v2959
        %v2966 = vshll.u32 %v2965, 16
        %v2967 = vadd.s32 %v2966, %v2964
        %vm2968 = vcmp.eq.s32.totalorder %v2872, %v2892
        %vm2969 = vcmp.eq.s32.totalorder %v2873, %v2907
        %vm2970 = vcmp.eq.s32.totalorder %v2874, %v2922
        %vm2971 = vcmp.eq.s32.totalorder %v2875, %v2937
        %vm2972 = vcmp.eq.s32.totalorder %v2876, %v2952
        %vm2973 = vcmp.eq.s32.totalorder %v2877, %v2967
        %v2974 = vsel %vm2968, -inf, %v2842
        %v2975 = vsel %vm2969, -inf, %v2843
        %v2976 = vsel %vm2970, -inf, %v2844
        %v2977 = vsel %vm2971, -inf, %v2845
        %v2978 = vsel %vm2972, -inf, %v2846
        %v2979 = vsel %vm2973, -inf, %v2847
        %v2980 = vsel %vm1791, %v2974, -inf
        %2981 = vmax.xlane.f32.xlu0 %v2980
        %v2982 = vpop.xlane.xlu0 %2981
        %v2983 = vsel %vm1791, %v2975, -inf
        %2984 = vmax.xlane.f32.xlu0 %v2983
        %v2985 = vpop.xlane.xlu0 %2984
        %v2986 = vsel %vm1791, %v2976, -inf
        %2987 = vmax.xlane.f32.xlu0 %v2986
        %v2988 = vpop.xlane.xlu0 %2987
        %v2989 = vsel %vm1791, %v2977, -inf
        %2990 = vmax.xlane.f32.xlu0 %v2989
        %v2991 = vpop.xlane.xlu0 %2990
        %v2992 = vsel %vm1791, %v2978, -inf
        %2993 = vmax.xlane.f32.xlu0 %v2992
        %v2994 = vpop.xlane.xlu0 %2993
        %v2995 = vsel %vm1791, %v2979, -inf
        %2996 = vmax.xlane.f32.xlu0 %v2995
        %v2997 = vpop.xlane.xlu0 %2996
        %vm2998 = vcmp.eq.f32.partialorder %v2974, %v2982
        %vm2999 = vcmp.eq.f32.partialorder %v2975, %v2985
        %vm3000 = vcmp.eq.f32.partialorder %v2976, %v2988
        %vm3001 = vcmp.eq.f32.partialorder %v2977, %v2991
        %vm3002 = vcmp.eq.f32.partialorder %v2978, %v2994
        %vm3003 = vcmp.eq.f32.partialorder %v2979, %v2997
        %v3004 = vsel %vm2998, %v1785, 2147483647
        %v3005 = vsel %vm2999, %v1786, 2147483647
        %v3006 = vsel %vm3000, %v1787, 2147483647
        %v3007 = vsel %vm3001, %v1788, 2147483647
        %v3008 = vsel %vm3002, %v1789, 2147483647
        %v3009 = vsel %vm3003, %v1790, 2147483647
        %v3010 = vsel %vm1791, %v3004, 2147483647
        %v3011 = vand.u32 %v3010, 65535
        %v3012 = vshra.s32 %v3010, 16
        %v3013 = vcvt.s32.f32 %v3011
        %v3014 = vcvt.s32.f32 %v3012
        %3015 = vmin.xlane.f32.xlu0 %v3014
        %v3016 = vpop.xlane.xlu0 %3015
        %vm3017 = vcmp.eq.f32.partialorder %v3014, %v3016
        %v3018 = vsel %vm3017, %v3013, inf
        %3019 = vmin.xlane.f32.xlu0 %v3018
        %v3020 = vpop.xlane.xlu0 %3019
        %v3021 = vcvt.f32.s32 %v3020
        %v3022 = vcvt.f32.s32 %v3016
        %v3023 = vshll.u32 %v3022, 16
        %v3024 = vadd.s32 %v3023, %v3021
        %v3025 = vsel %vm1791, %v3005, 2147483647
        %v3026 = vand.u32 %v3025, 65535
        %v3027 = vshra.s32 %v3025, 16
        %v3028 = vcvt.s32.f32 %v3026
        %v3029 = vcvt.s32.f32 %v3027
        %3030 = vmin.xlane.f32.xlu0 %v3029
        %v3031 = vpop.xlane.xlu0 %3030
        %vm3032 = vcmp.eq.f32.partialorder %v3029, %v3031
        %v3033 = vsel %vm3032, %v3028, inf
        %3034 = vmin.xlane.f32.xlu0 %v3033
        %v3035 = vpop.xlane.xlu0 %3034
        %v3036 = vcvt.f32.s32 %v3035
        %v3037 = vcvt.f32.s32 %v3031
        %v3038 = vshll.u32 %v3037, 16
        %v3039 = vadd.s32 %v3038, %v3036
        %v3040 = vsel %vm1791, %v3006, 2147483647
        %v3041 = vand.u32 %v3040, 65535
        %v3042 = vshra.s32 %v3040, 16
        %v3043 = vcvt.s32.f32 %v3041
        %v3044 = vcvt.s32.f32 %v3042
        %3045 = vmin.xlane.f32.xlu0 %v3044
        %v3046 = vpop.xlane.xlu0 %3045
        %vm3047 = vcmp.eq.f32.partialorder %v3044, %v3046
        %v3048 = vsel %vm3047, %v3043, inf
        %3049 = vmin.xlane.f32.xlu0 %v3048
        %v3050 = vpop.xlane.xlu0 %3049
        %v3051 = vcvt.f32.s32 %v3050
        %v3052 = vcvt.f32.s32 %v3046
        %v3053 = vshll.u32 %v3052, 16
        %v3054 = vadd.s32 %v3053, %v3051
        %v3055 = vsel %vm1791, %v3007, 2147483647
        %v3056 = vand.u32 %v3055, 65535
        %v3057 = vshra.s32 %v3055, 16
        %v3058 = vcvt.s32.f32 %v3056
        %v3059 = vcvt.s32.f32 %v3057
        %3060 = vmin.xlane.f32.xlu0 %v3059
        %v3061 = vpop.xlane.xlu0 %3060
        %vm3062 = vcmp.eq.f32.partialorder %v3059, %v3061
        %v3063 = vsel %vm3062, %v3058, inf
        %3064 = vmin.xlane.f32.xlu0 %v3063
        %v3065 = vpop.xlane.xlu0 %3064
        %v3066 = vcvt.f32.s32 %v3065
        %v3067 = vcvt.f32.s32 %v3061
        %v3068 = vshll.u32 %v3067, 16
        %v3069 = vadd.s32 %v3068, %v3066
        %v3070 = vsel %vm1791, %v3008, 2147483647
        %v3071 = vand.u32 %v3070, 65535
        %v3072 = vshra.s32 %v3070, 16
        %v3073 = vcvt.s32.f32 %v3071
        %v3074 = vcvt.s32.f32 %v3072
        %3075 = vmin.xlane.f32.xlu0 %v3074
        %v3076 = vpop.xlane.xlu0 %3075
        %vm3077 = vcmp.eq.f32.partialorder %v3074, %v3076
        %v3078 = vsel %vm3077, %v3073, inf
        %3079 = vmin.xlane.f32.xlu0 %v3078
        %v3080 = vpop.xlane.xlu0 %3079
        %v3081 = vcvt.f32.s32 %v3080
        %v3082 = vcvt.f32.s32 %v3076
        %v3083 = vshll.u32 %v3082, 16
        %v3084 = vadd.s32 %v3083, %v3081
        %v3085 = vsel %vm1791, %v3009, 2147483647
        %v3086 = vand.u32 %v3085, 65535
        %v3087 = vshra.s32 %v3085, 16
        %v3088 = vcvt.s32.f32 %v3086
        %v3089 = vcvt.s32.f32 %v3087
        %3090 = vmin.xlane.f32.xlu0 %v3089
        %v3091 = vpop.xlane.xlu0 %3090
        %vm3092 = vcmp.eq.f32.partialorder %v3089, %v3091
        %v3093 = vsel %vm3092, %v3088, inf
        %3094 = vmin.xlane.f32.xlu0 %v3093
        %v3095 = vpop.xlane.xlu0 %3094
        %v3096 = vcvt.f32.s32 %v3095
        %v3097 = vcvt.f32.s32 %v3091
        %v3098 = vshll.u32 %v3097, 16
        %v3099 = vadd.s32 %v3098, %v3096
        %v3100 = vsel %vm1613, %v1794, %v1926
        %v3101 = vsel %vm1613, %v1797, %v1929
        %v3102 = vsel %vm1613, %v1800, %v1932
        %v3103 = vsel %vm1613, %v1803, %v1935
        %v3104 = vsel %vm1613, %v1806, %v1938
        %v3105 = vsel %vm1613, %v1809, %v1941
        %v3106 = vsel %vm1620, %v3100, %v2058
        %v3107 = vsel %vm1620, %v3101, %v2061
        %v3108 = vsel %vm1620, %v3102, %v2064
        %v3109 = vsel %vm1620, %v3103, %v2067
        %v3110 = vsel %vm1620, %v3104, %v2070
        %v3111 = vsel %vm1620, %v3105, %v2073
        %v3112 = vsel %vm1627, %v3106, %v2190
        %v3113 = vsel %vm1627, %v3107, %v2193
        %v3114 = vsel %vm1627, %v3108, %v2196
        %v3115 = vsel %vm1627, %v3109, %v2199
        %v3116 = vsel %vm1627, %v3110, %v2202
        %v3117 = vsel %vm1627, %v3111, %v2205
        %v3118 = vsel %vm1634, %v3112, %v2322
        %v3119 = vsel %vm1634, %v3113, %v2325
        %v3120 = vsel %vm1634, %v3114, %v2328
        %v3121 = vsel %vm1634, %v3115, %v2331
        %v3122 = vsel %vm1634, %v3116, %v2334
        %v3123 = vsel %vm1634, %v3117, %v2337
        %v3124 = vsel %vm1641, %v3118, %v2454
        %v3125 = vsel %vm1641, %v3119, %v2457
        %v3126 = vsel %vm1641, %v3120, %v2460
        %v3127 = vsel %vm1641, %v3121, %v2463
        %v3128 = vsel %vm1641, %v3122, %v2466
        %v3129 = vsel %vm1641, %v3123, %v2469
        %v3130 = vsel %vm1648, %v3124, %v2586
        %v3131 = vsel %vm1648, %v3125, %v2589
        %v3132 = vsel %vm1648, %v3126, %v2592
        %v3133 = vsel %vm1648, %v3127, %v2595
        %v3134 = vsel %vm1648, %v3128, %v2598
        %v3135 = vsel %vm1648, %v3129, %v2601
        %v3136 = vsel %vm1655, %v3130, %v2718
        %v3137 = vsel %vm1655, %v3131, %v2721
        %v3138 = vsel %vm1655, %v3132, %v2724
        %v3139 = vsel %vm1655, %v3133, %v2727
        %v3140 = vsel %vm1655, %v3134, %v2730
        %v3141 = vsel %vm1655, %v3135, %v2733
        %v3142 = vsel %vm1662, %v3136, %v2850
        %v3143 = vsel %vm1662, %v3137, %v2853
        %v3144 = vsel %vm1662, %v3138, %v2856
        %v3145 = vsel %vm1662, %v3139, %v2859
        %v3146 = vsel %vm1662, %v3140, %v2862
        %v3147 = vsel %vm1662, %v3141, %v2865
        %v3148 = vsel %vm1669, %v3142, %v2982
        %v3149 = vsel %vm1669, %v3143, %v2985
        %v3150 = vsel %vm1669, %v3144, %v2988
        %v3151 = vsel %vm1669, %v3145, %v2991
        %v3152 = vsel %vm1669, %v3146, %v2994
        %v3153 = vsel %vm1669, %v3147, %v2997
        %v3154 = vsel %vm1613, %v1836, %v1968
        %v3155 = vsel %vm1613, %v1851, %v1983
        %v3156 = vsel %vm1613, %v1866, %v1998
        %v3157 = vsel %vm1613, %v1881, %v2013
        %v3158 = vsel %vm1613, %v1896, %v2028
        %v3159 = vsel %vm1613, %v1911, %v2043
        %v3160 = vsel %vm1620, %v3154, %v2100
        %v3161 = vsel %vm1620, %v3155, %v2115
        %v3162 = vsel %vm1620, %v3156, %v2130
        %v3163 = vsel %vm1620, %v3157, %v2145
        %v3164 = vsel %vm1620, %v3158, %v2160
        %v3165 = vsel %vm1620, %v3159, %v2175
        %v3166 = vsel %vm1627, %v3160, %v2232
        %v3167 = vsel %vm1627, %v3161, %v2247
        %v3168 = vsel %vm1627, %v3162, %v2262
        %v3169 = vsel %vm1627, %v3163, %v2277
        %v3170 = vsel %vm1627, %v3164, %v2292
        %v3171 = vsel %vm1627, %v3165, %v2307
        %v3172 = vsel %vm1634, %v3166, %v2364
        %v3173 = vsel %vm1634, %v3167, %v2379
        %v3174 = vsel %vm1634, %v3168, %v2394
        %v3175 = vsel %vm1634, %v3169, %v2409
        %v3176 = vsel %vm1634, %v3170, %v2424
        %v3177 = vsel %vm1634, %v3171, %v2439
        %v3178 = vsel %vm1641, %v3172, %v2496
        %v3179 = vsel %vm1641, %v3173, %v2511
        %v3180 = vsel %vm1641, %v3174, %v2526
        %v3181 = vsel %vm1641, %v3175, %v2541
        %v3182 = vsel %vm1641, %v3176, %v2556
        %v3183 = vsel %vm1641, %v3177, %v2571
        %v3184 = vsel %vm1648, %v3178, %v2628
        %v3185 = vsel %vm1648, %v3179, %v2643
        %v3186 = vsel %vm1648, %v3180, %v2658
        %v3187 = vsel %vm1648, %v3181, %v2673
        %v3188 = vsel %vm1648, %v3182, %v2688
        %v3189 = vsel %vm1648, %v3183, %v2703
        %v3190 = vsel %vm1655, %v3184, %v2760
        %v3191 = vsel %vm1655, %v3185, %v2775
        %v3192 = vsel %vm1655, %v3186, %v2790
        %v3193 = vsel %vm1655, %v3187, %v2805
        %v3194 = vsel %vm1655, %v3188, %v2820
        %v3195 = vsel %vm1655, %v3189, %v2835
        %v3196 = vsel %vm1662, %v3190, %v2892
        %v3197 = vsel %vm1662, %v3191, %v2907
        %v3198 = vsel %vm1662, %v3192, %v2922
        %v3199 = vsel %vm1662, %v3193, %v2937
        %v3200 = vsel %vm1662, %v3194, %v2952
        %v3201 = vsel %vm1662, %v3195, %v2967
        %v3202 = vsel %vm1669, %v3196, %v3024
        %v3203 = vsel %vm1669, %v3197, %v3039
        %v3204 = vsel %vm1669, %v3198, %v3054
        %v3205 = vsel %vm1669, %v3199, %v3069
        %v3206 = vsel %vm1669, %v3200, %v3084
        %v3207 = vsel %vm1669, %v3201, %v3099
        %3208 = vst.msk [vmem:[#allocation2] sm:$0xff] %vm1760, %v3148
        %3209 = vst.msk [vmem:[#allocation2 + $0x8] sm:$0xff] %vm1760, %v3149
        %3210 = vst.msk [vmem:[#allocation2 + $0x10] sm:$0xff] %vm1760, %v3150
        %3211 = vst.msk [vmem:[#allocation2 + $0x18] sm:$0xff] %vm1760, %v3151
        %3212 = vst.msk [vmem:[#allocation2 + $0x20] sm:$0xff] %vm1760, %v3152
        %3213 = vst.msk [vmem:[#allocation2 + $0x28] sm:$0xff] %vm1760, %v3153
        %3214 = vst.msk [vmem:[#allocation3] sm:$0xff] %vm1760, %v3202
        %3215 = vst.msk [vmem:[#allocation3 + $0x8] sm:$0xff] %vm1760, %v3203
        %3216 = vst.msk [vmem:[#allocation3 + $0x10] sm:$0xff] %vm1760, %v3204
        %3217 = vst.msk [vmem:[#allocation3 + $0x18] sm:$0xff] %vm1760, %v3205
        %3218 = vst.msk [vmem:[#allocation3 + $0x20] sm:$0xff] %vm1760, %v3206
        %3219 = vst.msk [vmem:[#allocation3 + $0x28] sm:$0xff] %vm1760, %v3207
        %p3220 = scmp.eq.s32.totalorder %s20, 2
        // Predicated region
        $region71: #{tpu_custom_call.1} parent=61 // pred_check
          %p3221 = pneg %p3220
        $region72: #{tpu_custom_call.1} parent=61 // pred_check_branch
          %3223 = sbr.rel (%p3221) target = $region74
        $region73: #{tpu_custom_call.1} parent=61 // pred_region
          %vm3224 = vcmp.gt.s32.totalorder %v3202, 0
          %v3225 = vsel %vm3224, %v3202, 0
          %vm3226 = vcmp.gt.s32.totalorder %v3203, 0
          %v3227 = vsel %vm3226, %v3203, 0
          %vm3228 = vcmp.gt.s32.totalorder %v3204, 0
          %v3229 = vsel %vm3228, %v3204, 0
          %vm3230 = vcmp.gt.s32.totalorder %v3205, 0
          %v3231 = vsel %vm3230, %v3205, 0
          %vm3232 = vcmp.gt.s32.totalorder %v3206, 0
          %v3233 = vsel %vm3232, %v3206, 0
          %vm3234 = vcmp.gt.s32.totalorder %v3207, 0
          %v3235 = vsel %vm3234, %v3207, 0
          %vm3236 = vcmp.lt.s32.totalorder %v3225, 319
          %v3237 = vsel %vm3236, %v3225, 319
          %vm3238 = vcmp.lt.s32.totalorder %v3227, 319
          %v3239 = vsel %vm3238, %v3227, 319
          %vm3240 = vcmp.lt.s32.totalorder %v3229, 319
          %v3241 = vsel %vm3240, %v3229, 319
          %vm3242 = vcmp.lt.s32.totalorder %v3231, 319
          %v3243 = vsel %vm3242, %v3231, 319
          %vm3244 = vcmp.lt.s32.totalorder %v3233, 319
          %v3245 = vsel %vm3244, %v3233, 319
          %vm3246 = vcmp.lt.s32.totalorder %v3235, 319
          %v3247 = vsel %vm3246, %v3235, 319
          %v3248 = vsel %vm1760, %v3148, -inf
          %3249 = vmax.xlane.f32.xlu0 %v3248
          %v3250 = vpop.xlane.xlu0 %3249
          %v3251 = vsel %vm1760, %v3149, -inf
          %3252 = vmax.xlane.f32.xlu0 %v3251
          %v3253 = vpop.xlane.xlu0 %3252
          %v3254 = vsel %vm1760, %v3150, -inf
          %3255 = vmax.xlane.f32.xlu0 %v3254
          %v3256 = vpop.xlane.xlu0 %3255
          %v3257 = vsel %vm1760, %v3151, -inf
          %3258 = vmax.xlane.f32.xlu0 %v3257
          %v3259 = vpop.xlane.xlu0 %3258
          %v3260 = vsel %vm1760, %v3152, -inf
          %3261 = vmax.xlane.f32.xlu0 %v3260
          %v3262 = vpop.xlane.xlu0 %3261
          %v3263 = vsel %vm1760, %v3153, -inf
          %3264 = vmax.xlane.f32.xlu0 %v3263
          %v3265 = vpop.xlane.xlu0 %3264
          %v3266 = vsub.f32 %v3148, %v3250
          %v3267 = vsub.f32 %v3149, %v3253
          %v3268 = vsub.f32 %v3150, %v3256
          %v3269 = vsub.f32 %v3151, %v3259
          %v3270 = vsub.f32 %v3152, %v3262
          %v3271 = vsub.f32 %v3153, %v3265
          %v3272 = vmul.f32 %v3266, 1.442695
          %v3273 = vpow.pop %v3272
          %v3274 = vmul.f32 %v3267, 1.442695
          %v3275 = vpow.pop %v3274
          %v3276 = vmul.f32 %v3268, 1.442695
          %v3277 = vpow.pop %v3276
          %v3278 = vmul.f32 %v3269, 1.442695
          %v3279 = vpow.pop %v3278
          %v3280 = vmul.f32 %v3270, 1.442695
          %v3281 = vpow.pop %v3280
          %v3282 = vmul.f32 %v3271, 1.442695
          %v3283 = vpow.pop %v3282
          %v3284 = vsel %vm1760, %v3273, 0.0
          %3285 = vadd.xlane.f32.xlu0 %v3284
          %v3286 = vpop.xlane.xlu0 %3285
          %v3287 = vsel %vm1760, %v3275, 0.0
          %3288 = vadd.xlane.f32.xlu0 %v3287
          %v3289 = vpop.xlane.xlu0 %3288
          %v3290 = vsel %vm1760, %v3277, 0.0
          %3291 = vadd.xlane.f32.xlu0 %v3290
          %v3292 = vpop.xlane.xlu0 %3291
          %v3293 = vsel %vm1760, %v3279, 0.0
          %3294 = vadd.xlane.f32.xlu0 %v3293
          %v3295 = vpop.xlane.xlu0 %3294
          %v3296 = vsel %vm1760, %v3281, 0.0
          %3297 = vadd.xlane.f32.xlu0 %v3296
          %v3298 = vpop.xlane.xlu0 %3297
          %v3299 = vsel %vm1760, %v3283, 0.0
          %3300 = vadd.xlane.f32.xlu0 %v3299
          %v3301 = vpop.xlane.xlu0 %3300
          %v3302 = vrcp.pop %v3286
          %v3303 = vmul.f32 %v3273, %v3302
          %v3304 = vrcp.pop %v3289
          %v3305 = vmul.f32 %v3275, %v3304
          %v3306 = vrcp.pop %v3292
          %v3307 = vmul.f32 %v3277, %v3306
          %v3308 = vrcp.pop %v3295
          %v3309 = vmul.f32 %v3279, %v3308
          %v3310 = vrcp.pop %v3298
          %v3311 = vmul.f32 %v3281, %v3310
          %v3312 = vrcp.pop %v3301
          %v3313 = vmul.f32 %v3283, %v3312
          %3314 = vxpose.xlu0.b32.start [1/16] %v3303, 128
          %3315 = vxpose.xlu0.b32.cont [2/16] %v3305, 128
          %3316 = vxpose.xlu0.b32.cont [3/16] %v3307, 128
          %3317 = vxpose.xlu0.b32.cont [4/16] %v3309, 128
          %3318 = vxpose.xlu0.b32.cont [5/16] %v3311, 128
          %3319 = vxpose.xlu0.b32.cont [6/16] %v3313, 128
          %3320 = vxpose.xlu0.b32.cont [7/16] 0.0, 128
          %3321 = vxpose.xlu0.b32.cont [8/16] 0.0, 128
          %3322 = vxpose.xlu0.b32.cont [9/16] 0.0, 128
          %3323 = vxpose.xlu0.b32.cont [10/16] 0.0, 128
          %3324 = vxpose.xlu0.b32.cont [11/16] 0.0, 128
          %3325 = vxpose.xlu0.b32.cont [12/16] 0.0, 128
          %3326 = vxpose.xlu0.b32.cont [13/16] 0.0, 128
          %3327 = vxpose.xlu0.b32.cont [14/16] 0.0, 128
          %3328 = vxpose.xlu0.b32.cont [15/16] 0.0, 128
          %3329 = vxpose.xlu0.b32.end [16/16] 0.0, 128
          %v3330 = vpop.trf.xlu0
          %v3331 = vpop.trf.xlu0
          %v3332 = vpop.trf.xlu0
          %v3333 = vpop.trf.xlu0
          %v3334 = vpop.trf.xlu0
          %v3335 = vpop.trf.xlu0
          %v3336 = vpop.trf.xlu0
          %v3337 = vpop.trf.xlu0
          %v3338 = vpop.trf.xlu0
          %v3339 = vpop.trf.xlu0
          %v3340 = vpop.trf.xlu0
          %v3341 = vpop.trf.xlu0
          %v3342 = vpop.trf.xlu0
          %v3343 = vpop.trf.xlu0
          %v3344 = vpop.trf.xlu0
          %v3345 = vpop.trf.xlu0
          %vm3346 = vcmask 392192
          %3347 = vst.msk [vmem:[%s258] sm:$0xff] %vm3346, %v3330
          %vm3348 = vcmask 386048
          %3349 = vst.msk [vmem:[%s258 + $0x8] sm:$0x3] %vm3348, %v3331
          %3350 = vxpose.xlu0.b32.start [1/16] %v3237, 128
          %3351 = vxpose.xlu0.b32.cont [2/16] %v3239, 128
          %3352 = vxpose.xlu0.b32.cont [3/16] %v3241, 128
          %3353 = vxpose.xlu0.b32.cont [4/16] %v3243, 128
          %3354 = vxpose.xlu0.b32.cont [5/16] %v3245, 128
          %3355 = vxpose.xlu0.b32.cont [6/16] %v3247, 128
          %3356 = vxpose.xlu0.b32.cont [7/16] 0, 128
          %3357 = vxpose.xlu0.b32.cont [8/16] 0, 128
          %3358 = vxpose.xlu0.b32.cont [9/16] 0, 128
          %3359 = vxpose.xlu0.b32.cont [10/16] 0, 128
          %3360 = vxpose.xlu0.b32.cont [11/16] 0, 128
          %3361 = vxpose.xlu0.b32.cont [12/16] 0, 128
          %3362 = vxpose.xlu0.b32.cont [13/16] 0, 128
          %3363 = vxpose.xlu0.b32.cont [14/16] 0, 128
          %3364 = vxpose.xlu0.b32.cont [15/16] 0, 128
          %3365 = vxpose.xlu0.b32.end [16/16] 0, 128
          %v3366 = vpop.trf.xlu0
          %v3367 = vpop.trf.xlu0
          %v3368 = vpop.trf.xlu0
          %v3369 = vpop.trf.xlu0
          %v3370 = vpop.trf.xlu0
          %v3371 = vpop.trf.xlu0
          %v3372 = vpop.trf.xlu0
          %v3373 = vpop.trf.xlu0
          %v3374 = vpop.trf.xlu0
          %v3375 = vpop.trf.xlu0
          %v3376 = vpop.trf.xlu0
          %v3377 = vpop.trf.xlu0
          %v3378 = vpop.trf.xlu0
          %v3379 = vpop.trf.xlu0
          %v3380 = vpop.trf.xlu0
          %v3381 = vpop.trf.xlu0
          %3382 = vst.msk [vmem:[%s263] sm:$0xff] %vm3346, %v3366
          %3383 = vst.msk [vmem:[%s263 + $0x8] sm:$0x3] %vm3348, %v3367
        $region74: #{tpu_custom_call.1} parent=61 // pred_fallthru
          _
        %p3384 = scmp.lt.s32.totalorder %s19, 1
        %s3385 = scalar_select %p3384, %s19, 1
        %s3386 = smul.addr %s3385, 2
        %s3387 = smul.addr %s3386, 8
        %s3388 = scalar_lea.vmem %s2, %s3387
        %p3389 = scmp.lt.s32.totalorder %s19, 1
        %s3390 = scalar_select %p3389, %s19, 1
        %s3391 = smul.addr %s3390, 2
        %s3392 = smul.addr %s3391, 8
        %s3393 = scalar_lea.vmem %s3, %s3392
        // Predicated region
        $region75: #{tpu_custom_call.1} parent=61 // pred_check
          %p3394 = pneg %p97
        $region76: #{tpu_custom_call.1} parent=61 // pred_check_branch
          %3396 = sbr.rel (%p3394) target = $region78
        $region77: #{tpu_custom_call.1} parent=61 // pred_region
          _
        $region78: #{tpu_custom_call.1} parent=61 // pred_fallthru
          _
        // Predicated region
        $region79: #{tpu_custom_call.1} parent=61 // pred_check
          %p3397 = pneg %p123
        $region80: #{tpu_custom_call.1} parent=61 // pred_check_branch
          %3399 = sbr.rel (%p3397) target = $region82
        $region81: #{tpu_custom_call.1} parent=61 // pred_region
          _
        $region82: #{tpu_custom_call.1} parent=61 // pred_fallthru
          _
      $region62: #{tpu_custom_call.1} parent=5 // pred_fallthru
        _
      %p3400 = scmp.le.s32.totalorder 2, %s10
      // Predicated region
      $region83: #{tpu_custom_call.1} parent=5 // pred_check
        %p3401 = pneg %p3400
      $region84: #{tpu_custom_call.1} parent=5 // pred_check_branch
        %3403 = sbr.rel (%p3401) target = $region86
      $region85: #{tpu_custom_call.1} parent=5 // pred_region
        %s3404 = ssub.s32 %s10, 2
        // Predicated region
        $region87: #{tpu_custom_call.1} parent=85 // pred_check
          %p3405 = pneg %p103
        $region88: #{tpu_custom_call.1} parent=85 // pred_check_branch
          %3407 = sbr.rel (%p3405) target = $region90
        $region89: #{tpu_custom_call.1} parent=85 // pred_region
          %p3408 = scmp.lt.s32.totalorder %s21, 1
          %s3409 = scalar_select %p3408, %s21, 1
          %s3410 = smul.addr %s3409, 2
          %s3411 = smul.addr %s3410, 8
          %s3412 = scalar_lea.vmem %s2, %s3411
        $region90: #{tpu_custom_call.1} parent=85 // pred_fallthru
          _
        // Predicated region
        $region91: #{tpu_custom_call.1} parent=85 // pred_check
          %p3413 = pneg %p129
        $region92: #{tpu_custom_call.1} parent=85 // pred_check_branch
          %3415 = sbr.rel (%p3413) target = $region94
        $region93: #{tpu_custom_call.1} parent=85 // pred_region
          %p3416 = scmp.lt.s32.totalorder %s21, 1
          %s3417 = scalar_select %p3416, %s21, 1
          %s3418 = smul.addr %s3417, 2
          %s3419 = smul.addr %s3418, 8
          %s3420 = scalar_lea.vmem %s3, %s3419
        $region94: #{tpu_custom_call.1} parent=85 // pred_fallthru
          _
      $region86: #{tpu_custom_call.1} parent=5 // pred_fallthru
        _
    $region6: #{tpu_custom_call.1} parent=1 // loop_footer
      %s14 = sadd.s32 1, %s10
    $region7: #{tpu_custom_call.1} parent=1 // loop_footer_branch
      %9 = sbr.rel target = $region3
    $region8: #{tpu_custom_call.1} parent=1 // loop_exit
      _

</llo_original>
